<compile_context>
chip_gen: v6e
topology: v6e:2x2x1
jax: 0.10.0
libtpu: 0.0.40
codegen_flags: <defaults>
</compile_context>

<pallas_src>
import functools

import jax
import jax.numpy as jnp
from jax import lax
from jax.experimental import pallas as pl
from jax.experimental.pallas import tpu as pltpu


def _tap_masks_and_offsets(D, H, W):
    """Per-tap 0/1 boundary masks ((27, D*H*W)) and flat-index offsets."""
    d = jnp.arange(D)[:, None, None]
    h = jnp.arange(H)[None, :, None]
    w = jnp.arange(W)[None, None, :]
    masks, offsets = [], []
    for kd in range(3):
        for kh in range(3):
            for kw in range(3):
                dd, dh, dw = kd - 1, kh - 1, kw - 1
                valid = ((d + dd >= 0) & (d + dd < D) &
                         (h + dh >= 0) & (h + dh < H) &
                         (w + dw >= 0) & (w + dw < W))
                masks.append(valid.reshape(-1))
                offsets.append(dd * H * W + dh * W + dw)
    return jnp.stack(masks).astype(jnp.float32), tuple(offsets)


def _basic_block_kernel(x_ref, mask_ref, w1_ref, b1_ref, w2_ref, b2_ref,
                        out_ref, stage_ref, col_ref, acc_ref,
                        *, C, S, PAD, offsets, taps_per_chunk, n_col_bufs):
    """One grid step = one batch element (whole spatial volume).

    x_ref    : (1, C, S)   f32            input (also the residual branch)
    mask_ref : (27, S)     compute_dtype  0/1 boundary mask per conv tap
    w1_ref   : (C, 27*C)   compute_dtype  conv1 weights * BN1 scale, im2col order
    b1_ref   : (C, 1)      f32            folded BN1 bias
    w2_ref   : (C, 27*C)   compute_dtype  conv2 weights * BN2 scale
    b2_ref   : (C, 1)      f32            folded BN2 bias
    out_ref  : (1, C, S)   f32
    stage_ref: (C, S+2*PAD)                 compute_dtype  zero-haloed staging
    col_ref  : (n_col_bufs, tpc*C, S)       compute_dtype  im2col chunk buffers
    acc_ref  : (C, S)      f32            matmul accumulator
    """
    cdt = stage_ref.dtype
    n_taps = len(offsets)
    chunk_starts = list(range(0, n_taps, taps_per_chunk))

    # Zero the halo strips once per step; the interior is rewritten per conv.
    # Kept unconditional on purpose: a pl.when(program_id==0) guard would break
    # under "parallel" megacore sharding.
    stage_ref[:, :PAD] = jnp.zeros((C, PAD), cdt)
    stage_ref[:, PAD + S:2 * PAD + S] = jnp.zeros((C, PAD), cdt)

    def conv_bn(act, w_ref, b_ref):
        # act: (C, S) f32 -> (C, S) f32 = (BN-scale-folded conv)(act) + BN bias.
        stage_ref[:, PAD:PAD + S] = act.astype(cdt)
        for g, t0 in enumerate(chunk_starts):
            nt = min(taps_per_chunk, n_taps - t0)
            buf = g % n_col_bufs
            # Build one K-chunk of the im2col matrix from lane-shifted,
            # boundary-masked reads of the haloed staging buffer.
            for t in range(nt):
                tap = t0 + t
                off = offsets[tap]
                shifted = stage_ref[:, PAD + off:PAD + off + S]        # (C, S)
                if tap == n_taps // 2:          # centre tap: mask is all-ones
                    col_ref[buf, t * C:(t + 1) * C, :] = shifted
                else:
                    col_ref[buf, t * C:(t + 1) * C, :] = (
                        shifted * mask_ref[tap:tap + 1, :])
            partial = jnp.dot(w_ref[:, t0 * C:(t0 + nt) * C],
                              col_ref[buf, :nt * C, :],
                              preferred_element_type=jnp.float32)      # (C, S)
            if g == 0:
                acc_ref[...] = partial
            else:
                acc_ref[...] += partial
        return acc_ref[...] + b_ref[...]                               # + BN bias

    x = x_ref[0].astype(jnp.float32)                                   # (C, S)
    y = jnp.maximum(conv_bn(x, w1_ref, b1_ref), 0.0)                   # relu(bn1(conv1(x)))
    out = conv_bn(y, w2_ref, b2_ref) + x                               # bn2(conv2(y)) + id
    out_ref[0] = jnp.maximum(out, 0.0).astype(out_ref.dtype)           # relu


def fold_bn(gamma, beta, mean, var, eps=1e-5):
    scale = gamma / jnp.sqrt(var + eps)
    bias = beta - mean * scale
    return scale, bias


def _fold_weights(w, scale, compute_dtype):
    """(3,3,3,I,O) DHWIO conv weight * per-O BN scale -> (O, 27*I) im2col order."""
    wf = w * scale                                    # broadcast over last dim O
    return jnp.transpose(wf, (4, 0, 1, 2, 3)).reshape(w.shape[-1], -1).astype(compute_dtype)


def _vmem_capacity_bytes():
    try:
        info = pltpu.get_tpu_info()
        return int(getattr(info, "vmem_capacity_bytes", 64 * 1024 * 1024))
    except Exception:
        return 64 * 1024 * 1024      # conservative (v7x per-TC VMEM)


def basic_block_forward(x, params, *, compute_dtype=jnp.bfloat16,
                        taps_per_chunk=None):
    """BasicBlock.forward (stride=1, downsample=None, groups=1).

    x: (N, C, D, H, W) float32 (NCDHW, as in the PyTorch module).
    params: w1/w2 in DHWIO layout (3,3,3,Cin,Cout); scale*/bias* = folded BN.
    """
    N, C, D, H, W = x.shape
    S = D * H * W
    if params["w1"].shape != (3, 3, 3, C, C) or params["w2"].shape != (3, 3, 3, C, C):
        # TODO(synk): stride > 1 / downsample (inplanes != planes) not implemented.
        raise ValueError("only stride=1, inplanes == planes, no downsample supported")

    if taps_per_chunk is None:
        # Chunk K = taps_per_chunk * C, targeted at the 256-deep MXU (v6e/v7x);
        # a multiple of 128 also suits v5e.  Tiny C falls back to a single chunk.
        taps_per_chunk = int(min(27, max(1, 256 // C)))
    n_chunks = -(-27 // taps_per_chunk)
    n_col_bufs = 1 if n_chunks == 1 else 2

    masks, offsets = _tap_masks_and_offsets(D, H, W)
    masks = masks.astype(compute_dtype)               # 0/1 is exact in bf16
    # Halo rounded up to a lane tile so the interior staging store stays aligned.
    PAD = pl.cdiv(H * W + W + 1, 128) * 128

    w1c = _fold_weights(params["w1"], params["scale1"], compute_dtype)
    w2c = _fold_weights(params["w2"], params["scale2"], compute_dtype)
    b1 = params["bias1"].reshape(C, 1).astype(jnp.float32)
    b2 = params["bias2"].reshape(C, 1).astype(jnp.float32)

    x2 = x.reshape(N, C, S)            # free reshape; S lands on the lane axis

    kernel = functools.partial(_basic_block_kernel, C=C, S=S, PAD=PAD,
                               offsets=offsets, taps_per_chunk=taps_per_chunk,
                               n_col_bufs=n_col_bufs)

    itm = jnp.dtype(compute_dtype).itemsize
    col_rows = taps_per_chunk * C
    # Working-set estimate -> VMEM budget (instead of a hard-coded constant).
    scratch_bytes = (C * (S + 2 * PAD) * itm             # staging buffer
                     + n_col_bufs * col_rows * S * itm   # im2col chunk buffers
                     + C * S * 4)                        # f32 accumulator
    stream_bytes = 2 * 2 * C * S * 4                     # x + out, double-buffered
    const_bytes = 2 * (27 * S * itm                      # masks
                       + 2 * 27 * C * C * itm            # w1 + w2
                       + 2 * C * 128 * 4)                # biases (lane-padded)
    needed = scratch_bytes + stream_bytes + const_bytes
    cap = _vmem_capacity_bytes()
    vmem_limit = int(min(cap - (4 << 20), max(32 << 20, needed + (8 << 20))))
    vmem_limit = max(vmem_limit, needed + (2 << 20))

    flops = 2 * 2 * N * S * 27 * C * C                   # two convs, 2 flops/MAC
    bytes_accessed = int(2 * N * C * S * 4               # x in + out
                         + w1c.size * itm + w2c.size * itm
                         + masks.size * itm + 4 * C * 4)

    out = pl.pallas_call(
        kernel,
        out_shape=jax.ShapeDtypeStruct((N, C, S), x.dtype),
        grid=(N,),
        in_specs=[
            pl.BlockSpec((1, C, S), lambda n: (n, 0, 0)),       # x / residual
            pl.BlockSpec((27, S), lambda n: (0, 0)),            # tap masks
            pl.BlockSpec((C, 27 * C), lambda n: (0, 0)),        # w1 (BN folded)
            pl.BlockSpec((C, 1), lambda n: (0, 0)),             # b1
            pl.BlockSpec((C, 27 * C), lambda n: (0, 0)),        # w2 (BN folded)
            pl.BlockSpec((C, 1), lambda n: (0, 0)),             # b2
        ],
        out_specs=pl.BlockSpec((1, C, S), lambda n: (n, 0, 0)),
        scratch_shapes=[
            pltpu.VMEM((C, S + 2 * PAD), compute_dtype),        # haloed staging
            pltpu.VMEM((n_col_bufs, col_rows, S), compute_dtype),  # im2col chunks
            pltpu.VMEM((C, S), jnp.float32),                    # f32 accumulator
        ],
        compiler_params=pltpu.CompilerParams(
            dimension_semantics=("parallel",),
            vmem_limit_bytes=vmem_limit),
        cost_estimate=pl.CostEstimate(flops=flops, transcendentals=0,
                                      bytes_accessed=bytes_accessed),
    )(x2, masks, w1c, b1, w2c, b2)

    return out.reshape(N, C, D, H, W)


# ----------------------- pure-JAX reference (sanity check) ------------------
def _conv3d_ref(x, w):
    return lax.conv_general_dilated(
        x, w, window_strides=(1, 1, 1),
        padding=((1, 1), (1, 1), (1, 1)),
        dimension_numbers=("NCDHW", "DHWIO", "NCDHW"))


def basic_block_ref(x, params):
    s1 = params["scale1"][None, :, None, None, None]
    bi1 = params["bias1"][None, :, None, None, None]
    s2 = params["scale2"][None, :, None, None, None]
    bi2 = params["bias2"][None, :, None, None, None]
    out = jnp.maximum(_conv3d_ref(x, params["w1"]) * s1 + bi1, 0.0)
    out = _conv3d_ref(out, params["w2"]) * s2 + bi2
    return jnp.maximum(out + x, 0.0)


if __name__ == "__main__":
    key = jax.random.PRNGKey(0)
    ks = jax.random.split(key, 11)

    # Small shapes: batch=2 (one per megacore TC), channels=16 (multiple of the
    # bf16 sublane tile; inplanes == planes so no downsample), depth=4, 8x8
    # spatial -> S = D*H*W = 256 lanes.
    N, C, D, H, W = 2, 16, 4, 8, 8

    x = jax.random.normal(ks[0], (N, C, D, H, W), jnp.float32)

    # Deterministic synthetic parameters (conv3x3 bias=False; BN in eval mode).
    w1 = 0.1 * jax.random.normal(ks[1], (3, 3, 3, C, C), jnp.float32)
    w2 = 0.1 * jax.random.normal(ks[2], (3, 3, 3, C, C), jnp.float32)

    g1 = 1.0 + 0.1 * jax.random.normal(ks[3], (C,), jnp.float32)
    be1 = 0.05 * jax.random.normal(ks[4], (C,), jnp.float32)
    m1 = 0.1 * jax.random.normal(ks[5], (C,), jnp.float32)
    v1 = 0.5 + 0.5 * jnp.abs(jax.random.normal(ks[6], (C,), jnp.float32))

    g2 = 1.0 + 0.1 * jax.random.normal(ks[7], (C,), jnp.float32)
    be2 = 0.05 * jax.random.normal(ks[8], (C,), jnp.float32)
    m2 = 0.1 * jax.random.normal(ks[9], (C,), jnp.float32)
    v2 = 0.5 + 0.5 * jnp.abs(jax.random.normal(ks[10], (C,), jnp.float32))

    scale1, bias1 = fold_bn(g1, be1, m1, v1)
    scale2, bias2 = fold_bn(g2, be2, m2, v2)
    params = dict(w1=w1, w2=w2, scale1=scale1, bias1=bias1,
                  scale2=scale2, bias2=bias2)

    ref = basic_block_ref(x, params)

    # f32 path: validates conv/mask/halo/fold/chunking logic exactly.
    out_f32 = jax.block_until_ready(
        basic_block_forward(x, params, compute_dtype=jnp.float32))
    assert out_f32.shape == (N, C, D, H, W)
    assert jnp.allclose(out_f32, ref, atol=2e-3, rtol=2e-3), "f32 mismatch vs reference"

    # bf16 staging/weights (default perf path), f32 accumulate -> looser check.
    out_bf16 = jax.block_until_ready(basic_block_forward(x, params))
    assert out_bf16.shape == (N, C, D, H, W)
    assert jnp.allclose(out_bf16, ref, atol=2e-1, rtol=1e-1), "bf16 mismatch vs reference"

    print("KERNEL_OK")
</pallas_src>

<mosaic_0001>
module attributes {stable_mosaic.version = 11 : i64} {
  func.func @_basic_block_kernel(%arg0: i32, %arg1: memref<1x16x256xf32, #tpu.memory_space<vmem>>, %arg2: memref<27x256xf32, #tpu.memory_space<vmem>>, %arg3: memref<16x432xf32, #tpu.memory_space<vmem>>, %arg4: memref<16x1xf32, #tpu.memory_space<vmem>>, %arg5: memref<16x432xf32, #tpu.memory_space<vmem>>, %arg6: memref<16x1xf32, #tpu.memory_space<vmem>>, %arg7: memref<1x16x256xf32, #tpu.memory_space<vmem>>, %arg8: memref<16x512xf32, #tpu.memory_space<vmem>>, %arg9: memref<2x256x256xf32, #tpu.memory_space<vmem>>, %arg10: memref<16x256xf32, #tpu.memory_space<vmem>>) attributes {dimension_semantics = [#tpu.dimension_semantics<parallel>], iteration_bounds = array<i64: 2>, scalar_prefetch = 0 : i64, scratch_operands = 3 : i64, tpu.core_type = #tpu.core_type<tc>, window_params = [{transform_indices = @transform_0, window_bounds = array<i64: 1, 16, 256>}, {pipeline_mode = #tpu.pipeline_mode<synchronous>, transform_indices = @transform_1, window_bounds = array<i64: 27, 256>}, {pipeline_mode = #tpu.pipeline_mode<synchronous>, transform_indices = @transform_2, window_bounds = array<i64: 16, 432>}, {pipeline_mode = #tpu.pipeline_mode<synchronous>, transform_indices = @transform_3, window_bounds = array<i64: 16, 1>}, {pipeline_mode = #tpu.pipeline_mode<synchronous>, transform_indices = @transform_4, window_bounds = array<i64: 16, 432>}, {pipeline_mode = #tpu.pipeline_mode<synchronous>, transform_indices = @transform_5, window_bounds = array<i64: 16, 1>}, {transform_indices = @transform_6, window_bounds = array<i64: 1, 16, 256>}]} {
    %cst = arith.constant 0.000000e+00 : f32
    %0 = vector.broadcast %cst : f32 to vector<16x128xf32>
    %c0 = arith.constant 0 : index
    %c0_0 = arith.constant 0 : index
    %1 = vector.load %arg8[%c0, %c0_0] : memref<16x512xf32, #tpu.memory_space<vmem>>, vector<16x128xf32>
    tpu.vector_store %arg8[%c0, %c0_0], %0 {strides = array<i32>} : memref<16x512xf32, #tpu.memory_space<vmem>>, vector<16x128xf32>,
    %cst_1 = arith.constant 0.000000e+00 : f32
    %2 = vector.broadcast %cst_1 : f32 to vector<16x128xf32>
    %c0_2 = arith.constant 0 : index
    %c384 = arith.constant 384 : index
    %3 = vector.load %arg8[%c0_2, %c384] : memref<16x512xf32, #tpu.memory_space<vmem>>, vector<16x128xf32>
    tpu.vector_store %arg8[%c0_2, %c384], %2 {strides = array<i32>} : memref<16x512xf32, #tpu.memory_space<vmem>>, vector<16x128xf32>,
    %c0_3 = arith.constant 0 : index
    %c0_4 = arith.constant 0 : index
    %c0_5 = arith.constant 0 : index
    %4 = vector.load %arg1[%c0_3, %c0_4, %c0_5] : memref<1x16x256xf32, #tpu.memory_space<vmem>>, vector<1x16x256xf32>
    %5 = vector.shape_cast %4 : vector<1x16x256xf32> to vector<16x256xf32>
    %c0_6 = arith.constant 0 : index
    %c128 = arith.constant 128 : index
    %6 = vector.load %arg8[%c0_6, %c128] : memref<16x512xf32, #tpu.memory_space<vmem>>, vector<16x256xf32>
    tpu.vector_store %arg8[%c0_6, %c128], %5 {strides = array<i32>} : memref<16x512xf32, #tpu.memory_space<vmem>>, vector<16x256xf32>,
    %c0_7 = arith.constant 0 : index
    %c55 = arith.constant 55 : index
    %7 = vector.load %arg8[%c0_7, %c55] : memref<16x512xf32, #tpu.memory_space<vmem>>, vector<16x256xf32>
    %c0_8 = arith.constant 0 : index
    %c0_9 = arith.constant 0 : index
    %8 = vector.load %arg2[%c0_8, %c0_9] : memref<27x256xf32, #tpu.memory_space<vmem>>, vector<1x256xf32>
    %9 = vector.broadcast %8 : vector<1x256xf32> to vector<16x256xf32>
    %10 = arith.mulf %7, %9 : vector<16x256xf32>
    %c0_10 = arith.constant 0 : index
    %c0_11 = arith.constant 0 : index
    %c0_12 = arith.constant 0 : index
    %11 = vector.load %arg9[%c0_10, %c0_11, %c0_12] : memref<2x256x256xf32, #tpu.memory_space<vmem>>, vector<1x16x256xf32>
    %12 = vector.shape_cast %11 : vector<1x16x256xf32> to vector<16x256xf32>
    %13 = vector.shape_cast %10 : vector<16x256xf32> to vector<1x16x256xf32>
    tpu.vector_store %arg9[%c0_10, %c0_11, %c0_12], %13 {strides = array<i32>} : memref<2x256x256xf32, #tpu.memory_space<vmem>>, vector<1x16x256xf32>,
    %c0_13 = arith.constant 0 : index
    %c56 = arith.constant 56 : index
    %14 = vector.load %arg8[%c0_13, %c56] : memref<16x512xf32, #tpu.memory_space<vmem>>, vector<16x256xf32>
    %c1 = arith.constant 1 : index
    %c0_14 = arith.constant 0 : index
    %15 = vector.load %arg2[%c1, %c0_14] : memref<27x256xf32, #tpu.memory_space<vmem>>, vector<1x256xf32>
    %16 = vector.broadcast %15 : vector<1x256xf32> to vector<16x256xf32>
    %17 = arith.mulf %14, %16 : vector<16x256xf32>
    %c0_15 = arith.constant 0 : index
    %c16 = arith.constant 16 : index
    %c0_16 = arith.constant 0 : index
    %18 = vector.load %arg9[%c0_15, %c16, %c0_16] : memref<2x256x256xf32, #tpu.memory_space<vmem>>, vector<1x16x256xf32>
    %19 = vector.shape_cast %18 : vector<1x16x256xf32> to vector<16x256xf32>
    %20 = vector.shape_cast %17 : vector<16x256xf32> to vector<1x16x256xf32>
    tpu.vector_store %arg9[%c0_15, %c16, %c0_16], %20 {strides = array<i32>} : memref<2x256x256xf32, #tpu.memory_space<vmem>>, vector<1x16x256xf32>,
    %c0_17 = arith.constant 0 : index
    %c57 = arith.constant 57 : index
    %21 = vector.load %arg8[%c0_17, %c57] : memref<16x512xf32, #tpu.memory_space<vmem>>, vector<16x256xf32>
    %c2 = arith.constant 2 : index
    %c0_18 = arith.constant 0 : index
    %22 = vector.load %arg2[%c2, %c0_18] : memref<27x256xf32, #tpu.memory_space<vmem>>, vector<1x256xf32>
    %23 = vector.broadcast %22 : vector<1x256xf32> to vector<16x256xf32>
    %24 = arith.mulf %21, %23 : vector<16x256xf32>
    %c0_19 = arith.constant 0 : index
    %c32 = arith.constant 32 : index
    %c0_20 = arith.constant 0 : index
    %25 = vector.load %arg9[%c0_19, %c32, %c0_20] : memref<2x256x256xf32, #tpu.memory_space<vmem>>, vector<1x16x256xf32>
    %26 = vector.shape_cast %25 : vector<1x16x256xf32> to vector<16x256xf32>
    %27 = vector.shape_cast %24 : vector<16x256xf32> to vector<1x16x256xf32>
    tpu.vector_store %arg9[%c0_19, %c32, %c0_20], %27 {strides = array<i32>} : memref<2x256x256xf32, #tpu.memory_space<vmem>>, vector<1x16x256xf32>,
    %c0_21 = arith.constant 0 : index
    %c63 = arith.constant 63 : index
    %28 = vector.load %arg8[%c0_21, %c63] : memref<16x512xf32, #tpu.memory_space<vmem>>, vector<16x256xf32>
    %c3 = arith.constant 3 : index
    %c0_22 = arith.constant 0 : index
    %29 = vector.load %arg2[%c3, %c0_22] : memref<27x256xf32, #tpu.memory_space<vmem>>, vector<1x256xf32>
    %30 = vector.broadcast %29 : vector<1x256xf32> to vector<16x256xf32>
    %31 = arith.mulf %28, %30 : vector<16x256xf32>
    %c0_23 = arith.constant 0 : index
    %c48 = arith.constant 48 : index
    %c0_24 = arith.constant 0 : index
    %32 = vector.load %arg9[%c0_23, %c48, %c0_24] : memref<2x256x256xf32, #tpu.memory_space<vmem>>, vector<1x16x256xf32>
    %33 = vector.shape_cast %32 : vector<1x16x256xf32> to vector<16x256xf32>
    %34 = vector.shape_cast %31 : vector<16x256xf32> to vector<1x16x256xf32>
    tpu.vector_store %arg9[%c0_23, %c48, %c0_24], %34 {strides = array<i32>} : memref<2x256x256xf32, #tpu.memory_space<vmem>>, vector<1x16x256xf32>,
    %c0_25 = arith.constant 0 : index
    %c64 = arith.constant 64 : index
    %35 = vector.load %arg8[%c0_25, %c64] : memref<16x512xf32, #tpu.memory_space<vmem>>, vector<16x256xf32>
    %c4 = arith.constant 4 : index
    %c0_26 = arith.constant 0 : index
    %36 = vector.load %arg2[%c4, %c0_26] : memref<27x256xf32, #tpu.memory_space<vmem>>, vector<1x256xf32>
    %37 = vector.broadcast %36 : vector<1x256xf32> to vector<16x256xf32>
    %38 = arith.mulf %35, %37 : vector<16x256xf32>
    %c0_27 = arith.constant 0 : index
    %c64_28 = arith.constant 64 : index
    %c0_29 = arith.constant 0 : index
    %39 = vector.load %arg9[%c0_27, %c64_28, %c0_29] : memref<2x256x256xf32, #tpu.memory_space<vmem>>, vector<1x16x256xf32>
    %40 = vector.shape_cast %39 : vector<1x16x256xf32> to vector<16x256xf32>
    %41 = vector.shape_cast %38 : vector<16x256xf32> to vector<1x16x256xf32>
    tpu.vector_store %arg9[%c0_27, %c64_28, %c0_29], %41 {strides = array<i32>} : memref<2x256x256xf32, #tpu.memory_space<vmem>>, vector<1x16x256xf32>,
    %c0_30 = arith.constant 0 : index
    %c65 = arith.constant 65 : index
    %42 = vector.load %arg8[%c0_30, %c65] : memref<16x512xf32, #tpu.memory_space<vmem>>, vector<16x256xf32>
    %c5 = arith.constant 5 : index
    %c0_31 = arith.constant 0 : index
    %43 = vector.load %arg2[%c5, %c0_31] : memref<27x256xf32, #tpu.memory_space<vmem>>, vector<1x256xf32>
    %44 = vector.broadcast %43 : vector<1x256xf32> to vector<16x256xf32>
    %45 = arith.mulf %42, %44 : vector<16x256xf32>
    %c0_32 = arith.constant 0 : index
    %c80 = arith.constant 80 : index
    %c0_33 = arith.constant 0 : index
    %46 = vector.load %arg9[%c0_32, %c80, %c0_33] : memref<2x256x256xf32, #tpu.memory_space<vmem>>, vector<1x16x256xf32>
    %47 = vector.shape_cast %46 : vector<1x16x256xf32> to vector<16x256xf32>
    %48 = vector.shape_cast %45 : vector<16x256xf32> to vector<1x16x256xf32>
    tpu.vector_store %arg9[%c0_32, %c80, %c0_33], %48 {strides = array<i32>} : memref<2x256x256xf32, #tpu.memory_space<vmem>>, vector<1x16x256xf32>,
    %c0_34 = arith.constant 0 : index
    %c71 = arith.constant 71 : index
    %49 = vector.load %arg8[%c0_34, %c71] : memref<16x512xf32, #tpu.memory_space<vmem>>, vector<16x256xf32>
    %c6 = arith.constant 6 : index
    %c0_35 = arith.constant 0 : index
    %50 = vector.load %arg2[%c6, %c0_35] : memref<27x256xf32, #tpu.memory_space<vmem>>, vector<1x256xf32>
    %51 = vector.broadcast %50 : vector<1x256xf32> to vector<16x256xf32>
    %52 = arith.mulf %49, %51 : vector<16x256xf32>
    %c0_36 = arith.constant 0 : index
    %c96 = arith.constant 96 : index
    %c0_37 = arith.constant 0 : index
    %53 = vector.load %arg9[%c0_36, %c96, %c0_37] : memref<2x256x256xf32, #tpu.memory_space<vmem>>, vector<1x16x256xf32>
    %54 = vector.shape_cast %53 : vector<1x16x256xf32> to vector<16x256xf32>
    %55 = vector.shape_cast %52 : vector<16x256xf32> to vector<1x16x256xf32>
    tpu.vector_store %arg9[%c0_36, %c96, %c0_37], %55 {strides = array<i32>} : memref<2x256x256xf32, #tpu.memory_space<vmem>>, vector<1x16x256xf32>,
    %c0_38 = arith.constant 0 : index
    %c72 = arith.constant 72 : index
    %56 = vector.load %arg8[%c0_38, %c72] : memref<16x512xf32, #tpu.memory_space<vmem>>, vector<16x256xf32>
    %c7 = arith.constant 7 : index
    %c0_39 = arith.constant 0 : index
    %57 = vector.load %arg2[%c7, %c0_39] : memref<27x256xf32, #tpu.memory_space<vmem>>, vector<1x256xf32>
    %58 = vector.broadcast %57 : vector<1x256xf32> to vector<16x256xf32>
    %59 = arith.mulf %56, %58 : vector<16x256xf32>
    %c0_40 = arith.constant 0 : index
    %c112 = arith.constant 112 : index
    %c0_41 = arith.constant 0 : index
    %60 = vector.load %arg9[%c0_40, %c112, %c0_41] : memref<2x256x256xf32, #tpu.memory_space<vmem>>, vector<1x16x256xf32>
    %61 = vector.shape_cast %60 : vector<1x16x256xf32> to vector<16x256xf32>
    %62 = vector.shape_cast %59 : vector<16x256xf32> to vector<1x16x256xf32>
    tpu.vector_store %arg9[%c0_40, %c112, %c0_41], %62 {strides = array<i32>} : memref<2x256x256xf32, #tpu.memory_space<vmem>>, vector<1x16x256xf32>,
    %c0_42 = arith.constant 0 : index
    %c73 = arith.constant 73 : index
    %63 = vector.load %arg8[%c0_42, %c73] : memref<16x512xf32, #tpu.memory_space<vmem>>, vector<16x256xf32>
    %c8 = arith.constant 8 : index
    %c0_43 = arith.constant 0 : index
    %64 = vector.load %arg2[%c8, %c0_43] : memref<27x256xf32, #tpu.memory_space<vmem>>, vector<1x256xf32>
    %65 = vector.broadcast %64 : vector<1x256xf32> to vector<16x256xf32>
    %66 = arith.mulf %63, %65 : vector<16x256xf32>
    %c0_44 = arith.constant 0 : index
    %c128_45 = arith.constant 128 : index
    %c0_46 = arith.constant 0 : index
    %67 = vector.load %arg9[%c0_44, %c128_45, %c0_46] : memref<2x256x256xf32, #tpu.memory_space<vmem>>, vector<1x16x256xf32>
    %68 = vector.shape_cast %67 : vector<1x16x256xf32> to vector<16x256xf32>
    %69 = vector.shape_cast %66 : vector<16x256xf32> to vector<1x16x256xf32>
    tpu.vector_store %arg9[%c0_44, %c128_45, %c0_46], %69 {strides = array<i32>} : memref<2x256x256xf32, #tpu.memory_space<vmem>>, vector<1x16x256xf32>,
    %c0_47 = arith.constant 0 : index
    %c119 = arith.constant 119 : index
    %70 = vector.load %arg8[%c0_47, %c119] : memref<16x512xf32, #tpu.memory_space<vmem>>, vector<16x256xf32>
    %c9 = arith.constant 9 : index
    %c0_48 = arith.constant 0 : index
    %71 = vector.load %arg2[%c9, %c0_48] : memref<27x256xf32, #tpu.memory_space<vmem>>, vector<1x256xf32>
    %72 = vector.broadcast %71 : vector<1x256xf32> to vector<16x256xf32>
    %73 = arith.mulf %70, %72 : vector<16x256xf32>
    %c0_49 = arith.constant 0 : index
    %c144 = arith.constant 144 : index
    %c0_50 = arith.constant 0 : index
    %74 = vector.load %arg9[%c0_49, %c144, %c0_50] : memref<2x256x256xf32, #tpu.memory_space<vmem>>, vector<1x16x256xf32>
    %75 = vector.shape_cast %74 : vector<1x16x256xf32> to vector<16x256xf32>
    %76 = vector.shape_cast %73 : vector<16x256xf32> to vector<1x16x256xf32>
    tpu.vector_store %arg9[%c0_49, %c144, %c0_50], %76 {strides = array<i32>} : memref<2x256x256xf32, #tpu.memory_space<vmem>>, vector<1x16x256xf32>,
    %c0_51 = arith.constant 0 : index
    %c120 = arith.constant 120 : index
    %77 = vector.load %arg8[%c0_51, %c120] : memref<16x512xf32, #tpu.memory_space<vmem>>, vector<16x256xf32>
    %c10 = arith.constant 10 : index
    %c0_52 = arith.constant 0 : index
    %78 = vector.load %arg2[%c10, %c0_52] : memref<27x256xf32, #tpu.memory_space<vmem>>, vector<1x256xf32>
    %79 = vector.broadcast %78 : vector<1x256xf32> to vector<16x256xf32>
    %80 = arith.mulf %77, %79 : vector<16x256xf32>
    %c0_53 = arith.constant 0 : index
    %c160 = arith.constant 160 : index
    %c0_54 = arith.constant 0 : index
    %81 = vector.load %arg9[%c0_53, %c160, %c0_54] : memref<2x256x256xf32, #tpu.memory_space<vmem>>, vector<1x16x256xf32>
    %82 = vector.shape_cast %81 : vector<1x16x256xf32> to vector<16x256xf32>
    %83 = vector.shape_cast %80 : vector<16x256xf32> to vector<1x16x256xf32>
    tpu.vector_store %arg9[%c0_53, %c160, %c0_54], %83 {strides = array<i32>} : memref<2x256x256xf32, #tpu.memory_space<vmem>>, vector<1x16x256xf32>,
    %c0_55 = arith.constant 0 : index
    %c121 = arith.constant 121 : index
    %84 = vector.load %arg8[%c0_55, %c121] : memref<16x512xf32, #tpu.memory_space<vmem>>, vector<16x256xf32>
    %c11 = arith.constant 11 : index
    %c0_56 = arith.constant 0 : index
    %85 = vector.load %arg2[%c11, %c0_56] : memref<27x256xf32, #tpu.memory_space<vmem>>, vector<1x256xf32>
    %86 = vector.broadcast %85 : vector<1x256xf32> to vector<16x256xf32>
    %87 = arith.mulf %84, %86 : vector<16x256xf32>
    %c0_57 = arith.constant 0 : index
    %c176 = arith.constant 176 : index
    %c0_58 = arith.constant 0 : index
    %88 = vector.load %arg9[%c0_57, %c176, %c0_58] : memref<2x256x256xf32, #tpu.memory_space<vmem>>, vector<1x16x256xf32>
    %89 = vector.shape_cast %88 : vector<1x16x256xf32> to vector<16x256xf32>
    %90 = vector.shape_cast %87 : vector<16x256xf32> to vector<1x16x256xf32>
    tpu.vector_store %arg9[%c0_57, %c176, %c0_58], %90 {strides = array<i32>} : memref<2x256x256xf32, #tpu.memory_space<vmem>>, vector<1x16x256xf32>,
    %c0_59 = arith.constant 0 : index
    %c127 = arith.constant 127 : index
    %91 = vector.load %arg8[%c0_59, %c127] : memref<16x512xf32, #tpu.memory_space<vmem>>, vector<16x256xf32>
    %c12 = arith.constant 12 : index
    %c0_60 = arith.constant 0 : index
    %92 = vector.load %arg2[%c12, %c0_60] : memref<27x256xf32, #tpu.memory_space<vmem>>, vector<1x256xf32>
    %93 = vector.broadcast %92 : vector<1x256xf32> to vector<16x256xf32>
    %94 = arith.mulf %91, %93 : vector<16x256xf32>
    %c0_61 = arith.constant 0 : index
    %c192 = arith.constant 192 : index
    %c0_62 = arith.constant 0 : index
    %95 = vector.load %arg9[%c0_61, %c192, %c0_62] : memref<2x256x256xf32, #tpu.memory_space<vmem>>, vector<1x16x256xf32>
    %96 = vector.shape_cast %95 : vector<1x16x256xf32> to vector<16x256xf32>
    %97 = vector.shape_cast %94 : vector<16x256xf32> to vector<1x16x256xf32>
    tpu.vector_store %arg9[%c0_61, %c192, %c0_62], %97 {strides = array<i32>} : memref<2x256x256xf32, #tpu.memory_space<vmem>>, vector<1x16x256xf32>,
    %c0_63 = arith.constant 0 : index
    %c128_64 = arith.constant 128 : index
    %98 = vector.load %arg8[%c0_63, %c128_64] : memref<16x512xf32, #tpu.memory_space<vmem>>, vector<16x256xf32>
    %c0_65 = arith.constant 0 : index
    %c208 = arith.constant 208 : index
    %c0_66 = arith.constant 0 : index
    %99 = vector.load %arg9[%c0_65, %c208, %c0_66] : memref<2x256x256xf32, #tpu.memory_space<vmem>>, vector<1x16x256xf32>
    %100 = vector.shape_cast %99 : vector<1x16x256xf32> to vector<16x256xf32>
    %101 = vector.shape_cast %98 : vector<16x256xf32> to vector<1x16x256xf32>
    tpu.vector_store %arg9[%c0_65, %c208, %c0_66], %101 {strides = array<i32>} : memref<2x256x256xf32, #tpu.memory_space<vmem>>, vector<1x16x256xf32>,
    %c0_67 = arith.constant 0 : index
    %c129 = arith.constant 129 : index
    %102 = vector.load %arg8[%c0_67, %c129] : memref<16x512xf32, #tpu.memory_space<vmem>>, vector<16x256xf32>
    %c14 = arith.constant 14 : index
    %c0_68 = arith.constant 0 : index
    %103 = vector.load %arg2[%c14, %c0_68] : memref<27x256xf32, #tpu.memory_space<vmem>>, vector<1x256xf32>
    %104 = vector.broadcast %103 : vector<1x256xf32> to vector<16x256xf32>
    %105 = arith.mulf %102, %104 : vector<16x256xf32>
    %c0_69 = arith.constant 0 : index
    %c224 = arith.constant 224 : index
    %c0_70 = arith.constant 0 : index
    %106 = vector.load %arg9[%c0_69, %c224, %c0_70] : memref<2x256x256xf32, #tpu.memory_space<vmem>>, vector<1x16x256xf32>
    %107 = vector.shape_cast %106 : vector<1x16x256xf32> to vector<16x256xf32>
    %108 = vector.shape_cast %105 : vector<16x256xf32> to vector<1x16x256xf32>
    tpu.vector_store %arg9[%c0_69, %c224, %c0_70], %108 {strides = array<i32>} : memref<2x256x256xf32, #tpu.memory_space<vmem>>, vector<1x16x256xf32>,
    %c0_71 = arith.constant 0 : index
    %c135 = arith.constant 135 : index
    %109 = vector.load %arg8[%c0_71, %c135] : memref<16x512xf32, #tpu.memory_space<vmem>>, vector<16x256xf32>
    %c15 = arith.constant 15 : index
    %c0_72 = arith.constant 0 : index
    %110 = vector.load %arg2[%c15, %c0_72] : memref<27x256xf32, #tpu.memory_space<vmem>>, vector<1x256xf32>
    %111 = vector.broadcast %110 : vector<1x256xf32> to vector<16x256xf32>
    %112 = arith.mulf %109, %111 : vector<16x256xf32>
    %c0_73 = arith.constant 0 : index
    %c240 = arith.constant 240 : index
    %c0_74 = arith.constant 0 : index
    %113 = vector.load %arg9[%c0_73, %c240, %c0_74] : memref<2x256x256xf32, #tpu.memory_space<vmem>>, vector<1x16x256xf32>
    %114 = vector.shape_cast %113 : vector<1x16x256xf32> to vector<16x256xf32>
    %115 = vector.shape_cast %112 : vector<16x256xf32> to vector<1x16x256xf32>
    tpu.vector_store %arg9[%c0_73, %c240, %c0_74], %115 {strides = array<i32>} : memref<2x256x256xf32, #tpu.memory_space<vmem>>, vector<1x16x256xf32>,
    %c0_75 = arith.constant 0 : index
    %c0_76 = arith.constant 0 : index
    %116 = vector.load %arg3[%c0_75, %c0_76] : memref<16x432xf32, #tpu.memory_space<vmem>>, vector<16x256xf32>
    %c0_77 = arith.constant 0 : index
    %c0_78 = arith.constant 0 : index
    %c0_79 = arith.constant 0 : index
    %117 = vector.load %arg9[%c0_77, %c0_78, %c0_79] : memref<2x256x256xf32, #tpu.memory_space<vmem>>, vector<1x256x256xf32>
    %118 = vector.shape_cast %117 : vector<1x256x256xf32> to vector<256x256xf32>
    %cst_80 = arith.constant dense<0.000000e+00> : vector<16x256xf32>
    %119 = tpu.matmul %116, %118, %cst_80 {dimension_numbers = #tpu.dot_dimension_numbers<[1], [0], [0], [1], [0, 0, 1, 1], [], []>} : vector<16x256xf32>, vector<256x256xf32>, vector<16x256xf32> -> vector<16x256xf32>
    %c0_81 = arith.constant 0 : index
    %c0_82 = arith.constant 0 : index
    %120 = vector.load %arg10[%c0_81, %c0_82] : memref<16x256xf32, #tpu.memory_space<vmem>>, vector<16x256xf32>
    tpu.vector_store %arg10[%c0_81, %c0_82], %119 {strides = array<i32>} : memref<16x256xf32, #tpu.memory_space<vmem>>, vector<16x256xf32>,
    %c0_83 = arith.constant 0 : index
    %c136 = arith.constant 136 : index
    %121 = vector.load %arg8[%c0_83, %c136] : memref<16x512xf32, #tpu.memory_space<vmem>>, vector<16x256xf32>
    %c16_84 = arith.constant 16 : index
    %c0_85 = arith.constant 0 : index
    %122 = vector.load %arg2[%c16_84, %c0_85] : memref<27x256xf32, #tpu.memory_space<vmem>>, vector<1x256xf32>
    %123 = vector.broadcast %122 : vector<1x256xf32> to vector<16x256xf32>
    %124 = arith.mulf %121, %123 : vector<16x256xf32>
    %c1_86 = arith.constant 1 : index
    %c0_87 = arith.constant 0 : index
    %c0_88 = arith.constant 0 : index
    %125 = vector.load %arg9[%c1_86, %c0_87, %c0_88] : memref<2x256x256xf32, #tpu.memory_space<vmem>>, vector<1x16x256xf32>
    %126 = vector.shape_cast %125 : vector<1x16x256xf32> to vector<16x256xf32>
    %127 = vector.shape_cast %124 : vector<16x256xf32> to vector<1x16x256xf32>
    tpu.vector_store %arg9[%c1_86, %c0_87, %c0_88], %127 {strides = array<i32>} : memref<2x256x256xf32, #tpu.memory_space<vmem>>, vector<1x16x256xf32>,
    %c0_89 = arith.constant 0 : index
    %c137 = arith.constant 137 : index
    %128 = vector.load %arg8[%c0_89, %c137] : memref<16x512xf32, #tpu.memory_space<vmem>>, vector<16x256xf32>
    %c17 = arith.constant 17 : index
    %c0_90 = arith.constant 0 : index
    %129 = vector.load %arg2[%c17, %c0_90] : memref<27x256xf32, #tpu.memory_space<vmem>>, vector<1x256xf32>
    %130 = vector.broadcast %129 : vector<1x256xf32> to vector<16x256xf32>
    %131 = arith.mulf %128, %130 : vector<16x256xf32>
    %c1_91 = arith.constant 1 : index
    %c16_92 = arith.constant 16 : index
    %c0_93 = arith.constant 0 : index
    %132 = vector.load %arg9[%c1_91, %c16_92, %c0_93] : memref<2x256x256xf32, #tpu.memory_space<vmem>>, vector<1x16x256xf32>
    %133 = vector.shape_cast %132 : vector<1x16x256xf32> to vector<16x256xf32>
    %134 = vector.shape_cast %131 : vector<16x256xf32> to vector<1x16x256xf32>
    tpu.vector_store %arg9[%c1_91, %c16_92, %c0_93], %134 {strides = array<i32>} : memref<2x256x256xf32, #tpu.memory_space<vmem>>, vector<1x16x256xf32>,
    %c0_94 = arith.constant 0 : index
    %c183 = arith.constant 183 : index
    %135 = vector.load %arg8[%c0_94, %c183] : memref<16x512xf32, #tpu.memory_space<vmem>>, vector<16x256xf32>
    %c18 = arith.constant 18 : index
    %c0_95 = arith.constant 0 : index
    %136 = vector.load %arg2[%c18, %c0_95] : memref<27x256xf32, #tpu.memory_space<vmem>>, vector<1x256xf32>
    %137 = vector.broadcast %136 : vector<1x256xf32> to vector<16x256xf32>
    %138 = arith.mulf %135, %137 : vector<16x256xf32>
    %c1_96 = arith.constant 1 : index
    %c32_97 = arith.constant 32 : index
    %c0_98 = arith.constant 0 : index
    %139 = vector.load %arg9[%c1_96, %c32_97, %c0_98] : memref<2x256x256xf32, #tpu.memory_space<vmem>>, vector<1x16x256xf32>
    %140 = vector.shape_cast %139 : vector<1x16x256xf32> to vector<16x256xf32>
    %141 = vector.shape_cast %138 : vector<16x256xf32> to vector<1x16x256xf32>
    tpu.vector_store %arg9[%c1_96, %c32_97, %c0_98], %141 {strides = array<i32>} : memref<2x256x256xf32, #tpu.memory_space<vmem>>, vector<1x16x256xf32>,
    %c0_99 = arith.constant 0 : index
    %c184 = arith.constant 184 : index
    %142 = vector.load %arg8[%c0_99, %c184] : memref<16x512xf32, #tpu.memory_space<vmem>>, vector<16x256xf32>
    %c19 = arith.constant 19 : index
    %c0_100 = arith.constant 0 : index
    %143 = vector.load %arg2[%c19, %c0_100] : memref<27x256xf32, #tpu.memory_space<vmem>>, vector<1x256xf32>
    %144 = vector.broadcast %143 : vector<1x256xf32> to vector<16x256xf32>
    %145 = arith.mulf %142, %144 : vector<16x256xf32>
    %c1_101 = arith.constant 1 : index
    %c48_102 = arith.constant 48 : index
    %c0_103 = arith.constant 0 : index
    %146 = vector.load %arg9[%c1_101, %c48_102, %c0_103] : memref<2x256x256xf32, #tpu.memory_space<vmem>>, vector<1x16x256xf32>
    %147 = vector.shape_cast %146 : vector<1x16x256xf32> to vector<16x256xf32>
    %148 = vector.shape_cast %145 : vector<16x256xf32> to vector<1x16x256xf32>
    tpu.vector_store %arg9[%c1_101, %c48_102, %c0_103], %148 {strides = array<i32>} : memref<2x256x256xf32, #tpu.memory_space<vmem>>, vector<1x16x256xf32>,
    %c0_104 = arith.constant 0 : index
    %c185 = arith.constant 185 : index
    %149 = vector.load %arg8[%c0_104, %c185] : memref<16x512xf32, #tpu.memory_space<vmem>>, vector<16x256xf32>
    %c20 = arith.constant 20 : index
    %c0_105 = arith.constant 0 : index
    %150 = vector.load %arg2[%c20, %c0_105] : memref<27x256xf32, #tpu.memory_space<vmem>>, vector<1x256xf32>
    %151 = vector.broadcast %150 : vector<1x256xf32> to vector<16x256xf32>
    %152 = arith.mulf %149, %151 : vector<16x256xf32>
    %c1_106 = arith.constant 1 : index
    %c64_107 = arith.constant 64 : index
    %c0_108 = arith.constant 0 : index
    %153 = vector.load %arg9[%c1_106, %c64_107, %c0_108] : memref<2x256x256xf32, #tpu.memory_space<vmem>>, vector<1x16x256xf32>
    %154 = vector.shape_cast %153 : vector<1x16x256xf32> to vector<16x256xf32>
    %155 = vector.shape_cast %152 : vector<16x256xf32> to vector<1x16x256xf32>
    tpu.vector_store %arg9[%c1_106, %c64_107, %c0_108], %155 {strides = array<i32>} : memref<2x256x256xf32, #tpu.memory_space<vmem>>, vector<1x16x256xf32>,
    %c0_109 = arith.constant 0 : index
    %c191 = arith.constant 191 : index
    %156 = vector.load %arg8[%c0_109, %c191] : memref<16x512xf32, #tpu.memory_space<vmem>>, vector<16x256xf32>
    %c21 = arith.constant 21 : index
    %c0_110 = arith.constant 0 : index
    %157 = vector.load %arg2[%c21, %c0_110] : memref<27x256xf32, #tpu.memory_space<vmem>>, vector<1x256xf32>
    %158 = vector.broadcast %157 : vector<1x256xf32> to vector<16x256xf32>
    %159 = arith.mulf %156, %158 : vector<16x256xf32>
    %c1_111 = arith.constant 1 : index
    %c80_112 = arith.constant 80 : index
    %c0_113 = arith.constant 0 : index
    %160 = vector.load %arg9[%c1_111, %c80_112, %c0_113] : memref<2x256x256xf32, #tpu.memory_space<vmem>>, vector<1x16x256xf32>
    %161 = vector.shape_cast %160 : vector<1x16x256xf32> to vector<16x256xf32>
    %162 = vector.shape_cast %159 : vector<16x256xf32> to vector<1x16x256xf32>
    tpu.vector_store %arg9[%c1_111, %c80_112, %c0_113], %162 {strides = array<i32>} : memref<2x256x256xf32, #tpu.memory_space<vmem>>, vector<1x16x256xf32>,
    %c0_114 = arith.constant 0 : index
    %c192_115 = arith.constant 192 : index
    %163 = vector.load %arg8[%c0_114, %c192_115] : memref<16x512xf32, #tpu.memory_space<vmem>>, vector<16x256xf32>
    %c22 = arith.constant 22 : index
    %c0_116 = arith.constant 0 : index
    %164 = vector.load %arg2[%c22, %c0_116] : memref<27x256xf32, #tpu.memory_space<vmem>>, vector<1x256xf32>
    %165 = vector.broadcast %164 : vector<1x256xf32> to vector<16x256xf32>
    %166 = arith.mulf %163, %165 : vector<16x256xf32>
    %c1_117 = arith.constant 1 : index
    %c96_118 = arith.constant 96 : index
    %c0_119 = arith.constant 0 : index
    %167 = vector.load %arg9[%c1_117, %c96_118, %c0_119] : memref<2x256x256xf32, #tpu.memory_space<vmem>>, vector<1x16x256xf32>
    %168 = vector.shape_cast %167 : vector<1x16x256xf32> to vector<16x256xf32>
    %169 = vector.shape_cast %166 : vector<16x256xf32> to vector<1x16x256xf32>
    tpu.vector_store %arg9[%c1_117, %c96_118, %c0_119], %169 {strides = array<i32>} : memref<2x256x256xf32, #tpu.memory_space<vmem>>, vector<1x16x256xf32>,
    %c0_120 = arith.constant 0 : index
    %c193 = arith.constant 193 : index
    %170 = vector.load %arg8[%c0_120, %c193] : memref<16x512xf32, #tpu.memory_space<vmem>>, vector<16x256xf32>
    %c23 = arith.constant 23 : index
    %c0_121 = arith.constant 0 : index
    %171 = vector.load %arg2[%c23, %c0_121] : memref<27x256xf32, #tpu.memory_space<vmem>>, vector<1x256xf32>
    %172 = vector.broadcast %171 : vector<1x256xf32> to vector<16x256xf32>
    %173 = arith.mulf %170, %172 : vector<16x256xf32>
    %c1_122 = arith.constant 1 : index
    %c112_123 = arith.constant 112 : index
    %c0_124 = arith.constant 0 : index
    %174 = vector.load %arg9[%c1_122, %c112_123, %c0_124] : memref<2x256x256xf32, #tpu.memory_space<vmem>>, vector<1x16x256xf32>
    %175 = vector.shape_cast %174 : vector<1x16x256xf32> to vector<16x256xf32>
    %176 = vector.shape_cast %173 : vector<16x256xf32> to vector<1x16x256xf32>
    tpu.vector_store %arg9[%c1_122, %c112_123, %c0_124], %176 {strides = array<i32>} : memref<2x256x256xf32, #tpu.memory_space<vmem>>, vector<1x16x256xf32>,
    %c0_125 = arith.constant 0 : index
    %c199 = arith.constant 199 : index
    %177 = vector.load %arg8[%c0_125, %c199] : memref<16x512xf32, #tpu.memory_space<vmem>>, vector<16x256xf32>
    %c24 = arith.constant 24 : index
    %c0_126 = arith.constant 0 : index
    %178 = vector.load %arg2[%c24, %c0_126] : memref<27x256xf32, #tpu.memory_space<vmem>>, vector<1x256xf32>
    %179 = vector.broadcast %178 : vector<1x256xf32> to vector<16x256xf32>
    %180 = arith.mulf %177, %179 : vector<16x256xf32>
    %c1_127 = arith.constant 1 : index
    %c128_128 = arith.constant 128 : index
    %c0_129 = arith.constant 0 : index
    %181 = vector.load %arg9[%c1_127, %c128_128, %c0_129] : memref<2x256x256xf32, #tpu.memory_space<vmem>>, vector<1x16x256xf32>
    %182 = vector.shape_cast %181 : vector<1x16x256xf32> to vector<16x256xf32>
    %183 = vector.shape_cast %180 : vector<16x256xf32> to vector<1x16x256xf32>
    tpu.vector_store %arg9[%c1_127, %c128_128, %c0_129], %183 {strides = array<i32>} : memref<2x256x256xf32, #tpu.memory_space<vmem>>, vector<1x16x256xf32>,
    %c0_130 = arith.constant 0 : index
    %c200 = arith.constant 200 : index
    %184 = vector.load %arg8[%c0_130, %c200] : memref<16x512xf32, #tpu.memory_space<vmem>>, vector<16x256xf32>
    %c25 = arith.constant 25 : index
    %c0_131 = arith.constant 0 : index
    %185 = vector.load %arg2[%c25, %c0_131] : memref<27x256xf32, #tpu.memory_space<vmem>>, vector<1x256xf32>
    %186 = vector.broadcast %185 : vector<1x256xf32> to vector<16x256xf32>
    %187 = arith.mulf %184, %186 : vector<16x256xf32>
    %c1_132 = arith.constant 1 : index
    %c144_133 = arith.constant 144 : index
    %c0_134 = arith.constant 0 : index
    %188 = vector.load %arg9[%c1_132, %c144_133, %c0_134] : memref<2x256x256xf32, #tpu.memory_space<vmem>>, vector<1x16x256xf32>
    %189 = vector.shape_cast %188 : vector<1x16x256xf32> to vector<16x256xf32>
    %190 = vector.shape_cast %187 : vector<16x256xf32> to vector<1x16x256xf32>
    tpu.vector_store %arg9[%c1_132, %c144_133, %c0_134], %190 {strides = array<i32>} : memref<2x256x256xf32, #tpu.memory_space<vmem>>, vector<1x16x256xf32>,
    %c0_135 = arith.constant 0 : index
    %c201 = arith.constant 201 : index
    %191 = vector.load %arg8[%c0_135, %c201] : memref<16x512xf32, #tpu.memory_space<vmem>>, vector<16x256xf32>
    %c26 = arith.constant 26 : index
    %c0_136 = arith.constant 0 : index
    %192 = vector.load %arg2[%c26, %c0_136] : memref<27x256xf32, #tpu.memory_space<vmem>>, vector<1x256xf32>
    %193 = vector.broadcast %192 : vector<1x256xf32> to vector<16x256xf32>
    %194 = arith.mulf %191, %193 : vector<16x256xf32>
    %c1_137 = arith.constant 1 : index
    %c160_138 = arith.constant 160 : index
    %c0_139 = arith.constant 0 : index
    %195 = vector.load %arg9[%c1_137, %c160_138, %c0_139] : memref<2x256x256xf32, #tpu.memory_space<vmem>>, vector<1x16x256xf32>
    %196 = vector.shape_cast %195 : vector<1x16x256xf32> to vector<16x256xf32>
    %197 = vector.shape_cast %194 : vector<16x256xf32> to vector<1x16x256xf32>
    tpu.vector_store %arg9[%c1_137, %c160_138, %c0_139], %197 {strides = array<i32>} : memref<2x256x256xf32, #tpu.memory_space<vmem>>, vector<1x16x256xf32>,
    %c0_140 = arith.constant 0 : index
    %c256 = arith.constant 256 : index
    %198 = vector.load %arg3[%c0_140, %c256] : memref<16x432xf32, #tpu.memory_space<vmem>>, vector<16x176xf32>
    %c1_141 = arith.constant 1 : index
    %c0_142 = arith.constant 0 : index
    %c0_143 = arith.constant 0 : index
    %199 = vector.load %arg9[%c1_141, %c0_142, %c0_143] : memref<2x256x256xf32, #tpu.memory_space<vmem>>, vector<1x176x256xf32>
    %200 = vector.shape_cast %199 : vector<1x176x256xf32> to vector<176x256xf32>
    %cst_144 = arith.constant dense<0.000000e+00> : vector<16x256xf32>
    %201 = tpu.matmul %198, %200, %cst_144 {dimension_numbers = #tpu.dot_dimension_numbers<[1], [0], [0], [1], [0, 0, 1, 1], [], []>} : vector<16x176xf32>, vector<176x256xf32>, vector<16x256xf32> -> vector<16x256xf32>
    %c0_145 = arith.constant 0 : index
    %c0_146 = arith.constant 0 : index
    %202 = vector.load %arg10[%c0_145, %c0_146] : memref<16x256xf32, #tpu.memory_space<vmem>>, vector<16x256xf32>
    %203 = arith.addf %202, %201 : vector<16x256xf32>
    %c0_147 = arith.constant 0 : index
    %c0_148 = arith.constant 0 : index
    %204 = vector.load %arg10[%c0_147, %c0_148] : memref<16x256xf32, #tpu.memory_space<vmem>>, vector<16x256xf32>
    tpu.vector_store %arg10[%c0_147, %c0_148], %203 {strides = array<i32>} : memref<16x256xf32, #tpu.memory_space<vmem>>, vector<16x256xf32>,
    %c0_149 = arith.constant 0 : index
    %c0_150 = arith.constant 0 : index
    %205 = vector.load %arg10[%c0_149, %c0_150] : memref<16x256xf32, #tpu.memory_space<vmem>>, vector<16x256xf32>
    %c0_151 = arith.constant 0 : index
    %c0_152 = arith.constant 0 : index
    %206 = vector.load %arg4[%c0_151, %c0_152] : memref<16x1xf32, #tpu.memory_space<vmem>>, vector<16x1xf32>
    %207 = vector.broadcast %206 : vector<16x1xf32> to vector<16x256xf32>
    %208 = arith.addf %205, %207 : vector<16x256xf32>
    %cst_153 = arith.constant 0.000000e+00 : f32
    %209 = vector.broadcast %cst_153 : f32 to vector<16x256xf32>
    %210 = arith.maximumf %208, %209 : vector<16x256xf32>
    %c0_154 = arith.constant 0 : index
    %c128_155 = arith.constant 128 : index
    %211 = vector.load %arg8[%c0_154, %c128_155] : memref<16x512xf32, #tpu.memory_space<vmem>>, vector<16x256xf32>
    tpu.vector_store %arg8[%c0_154, %c128_155], %210 {strides = array<i32>} : memref<16x512xf32, #tpu.memory_space<vmem>>, vector<16x256xf32>,
    %c0_156 = arith.constant 0 : index
    %c55_157 = arith.constant 55 : index
    %212 = vector.load %arg8[%c0_156, %c55_157] : memref<16x512xf32, #tpu.memory_space<vmem>>, vector<16x256xf32>
    %c0_158 = arith.constant 0 : index
    %c0_159 = arith.constant 0 : index
    %213 = vector.load %arg2[%c0_158, %c0_159] : memref<27x256xf32, #tpu.memory_space<vmem>>, vector<1x256xf32>
    %214 = vector.broadcast %213 : vector<1x256xf32> to vector<16x256xf32>
    %215 = arith.mulf %212, %214 : vector<16x256xf32>
    %c0_160 = arith.constant 0 : index
    %c0_161 = arith.constant 0 : index
    %c0_162 = arith.constant 0 : index
    %216 = vector.load %arg9[%c0_160, %c0_161, %c0_162] : memref<2x256x256xf32, #tpu.memory_space<vmem>>, vector<1x16x256xf32>
    %217 = vector.shape_cast %216 : vector<1x16x256xf32> to vector<16x256xf32>
    %218 = vector.shape_cast %215 : vector<16x256xf32> to vector<1x16x256xf32>
    tpu.vector_store %arg9[%c0_160, %c0_161, %c0_162], %218 {strides = array<i32>} : memref<2x256x256xf32, #tpu.memory_space<vmem>>, vector<1x16x256xf32>,
    %c0_163 = arith.constant 0 : index
    %c56_164 = arith.constant 56 : index
    %219 = vector.load %arg8[%c0_163, %c56_164] : memref<16x512xf32, #tpu.memory_space<vmem>>, vector<16x256xf32>
    %c1_165 = arith.constant 1 : index
    %c0_166 = arith.constant 0 : index
    %220 = vector.load %arg2[%c1_165, %c0_166] : memref<27x256xf32, #tpu.memory_space<vmem>>, vector<1x256xf32>
    %221 = vector.broadcast %220 : vector<1x256xf32> to vector<16x256xf32>
    %222 = arith.mulf %219, %221 : vector<16x256xf32>
    %c0_167 = arith.constant 0 : index
    %c16_168 = arith.constant 16 : index
    %c0_169 = arith.constant 0 : index
    %223 = vector.load %arg9[%c0_167, %c16_168, %c0_169] : memref<2x256x256xf32, #tpu.memory_space<vmem>>, vector<1x16x256xf32>
    %224 = vector.shape_cast %223 : vector<1x16x256xf32> to vector<16x256xf32>
    %225 = vector.shape_cast %222 : vector<16x256xf32> to vector<1x16x256xf32>
    tpu.vector_store %arg9[%c0_167, %c16_168, %c0_169], %225 {strides = array<i32>} : memref<2x256x256xf32, #tpu.memory_space<vmem>>, vector<1x16x256xf32>,
    %c0_170 = arith.constant 0 : index
    %c57_171 = arith.constant 57 : index
    %226 = vector.load %arg8[%c0_170, %c57_171] : memref<16x512xf32, #tpu.memory_space<vmem>>, vector<16x256xf32>
    %c2_172 = arith.constant 2 : index
    %c0_173 = arith.constant 0 : index
    %227 = vector.load %arg2[%c2_172, %c0_173] : memref<27x256xf32, #tpu.memory_space<vmem>>, vector<1x256xf32>
    %228 = vector.broadcast %227 : vector<1x256xf32> to vector<16x256xf32>
    %229 = arith.mulf %226, %228 : vector<16x256xf32>
    %c0_174 = arith.constant 0 : index
    %c32_175 = arith.constant 32 : index
    %c0_176 = arith.constant 0 : index
    %230 = vector.load %arg9[%c0_174, %c32_175, %c0_176] : memref<2x256x256xf32, #tpu.memory_space<vmem>>, vector<1x16x256xf32>
    %231 = vector.shape_cast %230 : vector<1x16x256xf32> to vector<16x256xf32>
    %232 = vector.shape_cast %229 : vector<16x256xf32> to vector<1x16x256xf32>
    tpu.vector_store %arg9[%c0_174, %c32_175, %c0_176], %232 {strides = array<i32>} : memref<2x256x256xf32, #tpu.memory_space<vmem>>, vector<1x16x256xf32>,
    %c0_177 = arith.constant 0 : index
    %c63_178 = arith.constant 63 : index
    %233 = vector.load %arg8[%c0_177, %c63_178] : memref<16x512xf32, #tpu.memory_space<vmem>>, vector<16x256xf32>
    %c3_179 = arith.constant 3 : index
    %c0_180 = arith.constant 0 : index
    %234 = vector.load %arg2[%c3_179, %c0_180] : memref<27x256xf32, #tpu.memory_space<vmem>>, vector<1x256xf32>
    %235 = vector.broadcast %234 : vector<1x256xf32> to vector<16x256xf32>
    %236 = arith.mulf %233, %235 : vector<16x256xf32>
    %c0_181 = arith.constant 0 : index
    %c48_182 = arith.constant 48 : index
    %c0_183 = arith.constant 0 : index
    %237 = vector.load %arg9[%c0_181, %c48_182, %c0_183] : memref<2x256x256xf32, #tpu.memory_space<vmem>>, vector<1x16x256xf32>
    %238 = vector.shape_cast %237 : vector<1x16x256xf32> to vector<16x256xf32>
    %239 = vector.shape_cast %236 : vector<16x256xf32> to vector<1x16x256xf32>
    tpu.vector_store %arg9[%c0_181, %c48_182, %c0_183], %239 {strides = array<i32>} : memref<2x256x256xf32, #tpu.memory_space<vmem>>, vector<1x16x256xf32>,
    %c0_184 = arith.constant 0 : index
    %c64_185 = arith.constant 64 : index
    %240 = vector.load %arg8[%c0_184, %c64_185] : memref<16x512xf32, #tpu.memory_space<vmem>>, vector<16x256xf32>
    %c4_186 = arith.constant 4 : index
    %c0_187 = arith.constant 0 : index
    %241 = vector.load %arg2[%c4_186, %c0_187] : memref<27x256xf32, #tpu.memory_space<vmem>>, vector<1x256xf32>
    %242 = vector.broadcast %241 : vector<1x256xf32> to vector<16x256xf32>
    %243 = arith.mulf %240, %242 : vector<16x256xf32>
    %c0_188 = arith.constant 0 : index
    %c64_189 = arith.constant 64 : index
    %c0_190 = arith.constant 0 : index
    %244 = vector.load %arg9[%c0_188, %c64_189, %c0_190] : memref<2x256x256xf32, #tpu.memory_space<vmem>>, vector<1x16x256xf32>
    %245 = vector.shape_cast %244 : vector<1x16x256xf32> to vector<16x256xf32>
    %246 = vector.shape_cast %243 : vector<16x256xf32> to vector<1x16x256xf32>
    tpu.vector_store %arg9[%c0_188, %c64_189, %c0_190], %246 {strides = array<i32>} : memref<2x256x256xf32, #tpu.memory_space<vmem>>, vector<1x16x256xf32>,
    %c0_191 = arith.constant 0 : index
    %c65_192 = arith.constant 65 : index
    %247 = vector.load %arg8[%c0_191, %c65_192] : memref<16x512xf32, #tpu.memory_space<vmem>>, vector<16x256xf32>
    %c5_193 = arith.constant 5 : index
    %c0_194 = arith.constant 0 : index
    %248 = vector.load %arg2[%c5_193, %c0_194] : memref<27x256xf32, #tpu.memory_space<vmem>>, vector<1x256xf32>
    %249 = vector.broadcast %248 : vector<1x256xf32> to vector<16x256xf32>
    %250 = arith.mulf %247, %249 : vector<16x256xf32>
    %c0_195 = arith.constant 0 : index
    %c80_196 = arith.constant 80 : index
    %c0_197 = arith.constant 0 : index
    %251 = vector.load %arg9[%c0_195, %c80_196, %c0_197] : memref<2x256x256xf32, #tpu.memory_space<vmem>>, vector<1x16x256xf32>
    %252 = vector.shape_cast %251 : vector<1x16x256xf32> to vector<16x256xf32>
    %253 = vector.shape_cast %250 : vector<16x256xf32> to vector<1x16x256xf32>
    tpu.vector_store %arg9[%c0_195, %c80_196, %c0_197], %253 {strides = array<i32>} : memref<2x256x256xf32, #tpu.memory_space<vmem>>, vector<1x16x256xf32>,
    %c0_198 = arith.constant 0 : index
    %c71_199 = arith.constant 71 : index
    %254 = vector.load %arg8[%c0_198, %c71_199] : memref<16x512xf32, #tpu.memory_space<vmem>>, vector<16x256xf32>
    %c6_200 = arith.constant 6 : index
    %c0_201 = arith.constant 0 : index
    %255 = vector.load %arg2[%c6_200, %c0_201] : memref<27x256xf32, #tpu.memory_space<vmem>>, vector<1x256xf32>
    %256 = vector.broadcast %255 : vector<1x256xf32> to vector<16x256xf32>
    %257 = arith.mulf %254, %256 : vector<16x256xf32>
    %c0_202 = arith.constant 0 : index
    %c96_203 = arith.constant 96 : index
    %c0_204 = arith.constant 0 : index
    %258 = vector.load %arg9[%c0_202, %c96_203, %c0_204] : memref<2x256x256xf32, #tpu.memory_space<vmem>>, vector<1x16x256xf32>
    %259 = vector.shape_cast %258 : vector<1x16x256xf32> to vector<16x256xf32>
    %260 = vector.shape_cast %257 : vector<16x256xf32> to vector<1x16x256xf32>
    tpu.vector_store %arg9[%c0_202, %c96_203, %c0_204], %260 {strides = array<i32>} : memref<2x256x256xf32, #tpu.memory_space<vmem>>, vector<1x16x256xf32>,
    %c0_205 = arith.constant 0 : index
    %c72_206 = arith.constant 72 : index
    %261 = vector.load %arg8[%c0_205, %c72_206] : memref<16x512xf32, #tpu.memory_space<vmem>>, vector<16x256xf32>
    %c7_207 = arith.constant 7 : index
    %c0_208 = arith.constant 0 : index
    %262 = vector.load %arg2[%c7_207, %c0_208] : memref<27x256xf32, #tpu.memory_space<vmem>>, vector<1x256xf32>
    %263 = vector.broadcast %262 : vector<1x256xf32> to vector<16x256xf32>
    %264 = arith.mulf %261, %263 : vector<16x256xf32>
    %c0_209 = arith.constant 0 : index
    %c112_210 = arith.constant 112 : index
    %c0_211 = arith.constant 0 : index
    %265 = vector.load %arg9[%c0_209, %c112_210, %c0_211] : memref<2x256x256xf32, #tpu.memory_space<vmem>>, vector<1x16x256xf32>
    %266 = vector.shape_cast %265 : vector<1x16x256xf32> to vector<16x256xf32>
    %267 = vector.shape_cast %264 : vector<16x256xf32> to vector<1x16x256xf32>
    tpu.vector_store %arg9[%c0_209, %c112_210, %c0_211], %267 {strides = array<i32>} : memref<2x256x256xf32, #tpu.memory_space<vmem>>, vector<1x16x256xf32>,
    %c0_212 = arith.constant 0 : index
    %c73_213 = arith.constant 73 : index
    %268 = vector.load %arg8[%c0_212, %c73_213] : memref<16x512xf32, #tpu.memory_space<vmem>>, vector<16x256xf32>
    %c8_214 = arith.constant 8 : index
    %c0_215 = arith.constant 0 : index
    %269 = vector.load %arg2[%c8_214, %c0_215] : memref<27x256xf32, #tpu.memory_space<vmem>>, vector<1x256xf32>
    %270 = vector.broadcast %269 : vector<1x256xf32> to vector<16x256xf32>
    %271 = arith.mulf %268, %270 : vector<16x256xf32>
    %c0_216 = arith.constant 0 : index
    %c128_217 = arith.constant 128 : index
    %c0_218 = arith.constant 0 : index
    %272 = vector.load %arg9[%c0_216, %c128_217, %c0_218] : memref<2x256x256xf32, #tpu.memory_space<vmem>>, vector<1x16x256xf32>
    %273 = vector.shape_cast %272 : vector<1x16x256xf32> to vector<16x256xf32>
    %274 = vector.shape_cast %271 : vector<16x256xf32> to vector<1x16x256xf32>
    tpu.vector_store %arg9[%c0_216, %c128_217, %c0_218], %274 {strides = array<i32>} : memref<2x256x256xf32, #tpu.memory_space<vmem>>, vector<1x16x256xf32>,
    %c0_219 = arith.constant 0 : index
    %c119_220 = arith.constant 119 : index
    %275 = vector.load %arg8[%c0_219, %c119_220] : memref<16x512xf32, #tpu.memory_space<vmem>>, vector<16x256xf32>
    %c9_221 = arith.constant 9 : index
    %c0_222 = arith.constant 0 : index
    %276 = vector.load %arg2[%c9_221, %c0_222] : memref<27x256xf32, #tpu.memory_space<vmem>>, vector<1x256xf32>
    %277 = vector.broadcast %276 : vector<1x256xf32> to vector<16x256xf32>
    %278 = arith.mulf %275, %277 : vector<16x256xf32>
    %c0_223 = arith.constant 0 : index
    %c144_224 = arith.constant 144 : index
    %c0_225 = arith.constant 0 : index
    %279 = vector.load %arg9[%c0_223, %c144_224, %c0_225] : memref<2x256x256xf32, #tpu.memory_space<vmem>>, vector<1x16x256xf32>
    %280 = vector.shape_cast %279 : vector<1x16x256xf32> to vector<16x256xf32>
    %281 = vector.shape_cast %278 : vector<16x256xf32> to vector<1x16x256xf32>
    tpu.vector_store %arg9[%c0_223, %c144_224, %c0_225], %281 {strides = array<i32>} : memref<2x256x256xf32, #tpu.memory_space<vmem>>, vector<1x16x256xf32>,
    %c0_226 = arith.constant 0 : index
    %c120_227 = arith.constant 120 : index
    %282 = vector.load %arg8[%c0_226, %c120_227] : memref<16x512xf32, #tpu.memory_space<vmem>>, vector<16x256xf32>
    %c10_228 = arith.constant 10 : index
    %c0_229 = arith.constant 0 : index
    %283 = vector.load %arg2[%c10_228, %c0_229] : memref<27x256xf32, #tpu.memory_space<vmem>>, vector<1x256xf32>
    %284 = vector.broadcast %283 : vector<1x256xf32> to vector<16x256xf32>
    %285 = arith.mulf %282, %284 : vector<16x256xf32>
    %c0_230 = arith.constant 0 : index
    %c160_231 = arith.constant 160 : index
    %c0_232 = arith.constant 0 : index
    %286 = vector.load %arg9[%c0_230, %c160_231, %c0_232] : memref<2x256x256xf32, #tpu.memory_space<vmem>>, vector<1x16x256xf32>
    %287 = vector.shape_cast %286 : vector<1x16x256xf32> to vector<16x256xf32>
    %288 = vector.shape_cast %285 : vector<16x256xf32> to vector<1x16x256xf32>
    tpu.vector_store %arg9[%c0_230, %c160_231, %c0_232], %288 {strides = array<i32>} : memref<2x256x256xf32, #tpu.memory_space<vmem>>, vector<1x16x256xf32>,
    %c0_233 = arith.constant 0 : index
    %c121_234 = arith.constant 121 : index
    %289 = vector.load %arg8[%c0_233, %c121_234] : memref<16x512xf32, #tpu.memory_space<vmem>>, vector<16x256xf32>
    %c11_235 = arith.constant 11 : index
    %c0_236 = arith.constant 0 : index
    %290 = vector.load %arg2[%c11_235, %c0_236] : memref<27x256xf32, #tpu.memory_space<vmem>>, vector<1x256xf32>
    %291 = vector.broadcast %290 : vector<1x256xf32> to vector<16x256xf32>
    %292 = arith.mulf %289, %291 : vector<16x256xf32>
    %c0_237 = arith.constant 0 : index
    %c176_238 = arith.constant 176 : index
    %c0_239 = arith.constant 0 : index
    %293 = vector.load %arg9[%c0_237, %c176_238, %c0_239] : memref<2x256x256xf32, #tpu.memory_space<vmem>>, vector<1x16x256xf32>
    %294 = vector.shape_cast %293 : vector<1x16x256xf32> to vector<16x256xf32>
    %295 = vector.shape_cast %292 : vector<16x256xf32> to vector<1x16x256xf32>
    tpu.vector_store %arg9[%c0_237, %c176_238, %c0_239], %295 {strides = array<i32>} : memref<2x256x256xf32, #tpu.memory_space<vmem>>, vector<1x16x256xf32>,
    %c0_240 = arith.constant 0 : index
    %c127_241 = arith.constant 127 : index
    %296 = vector.load %arg8[%c0_240, %c127_241] : memref<16x512xf32, #tpu.memory_space<vmem>>, vector<16x256xf32>
    %c12_242 = arith.constant 12 : index
    %c0_243 = arith.constant 0 : index
    %297 = vector.load %arg2[%c12_242, %c0_243] : memref<27x256xf32, #tpu.memory_space<vmem>>, vector<1x256xf32>
    %298 = vector.broadcast %297 : vector<1x256xf32> to vector<16x256xf32>
    %299 = arith.mulf %296, %298 : vector<16x256xf32>
    %c0_244 = arith.constant 0 : index
    %c192_245 = arith.constant 192 : index
    %c0_246 = arith.constant 0 : index
    %300 = vector.load %arg9[%c0_244, %c192_245, %c0_246] : memref<2x256x256xf32, #tpu.memory_space<vmem>>, vector<1x16x256xf32>
    %301 = vector.shape_cast %300 : vector<1x16x256xf32> to vector<16x256xf32>
    %302 = vector.shape_cast %299 : vector<16x256xf32> to vector<1x16x256xf32>
    tpu.vector_store %arg9[%c0_244, %c192_245, %c0_246], %302 {strides = array<i32>} : memref<2x256x256xf32, #tpu.memory_space<vmem>>, vector<1x16x256xf32>,
    %c0_247 = arith.constant 0 : index
    %c128_248 = arith.constant 128 : index
    %303 = vector.load %arg8[%c0_247, %c128_248] : memref<16x512xf32, #tpu.memory_space<vmem>>, vector<16x256xf32>
    %c0_249 = arith.constant 0 : index
    %c208_250 = arith.constant 208 : index
    %c0_251 = arith.constant 0 : index
    %304 = vector.load %arg9[%c0_249, %c208_250, %c0_251] : memref<2x256x256xf32, #tpu.memory_space<vmem>>, vector<1x16x256xf32>
    %305 = vector.shape_cast %304 : vector<1x16x256xf32> to vector<16x256xf32>
    %306 = vector.shape_cast %303 : vector<16x256xf32> to vector<1x16x256xf32>
    tpu.vector_store %arg9[%c0_249, %c208_250, %c0_251], %306 {strides = array<i32>} : memref<2x256x256xf32, #tpu.memory_space<vmem>>, vector<1x16x256xf32>,
    %c0_252 = arith.constant 0 : index
    %c129_253 = arith.constant 129 : index
    %307 = vector.load %arg8[%c0_252, %c129_253] : memref<16x512xf32, #tpu.memory_space<vmem>>, vector<16x256xf32>
    %c14_254 = arith.constant 14 : index
    %c0_255 = arith.constant 0 : index
    %308 = vector.load %arg2[%c14_254, %c0_255] : memref<27x256xf32, #tpu.memory_space<vmem>>, vector<1x256xf32>
    %309 = vector.broadcast %308 : vector<1x256xf32> to vector<16x256xf32>
    %310 = arith.mulf %307, %309 : vector<16x256xf32>
    %c0_256 = arith.constant 0 : index
    %c224_257 = arith.constant 224 : index
    %c0_258 = arith.constant 0 : index
    %311 = vector.load %arg9[%c0_256, %c224_257, %c0_258] : memref<2x256x256xf32, #tpu.memory_space<vmem>>, vector<1x16x256xf32>
    %312 = vector.shape_cast %311 : vector<1x16x256xf32> to vector<16x256xf32>
    %313 = vector.shape_cast %310 : vector<16x256xf32> to vector<1x16x256xf32>
    tpu.vector_store %arg9[%c0_256, %c224_257, %c0_258], %313 {strides = array<i32>} : memref<2x256x256xf32, #tpu.memory_space<vmem>>, vector<1x16x256xf32>,
    %c0_259 = arith.constant 0 : index
    %c135_260 = arith.constant 135 : index
    %314 = vector.load %arg8[%c0_259, %c135_260] : memref<16x512xf32, #tpu.memory_space<vmem>>, vector<16x256xf32>
    %c15_261 = arith.constant 15 : index
    %c0_262 = arith.constant 0 : index
    %315 = vector.load %arg2[%c15_261, %c0_262] : memref<27x256xf32, #tpu.memory_space<vmem>>, vector<1x256xf32>
    %316 = vector.broadcast %315 : vector<1x256xf32> to vector<16x256xf32>
    %317 = arith.mulf %314, %316 : vector<16x256xf32>
    %c0_263 = arith.constant 0 : index
    %c240_264 = arith.constant 240 : index
    %c0_265 = arith.constant 0 : index
    %318 = vector.load %arg9[%c0_263, %c240_264, %c0_265] : memref<2x256x256xf32, #tpu.memory_space<vmem>>, vector<1x16x256xf32>
    %319 = vector.shape_cast %318 : vector<1x16x256xf32> to vector<16x256xf32>
    %320 = vector.shape_cast %317 : vector<16x256xf32> to vector<1x16x256xf32>
    tpu.vector_store %arg9[%c0_263, %c240_264, %c0_265], %320 {strides = array<i32>} : memref<2x256x256xf32, #tpu.memory_space<vmem>>, vector<1x16x256xf32>,
    %c0_266 = arith.constant 0 : index
    %c0_267 = arith.constant 0 : index
    %321 = vector.load %arg5[%c0_266, %c0_267] : memref<16x432xf32, #tpu.memory_space<vmem>>, vector<16x256xf32>
    %c0_268 = arith.constant 0 : index
    %c0_269 = arith.constant 0 : index
    %c0_270 = arith.constant 0 : index
    %322 = vector.load %arg9[%c0_268, %c0_269, %c0_270] : memref<2x256x256xf32, #tpu.memory_space<vmem>>, vector<1x256x256xf32>
    %323 = vector.shape_cast %322 : vector<1x256x256xf32> to vector<256x256xf32>
    %cst_271 = arith.constant dense<0.000000e+00> : vector<16x256xf32>
    %324 = tpu.matmul %321, %323, %cst_271 {dimension_numbers = #tpu.dot_dimension_numbers<[1], [0], [0], [1], [0, 0, 1, 1], [], []>} : vector<16x256xf32>, vector<256x256xf32>, vector<16x256xf32> -> vector<16x256xf32>
    %c0_272 = arith.constant 0 : index
    %c0_273 = arith.constant 0 : index
    %325 = vector.load %arg10[%c0_272, %c0_273] : memref<16x256xf32, #tpu.memory_space<vmem>>, vector<16x256xf32>
    tpu.vector_store %arg10[%c0_272, %c0_273], %324 {strides = array<i32>} : memref<16x256xf32, #tpu.memory_space<vmem>>, vector<16x256xf32>,
    %c0_274 = arith.constant 0 : index
    %c136_275 = arith.constant 136 : index
    %326 = vector.load %arg8[%c0_274, %c136_275] : memref<16x512xf32, #tpu.memory_space<vmem>>, vector<16x256xf32>
    %c16_276 = arith.constant 16 : index
    %c0_277 = arith.constant 0 : index
    %327 = vector.load %arg2[%c16_276, %c0_277] : memref<27x256xf32, #tpu.memory_space<vmem>>, vector<1x256xf32>
    %328 = vector.broadcast %327 : vector<1x256xf32> to vector<16x256xf32>
    %329 = arith.mulf %326, %328 : vector<16x256xf32>
    %c1_278 = arith.constant 1 : index
    %c0_279 = arith.constant 0 : index
    %c0_280 = arith.constant 0 : index
    %330 = vector.load %arg9[%c1_278, %c0_279, %c0_280] : memref<2x256x256xf32, #tpu.memory_space<vmem>>, vector<1x16x256xf32>
    %331 = vector.shape_cast %330 : vector<1x16x256xf32> to vector<16x256xf32>
    %332 = vector.shape_cast %329 : vector<16x256xf32> to vector<1x16x256xf32>
    tpu.vector_store %arg9[%c1_278, %c0_279, %c0_280], %332 {strides = array<i32>} : memref<2x256x256xf32, #tpu.memory_space<vmem>>, vector<1x16x256xf32>,
    %c0_281 = arith.constant 0 : index
    %c137_282 = arith.constant 137 : index
    %333 = vector.load %arg8[%c0_281, %c137_282] : memref<16x512xf32, #tpu.memory_space<vmem>>, vector<16x256xf32>
    %c17_283 = arith.constant 17 : index
    %c0_284 = arith.constant 0 : index
    %334 = vector.load %arg2[%c17_283, %c0_284] : memref<27x256xf32, #tpu.memory_space<vmem>>, vector<1x256xf32>
    %335 = vector.broadcast %334 : vector<1x256xf32> to vector<16x256xf32>
    %336 = arith.mulf %333, %335 : vector<16x256xf32>
    %c1_285 = arith.constant 1 : index
    %c16_286 = arith.constant 16 : index
    %c0_287 = arith.constant 0 : index
    %337 = vector.load %arg9[%c1_285, %c16_286, %c0_287] : memref<2x256x256xf32, #tpu.memory_space<vmem>>, vector<1x16x256xf32>
    %338 = vector.shape_cast %337 : vector<1x16x256xf32> to vector<16x256xf32>
    %339 = vector.shape_cast %336 : vector<16x256xf32> to vector<1x16x256xf32>
    tpu.vector_store %arg9[%c1_285, %c16_286, %c0_287], %339 {strides = array<i32>} : memref<2x256x256xf32, #tpu.memory_space<vmem>>, vector<1x16x256xf32>,
    %c0_288 = arith.constant 0 : index
    %c183_289 = arith.constant 183 : index
    %340 = vector.load %arg8[%c0_288, %c183_289] : memref<16x512xf32, #tpu.memory_space<vmem>>, vector<16x256xf32>
    %c18_290 = arith.constant 18 : index
    %c0_291 = arith.constant 0 : index
    %341 = vector.load %arg2[%c18_290, %c0_291] : memref<27x256xf32, #tpu.memory_space<vmem>>, vector<1x256xf32>
    %342 = vector.broadcast %341 : vector<1x256xf32> to vector<16x256xf32>
    %343 = arith.mulf %340, %342 : vector<16x256xf32>
    %c1_292 = arith.constant 1 : index
    %c32_293 = arith.constant 32 : index
    %c0_294 = arith.constant 0 : index
    %344 = vector.load %arg9[%c1_292, %c32_293, %c0_294] : memref<2x256x256xf32, #tpu.memory_space<vmem>>, vector<1x16x256xf32>
    %345 = vector.shape_cast %344 : vector<1x16x256xf32> to vector<16x256xf32>
    %346 = vector.shape_cast %343 : vector<16x256xf32> to vector<1x16x256xf32>
    tpu.vector_store %arg9[%c1_292, %c32_293, %c0_294], %346 {strides = array<i32>} : memref<2x256x256xf32, #tpu.memory_space<vmem>>, vector<1x16x256xf32>,
    %c0_295 = arith.constant 0 : index
    %c184_296 = arith.constant 184 : index
    %347 = vector.load %arg8[%c0_295, %c184_296] : memref<16x512xf32, #tpu.memory_space<vmem>>, vector<16x256xf32>
    %c19_297 = arith.constant 19 : index
    %c0_298 = arith.constant 0 : index
    %348 = vector.load %arg2[%c19_297, %c0_298] : memref<27x256xf32, #tpu.memory_space<vmem>>, vector<1x256xf32>
    %349 = vector.broadcast %348 : vector<1x256xf32> to vector<16x256xf32>
    %350 = arith.mulf %347, %349 : vector<16x256xf32>
    %c1_299 = arith.constant 1 : index
    %c48_300 = arith.constant 48 : index
    %c0_301 = arith.constant 0 : index
    %351 = vector.load %arg9[%c1_299, %c48_300, %c0_301] : memref<2x256x256xf32, #tpu.memory_space<vmem>>, vector<1x16x256xf32>
    %352 = vector.shape_cast %351 : vector<1x16x256xf32> to vector<16x256xf32>
    %353 = vector.shape_cast %350 : vector<16x256xf32> to vector<1x16x256xf32>
    tpu.vector_store %arg9[%c1_299, %c48_300, %c0_301], %353 {strides = array<i32>} : memref<2x256x256xf32, #tpu.memory_space<vmem>>, vector<1x16x256xf32>,
    %c0_302 = arith.constant 0 : index
    %c185_303 = arith.constant 185 : index
    %354 = vector.load %arg8[%c0_302, %c185_303] : memref<16x512xf32, #tpu.memory_space<vmem>>, vector<16x256xf32>
    %c20_304 = arith.constant 20 : index
    %c0_305 = arith.constant 0 : index
    %355 = vector.load %arg2[%c20_304, %c0_305] : memref<27x256xf32, #tpu.memory_space<vmem>>, vector<1x256xf32>
    %356 = vector.broadcast %355 : vector<1x256xf32> to vector<16x256xf32>
    %357 = arith.mulf %354, %356 : vector<16x256xf32>
    %c1_306 = arith.constant 1 : index
    %c64_307 = arith.constant 64 : index
    %c0_308 = arith.constant 0 : index
    %358 = vector.load %arg9[%c1_306, %c64_307, %c0_308] : memref<2x256x256xf32, #tpu.memory_space<vmem>>, vector<1x16x256xf32>
    %359 = vector.shape_cast %358 : vector<1x16x256xf32> to vector<16x256xf32>
    %360 = vector.shape_cast %357 : vector<16x256xf32> to vector<1x16x256xf32>
    tpu.vector_store %arg9[%c1_306, %c64_307, %c0_308], %360 {strides = array<i32>} : memref<2x256x256xf32, #tpu.memory_space<vmem>>, vector<1x16x256xf32>,
    %c0_309 = arith.constant 0 : index
    %c191_310 = arith.constant 191 : index
    %361 = vector.load %arg8[%c0_309, %c191_310] : memref<16x512xf32, #tpu.memory_space<vmem>>, vector<16x256xf32>
    %c21_311 = arith.constant 21 : index
    %c0_312 = arith.constant 0 : index
    %362 = vector.load %arg2[%c21_311, %c0_312] : memref<27x256xf32, #tpu.memory_space<vmem>>, vector<1x256xf32>
    %363 = vector.broadcast %362 : vector<1x256xf32> to vector<16x256xf32>
    %364 = arith.mulf %361, %363 : vector<16x256xf32>
    %c1_313 = arith.constant 1 : index
    %c80_314 = arith.constant 80 : index
    %c0_315 = arith.constant 0 : index
    %365 = vector.load %arg9[%c1_313, %c80_314, %c0_315] : memref<2x256x256xf32, #tpu.memory_space<vmem>>, vector<1x16x256xf32>
    %366 = vector.shape_cast %365 : vector<1x16x256xf32> to vector<16x256xf32>
    %367 = vector.shape_cast %364 : vector<16x256xf32> to vector<1x16x256xf32>
    tpu.vector_store %arg9[%c1_313, %c80_314, %c0_315], %367 {strides = array<i32>} : memref<2x256x256xf32, #tpu.memory_space<vmem>>, vector<1x16x256xf32>,
    %c0_316 = arith.constant 0 : index
    %c192_317 = arith.constant 192 : index
    %368 = vector.load %arg8[%c0_316, %c192_317] : memref<16x512xf32, #tpu.memory_space<vmem>>, vector<16x256xf32>
    %c22_318 = arith.constant 22 : index
    %c0_319 = arith.constant 0 : index
    %369 = vector.load %arg2[%c22_318, %c0_319] : memref<27x256xf32, #tpu.memory_space<vmem>>, vector<1x256xf32>
    %370 = vector.broadcast %369 : vector<1x256xf32> to vector<16x256xf32>
    %371 = arith.mulf %368, %370 : vector<16x256xf32>
    %c1_320 = arith.constant 1 : index
    %c96_321 = arith.constant 96 : index
    %c0_322 = arith.constant 0 : index
    %372 = vector.load %arg9[%c1_320, %c96_321, %c0_322] : memref<2x256x256xf32, #tpu.memory_space<vmem>>, vector<1x16x256xf32>
    %373 = vector.shape_cast %372 : vector<1x16x256xf32> to vector<16x256xf32>
    %374 = vector.shape_cast %371 : vector<16x256xf32> to vector<1x16x256xf32>
    tpu.vector_store %arg9[%c1_320, %c96_321, %c0_322], %374 {strides = array<i32>} : memref<2x256x256xf32, #tpu.memory_space<vmem>>, vector<1x16x256xf32>,
    %c0_323 = arith.constant 0 : index
    %c193_324 = arith.constant 193 : index
    %375 = vector.load %arg8[%c0_323, %c193_324] : memref<16x512xf32, #tpu.memory_space<vmem>>, vector<16x256xf32>
    %c23_325 = arith.constant 23 : index
    %c0_326 = arith.constant 0 : index
    %376 = vector.load %arg2[%c23_325, %c0_326] : memref<27x256xf32, #tpu.memory_space<vmem>>, vector<1x256xf32>
    %377 = vector.broadcast %376 : vector<1x256xf32> to vector<16x256xf32>
    %378 = arith.mulf %375, %377 : vector<16x256xf32>
    %c1_327 = arith.constant 1 : index
    %c112_328 = arith.constant 112 : index
    %c0_329 = arith.constant 0 : index
    %379 = vector.load %arg9[%c1_327, %c112_328, %c0_329] : memref<2x256x256xf32, #tpu.memory_space<vmem>>, vector<1x16x256xf32>
    %380 = vector.shape_cast %379 : vector<1x16x256xf32> to vector<16x256xf32>
    %381 = vector.shape_cast %378 : vector<16x256xf32> to vector<1x16x256xf32>
    tpu.vector_store %arg9[%c1_327, %c112_328, %c0_329], %381 {strides = array<i32>} : memref<2x256x256xf32, #tpu.memory_space<vmem>>, vector<1x16x256xf32>,
    %c0_330 = arith.constant 0 : index
    %c199_331 = arith.constant 199 : index
    %382 = vector.load %arg8[%c0_330, %c199_331] : memref<16x512xf32, #tpu.memory_space<vmem>>, vector<16x256xf32>
    %c24_332 = arith.constant 24 : index
    %c0_333 = arith.constant 0 : index
    %383 = vector.load %arg2[%c24_332, %c0_333] : memref<27x256xf32, #tpu.memory_space<vmem>>, vector<1x256xf32>
    %384 = vector.broadcast %383 : vector<1x256xf32> to vector<16x256xf32>
    %385 = arith.mulf %382, %384 : vector<16x256xf32>
    %c1_334 = arith.constant 1 : index
    %c128_335 = arith.constant 128 : index
    %c0_336 = arith.constant 0 : index
    %386 = vector.load %arg9[%c1_334, %c128_335, %c0_336] : memref<2x256x256xf32, #tpu.memory_space<vmem>>, vector<1x16x256xf32>
    %387 = vector.shape_cast %386 : vector<1x16x256xf32> to vector<16x256xf32>
    %388 = vector.shape_cast %385 : vector<16x256xf32> to vector<1x16x256xf32>
    tpu.vector_store %arg9[%c1_334, %c128_335, %c0_336], %388 {strides = array<i32>} : memref<2x256x256xf32, #tpu.memory_space<vmem>>, vector<1x16x256xf32>,
    %c0_337 = arith.constant 0 : index
    %c200_338 = arith.constant 200 : index
    %389 = vector.load %arg8[%c0_337, %c200_338] : memref<16x512xf32, #tpu.memory_space<vmem>>, vector<16x256xf32>
    %c25_339 = arith.constant 25 : index
    %c0_340 = arith.constant 0 : index
    %390 = vector.load %arg2[%c25_339, %c0_340] : memref<27x256xf32, #tpu.memory_space<vmem>>, vector<1x256xf32>
    %391 = vector.broadcast %390 : vector<1x256xf32> to vector<16x256xf32>
    %392 = arith.mulf %389, %391 : vector<16x256xf32>
    %c1_341 = arith.constant 1 : index
    %c144_342 = arith.constant 144 : index
    %c0_343 = arith.constant 0 : index
    %393 = vector.load %arg9[%c1_341, %c144_342, %c0_343] : memref<2x256x256xf32, #tpu.memory_space<vmem>>, vector<1x16x256xf32>
    %394 = vector.shape_cast %393 : vector<1x16x256xf32> to vector<16x256xf32>
    %395 = vector.shape_cast %392 : vector<16x256xf32> to vector<1x16x256xf32>
    tpu.vector_store %arg9[%c1_341, %c144_342, %c0_343], %395 {strides = array<i32>} : memref<2x256x256xf32, #tpu.memory_space<vmem>>, vector<1x16x256xf32>,
    %c0_344 = arith.constant 0 : index
    %c201_345 = arith.constant 201 : index
    %396 = vector.load %arg8[%c0_344, %c201_345] : memref<16x512xf32, #tpu.memory_space<vmem>>, vector<16x256xf32>
    %c26_346 = arith.constant 26 : index
    %c0_347 = arith.constant 0 : index
    %397 = vector.load %arg2[%c26_346, %c0_347] : memref<27x256xf32, #tpu.memory_space<vmem>>, vector<1x256xf32>
    %398 = vector.broadcast %397 : vector<1x256xf32> to vector<16x256xf32>
    %399 = arith.mulf %396, %398 : vector<16x256xf32>
    %c1_348 = arith.constant 1 : index
    %c160_349 = arith.constant 160 : index
    %c0_350 = arith.constant 0 : index
    %400 = vector.load %arg9[%c1_348, %c160_349, %c0_350] : memref<2x256x256xf32, #tpu.memory_space<vmem>>, vector<1x16x256xf32>
    %401 = vector.shape_cast %400 : vector<1x16x256xf32> to vector<16x256xf32>
    %402 = vector.shape_cast %399 : vector<16x256xf32> to vector<1x16x256xf32>
    tpu.vector_store %arg9[%c1_348, %c160_349, %c0_350], %402 {strides = array<i32>} : memref<2x256x256xf32, #tpu.memory_space<vmem>>, vector<1x16x256xf32>,
    %c0_351 = arith.constant 0 : index
    %c256_352 = arith.constant 256 : index
    %403 = vector.load %arg5[%c0_351, %c256_352] : memref<16x432xf32, #tpu.memory_space<vmem>>, vector<16x176xf32>
    %c1_353 = arith.constant 1 : index
    %c0_354 = arith.constant 0 : index
    %c0_355 = arith.constant 0 : index
    %404 = vector.load %arg9[%c1_353, %c0_354, %c0_355] : memref<2x256x256xf32, #tpu.memory_space<vmem>>, vector<1x176x256xf32>
    %405 = vector.shape_cast %404 : vector<1x176x256xf32> to vector<176x256xf32>
    %cst_356 = arith.constant dense<0.000000e+00> : vector<16x256xf32>
    %406 = tpu.matmul %403, %405, %cst_356 {dimension_numbers = #tpu.dot_dimension_numbers<[1], [0], [0], [1], [0, 0, 1, 1], [], []>} : vector<16x176xf32>, vector<176x256xf32>, vector<16x256xf32> -> vector<16x256xf32>
    %c0_357 = arith.constant 0 : index
    %c0_358 = arith.constant 0 : index
    %407 = vector.load %arg10[%c0_357, %c0_358] : memref<16x256xf32, #tpu.memory_space<vmem>>, vector<16x256xf32>
    %408 = arith.addf %407, %406 : vector<16x256xf32>
    %c0_359 = arith.constant 0 : index
    %c0_360 = arith.constant 0 : index
    %409 = vector.load %arg10[%c0_359, %c0_360] : memref<16x256xf32, #tpu.memory_space<vmem>>, vector<16x256xf32>
    tpu.vector_store %arg10[%c0_359, %c0_360], %408 {strides = array<i32>} : memref<16x256xf32, #tpu.memory_space<vmem>>, vector<16x256xf32>,
    %c0_361 = arith.constant 0 : index
    %c0_362 = arith.constant 0 : index
    %410 = vector.load %arg10[%c0_361, %c0_362] : memref<16x256xf32, #tpu.memory_space<vmem>>, vector<16x256xf32>
    %c0_363 = arith.constant 0 : index
    %c0_364 = arith.constant 0 : index
    %411 = vector.load %arg6[%c0_363, %c0_364] : memref<16x1xf32, #tpu.memory_space<vmem>>, vector<16x1xf32>
    %412 = vector.broadcast %411 : vector<16x1xf32> to vector<16x256xf32>
    %413 = arith.addf %410, %412 : vector<16x256xf32>
    %414 = arith.addf %413, %5 : vector<16x256xf32>
    %cst_365 = arith.constant 0.000000e+00 : f32
    %415 = vector.broadcast %cst_365 : f32 to vector<16x256xf32>
    %416 = arith.maximumf %414, %415 : vector<16x256xf32>
    %c0_366 = arith.constant 0 : index
    %c0_367 = arith.constant 0 : index
    %c0_368 = arith.constant 0 : index
    %417 = vector.load %arg7[%c0_366, %c0_367, %c0_368] : memref<1x16x256xf32, #tpu.memory_space<vmem>>, vector<1x16x256xf32>
    %418 = vector.shape_cast %417 : vector<1x16x256xf32> to vector<16x256xf32>
    %419 = vector.shape_cast %416 : vector<16x256xf32> to vector<1x16x256xf32>
    tpu.vector_store %arg7[%c0_366, %c0_367, %c0_368], %419 {strides = array<i32>} : memref<1x16x256xf32, #tpu.memory_space<vmem>>, vector<1x16x256xf32>,
    return
  }
  func.func @transform_0(%arg0: i32) -> (i32, i32, i32) {
    %c0_i32 = arith.constant 0 : i32
    %c0_i32_0 = arith.constant 0 : i32
    %c0_i32_1 = arith.constant 0 : i32
    return %arg0, %c0_i32, %c0_i32_0 : i32, i32, i32
  }
  func.func @transform_1(%arg0: i32) -> (i32, i32) {
    %c0_i32 = arith.constant 0 : i32
    %c0_i32_0 = arith.constant 0 : i32
    %c0_i32_1 = arith.constant 0 : i32
    return %c0_i32, %c0_i32_0 : i32, i32
  }
  func.func @transform_2(%arg0: i32) -> (i32, i32) {
    %c0_i32 = arith.constant 0 : i32
    %c0_i32_0 = arith.constant 0 : i32
    %c0_i32_1 = arith.constant 0 : i32
    return %c0_i32, %c0_i32_0 : i32, i32
  }
  func.func @transform_3(%arg0: i32) -> (i32, i32) {
    %c0_i32 = arith.constant 0 : i32
    %c0_i32_0 = arith.constant 0 : i32
    %c0_i32_1 = arith.constant 0 : i32
    return %c0_i32, %c0_i32_0 : i32, i32
  }
  func.func @transform_4(%arg0: i32) -> (i32, i32) {
    %c0_i32 = arith.constant 0 : i32
    %c0_i32_0 = arith.constant 0 : i32
    %c0_i32_1 = arith.constant 0 : i32
    return %c0_i32, %c0_i32_0 : i32, i32
  }
  func.func @transform_5(%arg0: i32) -> (i32, i32) {
    %c0_i32 = arith.constant 0 : i32
    %c0_i32_0 = arith.constant 0 : i32
    %c0_i32_1 = arith.constant 0 : i32
    return %c0_i32, %c0_i32_0 : i32, i32
  }
  func.func @transform_6(%arg0: i32) -> (i32, i32, i32) {
    %c0_i32 = arith.constant 0 : i32
    %c0_i32_0 = arith.constant 0 : i32
    %c0_i32_1 = arith.constant 0 : i32
    return %arg0, %c0_i32, %c0_i32_0 : i32, i32, i32
  }
}

</mosaic_0001>

<llo_original>
// kernel: tpu_custom_call.1
$region0: #{tpu_custom_call.1}
  #allocation0 [shape = 'u32[]', space=smem, size = 0x4, offset = 0x4, fixed_abs, tag = 'smem constant byte address 0x4 - core index']
  #allocation1 [shape = 'u32[144,128]{1,0:T(1,128)}', space=vmem, size = 0x12000, scoped, tag = 'internal scratch']
  #allocation2 [shape = 'f32[16,512]{1,0:T(8,128)}', space=vmem, size = 0x8000, scoped, tag = 'scratch operand']
  #allocation3 [shape = 'f32[2,256,256]{2,1,0:T(8,128)}', space=vmem, size = 0x80000, scoped, tag = 'scratch operand']
  #allocation4 [shape = 'f32[16,256]{1,0:T(8,128)}', space=vmem, size = 0x4000, scoped, tag = 'scratch operand']
  %s0 = inlined_call_operand.hbm [shape: f32[2,16,256], index: 0, kind: input, shape index: {}]
  %s1 = inlined_call_operand.hbm [shape: f32[27,256], index: 1, kind: input, shape index: {}]
  %s2 = inlined_call_operand.hbm [shape: f32[16,432], index: 2, kind: input, shape index: {}]
  %s3 = inlined_call_operand.vmem [shape: f32[16,1], index: 3, kind: input, shape index: {}]
  %s4 = inlined_call_operand.hbm [shape: f32[16,432], index: 4, kind: input, shape index: {}]
  %s5 = inlined_call_operand.vmem [shape: f32[16,1], index: 5, kind: input, shape index: {}]
  %s6 = inlined_call_operand.hbm [shape: f32[2,16,256], index: 6, kind: output, shape index: {}]
  %s7 = sld [smem:[#allocation0]]
  $region73: #{tpu_custom_call.1} parent=0
    _
  %s9 = ssub.s32 1, %s7
  %s10 = scalar_select 0, %s9, %s7
  $region1: #{tpu_custom_call.1} parent=0
    #allocation5 [shape = 'u8[32768]{0}', space=vmem, size = 0x8000, scoped, tag = 'input window, operand 0']
    #allocation6 [shape = 's32[2]{0}', space=sflag, size = 0x8, scoped, tag = 'scoped memory for tpu_custom_call.1']
    #allocation7 [shape = 's32[2]{0}', space=sflag, size = 0x8, scoped, tag = 'scoped memory for tpu_custom_call.1']
    #allocation8 [shape = 'u8[32768]{0}', space=vmem, size = 0x8000, scoped, tag = 'input window, operand 1, single buffered']
    #allocation9 [shape = 's32[1]{0}', space=sflag, size = 0x4, scoped, tag = 'scoped memory for tpu_custom_call.1']
    #allocation10 [shape = 'u8[32768]{0}', space=vmem, size = 0x8000, scoped, tag = 'input window, operand 2, single buffered']
    #allocation11 [shape = 'u8[32768]{0}', space=vmem, size = 0x8000, scoped, tag = 'input window, operand 4, single buffered']
    #allocation12 [shape = 's32[1]{0}', space=sflag, size = 0x4, scoped, tag = 'scoped memory for tpu_custom_call.1']
    #allocation13 [shape = 'u8[32768]{0}', space=vmem, size = 0x8000, scoped, tag = 'output window, operand 0']
    %11 = vsyncpa [#allocation6], 0
    %s12 = scalar_lea.sflag [#allocation6], 1
    %13 = vsyncpa %s12, 0
    %14 = vsyncpa [#allocation9], 0
    %15 = vsyncpa [#allocation12], 0
    %16 = vsyncpa [#allocation7], 0
    %s17 = scalar_lea.sflag [#allocation7], 1
    %18 = vsyncpa %s17, 0
    loop: start=0, step=1, limit=4
    $region2: #{tpu_custom_call.1} parent=1 // loop_pre_header
      _
    $region3: #{tpu_custom_call.1} parent=1 // loop_header
      %s20 = sphi 0, %s24
      %p21 = scmp.ge.s32.totalorder %s20, 4
      %s30 = sphi 0, %s32
      %s33 = sphi 0, %s30
      %s34 = sphi 0, %s33
      %s50 = sphi 0, %s34
      %s54 = sphi 0, %s54
      %s56 = sphi 0, %s54
      %s57 = sphi 0, %s56
      %s71 = sphi 0, %s57
      %s75 = sphi 0, %s75
      %s77 = sphi 0, %s75
      %s78 = sphi 0, %s77
      %s92 = sphi 0, %s78
      %s96 = sphi 0, %s96
      %s98 = sphi 0, %s96
      %s99 = sphi 0, %s98
      %s113 = sphi 0, %s99
      %s117 = sphi 0, %s117
      %s119 = sphi 0, %s117
      %s120 = sphi 0, %s119
      %s134 = sphi 0, %s120
      %s138 = sphi 0, %s138
      %s140 = sphi 0, %s138
      %s141 = sphi 0, %s140
      %s155 = sphi 0, %s141
      %s161 = sphi 0, %s163
      %s164 = sphi 0, %s161
      %s165 = sphi 0, %s164
      %s181 = sphi 0, %s165
    $region4: #{tpu_custom_call.1} parent=1 // loop_header_branch
      %23 = sbr.rel (%p21) target = $region8
    $region5: #{tpu_custom_call.1} parent=1 // loop_body
      %s25 = ssub.s32 %s20, 1
      %s26 = ssub.s32 %s20, 2
      %s27 = sadd.s32 %s20, 1
      %s28 = ssub.s32 %s20, %s27
      %p29 = scmp.eq.s32.totalorder %s28, 0
      %s31 = sadd.s32 %s30, 1
      %s32 = scalar_select %p29, %s30, %s31
      %p35 = pneg %p29
      %p36 = scmp.eq.s32.totalorder %s20, 1
      %p37 = por %p35, %p36
      %p38 = scmp.ne.s32.totalorder %s30, %s33
      %p39 = scmp.eq.s32.totalorder %s20, 0
      %p40 = por %p38, %p39
      %p41 = scmp.ne.s32.totalorder %s30, %s33
      %p42 = scmp.eq.s32.totalorder %s25, 1
      %p43 = por %p41, %p42
      %p44 = scmp.ne.s32.totalorder %s33, %s34
      %p45 = scmp.eq.s32.totalorder %s25, 0
      %p46 = por %p44, %p45
      %p47 = scmp.ne.s32.totalorder %s33, %s34
      %p48 = scmp.eq.s32.totalorder %s26, 1
      %p49 = por %p47, %p48
      %p51 = scmp.ne.s32.totalorder %s34, %s50
      %p52 = scmp.eq.s32.totalorder %s26, 0
      %p53 = por %p51, %p52
      %s55 = sadd.s32 %s54, 1
      %p58 = scmp.eq.s32.totalorder %s20, 1
      %p59 = scmp.ne.s32.totalorder %s54, %s56
      %p60 = scmp.eq.s32.totalorder %s20, 0
      %p61 = por %p59, %p60
      %p62 = scmp.ne.s32.totalorder %s54, %s56
      %p63 = scmp.eq.s32.totalorder %s25, 1
      %p64 = por %p62, %p63
      %p65 = scmp.ne.s32.totalorder %s56, %s57
      %p66 = scmp.eq.s32.totalorder %s25, 0
      %p67 = por %p65, %p66
      %p68 = scmp.ne.s32.totalorder %s56, %s57
      %p69 = scmp.eq.s32.totalorder %s26, 1
      %p70 = por %p68, %p69
      %p72 = scmp.ne.s32.totalorder %s57, %s71
      %p73 = scmp.eq.s32.totalorder %s26, 0
      %p74 = por %p72, %p73
      %s76 = sadd.s32 %s75, 1
      %p79 = scmp.eq.s32.totalorder %s20, 1
      %p80 = scmp.ne.s32.totalorder %s75, %s77
      %p81 = scmp.eq.s32.totalorder %s20, 0
      %p82 = por %p80, %p81
      %p83 = scmp.ne.s32.totalorder %s75, %s77
      %p84 = scmp.eq.s32.totalorder %s25, 1
      %p85 = por %p83, %p84
      %p86 = scmp.ne.s32.totalorder %s77, %s78
      %p87 = scmp.eq.s32.totalorder %s25, 0
      %p88 = por %p86, %p87
      %p89 = scmp.ne.s32.totalorder %s77, %s78
      %p90 = scmp.eq.s32.totalorder %s26, 1
      %p91 = por %p89, %p90
      %p93 = scmp.ne.s32.totalorder %s78, %s92
      %p94 = scmp.eq.s32.totalorder %s26, 0
      %p95 = por %p93, %p94
      %s97 = sadd.s32 %s96, 1
      %p100 = scmp.eq.s32.totalorder %s20, 1
      %p101 = scmp.ne.s32.totalorder %s96, %s98
      %p102 = scmp.eq.s32.totalorder %s20, 0
      %p103 = por %p101, %p102
      %p104 = scmp.ne.s32.totalorder %s96, %s98
      %p105 = scmp.eq.s32.totalorder %s25, 1
      %p106 = por %p104, %p105
      %p107 = scmp.ne.s32.totalorder %s98, %s99
      %p108 = scmp.eq.s32.totalorder %s25, 0
      %p109 = por %p107, %p108
      %p110 = scmp.ne.s32.totalorder %s98, %s99
      %p111 = scmp.eq.s32.totalorder %s26, 1
      %p112 = por %p110, %p111
      %p114 = scmp.ne.s32.totalorder %s99, %s113
      %p115 = scmp.eq.s32.totalorder %s26, 0
      %p116 = por %p114, %p115
      %s118 = sadd.s32 %s117, 1
      %p121 = scmp.eq.s32.totalorder %s20, 1
      %p122 = scmp.ne.s32.totalorder %s117, %s119
      %p123 = scmp.eq.s32.totalorder %s20, 0
      %p124 = por %p122, %p123
      %p125 = scmp.ne.s32.totalorder %s117, %s119
      %p126 = scmp.eq.s32.totalorder %s25, 1
      %p127 = por %p125, %p126
      %p128 = scmp.ne.s32.totalorder %s119, %s120
      %p129 = scmp.eq.s32.totalorder %s25, 0
      %p130 = por %p128, %p129
      %p131 = scmp.ne.s32.totalorder %s119, %s120
      %p132 = scmp.eq.s32.totalorder %s26, 1
      %p133 = por %p131, %p132
      %p135 = scmp.ne.s32.totalorder %s120, %s134
      %p136 = scmp.eq.s32.totalorder %s26, 0
      %p137 = por %p135, %p136
      %s139 = sadd.s32 %s138, 1
      %p142 = scmp.eq.s32.totalorder %s20, 1
      %p143 = scmp.ne.s32.totalorder %s138, %s140
      %p144 = scmp.eq.s32.totalorder %s20, 0
      %p145 = por %p143, %p144
      %p146 = scmp.ne.s32.totalorder %s138, %s140
      %p147 = scmp.eq.s32.totalorder %s25, 1
      %p148 = por %p146, %p147
      %p149 = scmp.ne.s32.totalorder %s140, %s141
      %p150 = scmp.eq.s32.totalorder %s25, 0
      %p151 = por %p149, %p150
      %p152 = scmp.ne.s32.totalorder %s140, %s141
      %p153 = scmp.eq.s32.totalorder %s26, 1
      %p154 = por %p152, %p153
      %p156 = scmp.ne.s32.totalorder %s141, %s155
      %p157 = scmp.eq.s32.totalorder %s26, 0
      %p158 = por %p156, %p157
      %s159 = ssub.s32 %s20, %s27
      %p160 = scmp.eq.s32.totalorder %s159, 0
      %s162 = sadd.s32 %s161, 1
      %s163 = scalar_select %p160, %s161, %s162
      %p166 = pneg %p160
      %p167 = scmp.eq.s32.totalorder %s20, 1
      %p168 = por %p166, %p167
      %p169 = scmp.ne.s32.totalorder %s161, %s164
      %p170 = scmp.eq.s32.totalorder %s20, 0
      %p171 = por %p169, %p170
      %p172 = scmp.ne.s32.totalorder %s161, %s164
      %p173 = scmp.eq.s32.totalorder %s25, 1
      %p174 = por %p172, %p173
      %p175 = scmp.ne.s32.totalorder %s164, %s165
      %p176 = scmp.eq.s32.totalorder %s25, 0
      %p177 = por %p175, %p176
      %p178 = scmp.ne.s32.totalorder %s164, %s165
      %p179 = scmp.eq.s32.totalorder %s26, 1
      %p180 = por %p178, %p179
      %p182 = scmp.ne.s32.totalorder %s165, %s181
      %p183 = scmp.eq.s32.totalorder %s26, 0
      %p184 = por %p182, %p183
      %p185 = scmp.le.s32.totalorder 1, %s20
      %p186 = scmp.lt.s32.totalorder %s20, 3
      %p187 = pnand %p185, %p186
      %p188 = pneg %p187
      // Predicated region
      $region9: #{tpu_custom_call.1} parent=5 // pred_check
        _
      $region10: #{tpu_custom_call.1} parent=5 // pred_check_branch
        %190 = sbr.rel (%p187) target = $region12
      $region11: #{tpu_custom_call.1} parent=5 // pred_region
        %s191 = ssub.s32 %s20, 1
        // Predicated region
        $region13: #{tpu_custom_call.1} parent=11 // pred_check
          %p192 = pneg %p67
        $region14: #{tpu_custom_call.1} parent=11 // pred_check_branch
          %194 = sbr.rel (%p192) target = $region16
        $region15: #{tpu_custom_call.1} parent=11 // pred_region
          %s196 = ssub.s32 1024, 1024
          %197 = vsyncadd [#allocation9], %s196
          %s198 = sshll.u32 [#allocation8], 4
          %s199 = int_to_ptr.vmem [resolvable:$true] %s198
          %204 = dma.hbm_to_vmem [thread:$0]  %s1, 1024, %s199, [#allocation9], 256, 256, 16
        $region16: #{tpu_custom_call.1} parent=11 // pred_fallthru
          _
        // Predicated region
        $region17: #{tpu_custom_call.1} parent=11 // pred_check
          %p205 = pneg %p88
        $region18: #{tpu_custom_call.1} parent=11 // pred_check_branch
          %207 = sbr.rel (%p205) target = $region20
        $region19: #{tpu_custom_call.1} parent=11 // pred_region
          %s209 = ssub.s32 1024, 1024
          %210 = vsyncadd [#allocation9], %s209
          %s211 = sshll.u32 [#allocation10], 4
          %s212 = int_to_ptr.vmem [resolvable:$true] %s211
          %217 = dma.hbm_to_vmem [thread:$0]  %s2, 1024, %s212, [#allocation9], 512, 512, 32
        $region20: #{tpu_custom_call.1} parent=11 // pred_fallthru
          _
        // Predicated region
        $region21: #{tpu_custom_call.1} parent=11 // pred_check
          %p218 = pneg %p109
        $region22: #{tpu_custom_call.1} parent=11 // pred_check_branch
          %220 = sbr.rel (%p218) target = $region24
        $region23: #{tpu_custom_call.1} parent=11 // pred_region
          _
        $region24: #{tpu_custom_call.1} parent=11 // pred_fallthru
          _
        // Predicated region
        $region25: #{tpu_custom_call.1} parent=11 // pred_check
          %p221 = pneg %p130
        $region26: #{tpu_custom_call.1} parent=11 // pred_check_branch
          %223 = sbr.rel (%p221) target = $region28
        $region27: #{tpu_custom_call.1} parent=11 // pred_region
          %s225 = ssub.s32 1024, 1024
          %226 = vsyncadd [#allocation12], %s225
          %s227 = sshll.u32 [#allocation11], 4
          %s228 = int_to_ptr.vmem [resolvable:$true] %s227
          %233 = dma.hbm_to_vmem [thread:$0]  %s4, 1024, %s228, [#allocation12], 512, 512, 32
        $region28: #{tpu_custom_call.1} parent=11 // pred_fallthru
          _
        // Predicated region
        $region29: #{tpu_custom_call.1} parent=11 // pred_check
          %p234 = pneg %p151
        $region30: #{tpu_custom_call.1} parent=11 // pred_check_branch
          %236 = sbr.rel (%p234) target = $region32
        $region31: #{tpu_custom_call.1} parent=11 // pred_region
          _
        $region32: #{tpu_custom_call.1} parent=11 // pred_fallthru
          _
      $region12: #{tpu_custom_call.1} parent=5 // pred_fallthru
        _
      %p237 = scmp.lt.s32.totalorder %s20, 2
      // Predicated region
      $region33: #{tpu_custom_call.1} parent=5 // pred_check
        %p238 = pneg %p237
      $region34: #{tpu_custom_call.1} parent=5 // pred_check_branch
        %240 = sbr.rel (%p238) target = $region36
      $region35: #{tpu_custom_call.1} parent=5 // pred_region
        // Predicated region
        $region37: #{tpu_custom_call.1} parent=35 // pred_check
          %p241 = pneg %p40
        $region38: #{tpu_custom_call.1} parent=35 // pred_check_branch
          %243 = sbr.rel (%p241) target = $region40
        $region39: #{tpu_custom_call.1} parent=35 // pred_region
          %s244 = sand.u32 %s30, 1
          %s245 = scalar_lea.sflag [#allocation6], %s244
          %s246 = sand.u32 %s30, 1
          %s247 = smul.addr %s246, 32
          %s248 = scalar_lea.vmem [#allocation5], %s247
          %s250 = ssub.s32 512, 512
          %251 = vsyncadd %s245, %s250
          %s252 = smul.addr %s20, 4
          %s253 = smul.addr %s252, 128
          %s254 = scalar_lea.hbm %s0, %s253
          %s255 = sshll.u32 %s248, 4
          %s256 = int_to_ptr.vmem [resolvable:$true] %s255
          %261 = dma.hbm_to_vmem [thread:$0]  %s254, 512, %s256, %s245, 256, 256, 16
        $region40: #{tpu_custom_call.1} parent=35 // pred_fallthru
          _
      $region36: #{tpu_custom_call.1} parent=5 // pred_fallthru
        _
      %p262 = scmp.le.s32.totalorder 1, %s20
      %p263 = scmp.lt.s32.totalorder %s20, 3
      %p264 = pnand %p262, %p263
      %p265 = pneg %p264
      // Predicated region
      $region41: #{tpu_custom_call.1} parent=5 // pred_check
        _
      $region42: #{tpu_custom_call.1} parent=5 // pred_check_branch
        %267 = sbr.rel (%p264) target = $region44
      $region43: #{tpu_custom_call.1} parent=5 // pred_region
        %s268 = ssub.s32 %s20, 1
        %s269 = sand.u32 %s33, 1
        %s270 = scalar_lea.sflag [#allocation6], %s269
        %s271 = sand.u32 %s33, 1
        %s272 = smul.addr %s271, 32
        %s273 = scalar_lea.vmem [#allocation5], %s272
        // Predicated region
        $region45: #{tpu_custom_call.1} parent=43 // pred_check
          %p274 = pneg %p46
        $region46: #{tpu_custom_call.1} parent=43 // pred_check_branch
          %276 = sbr.rel (%p274) target = $region48
        $region47: #{tpu_custom_call.1} parent=43 // pred_region
          %277 = dma.done %s270, 512
        $region48: #{tpu_custom_call.1} parent=43 // pred_fallthru
          _
        // Predicated region
        $region49: #{tpu_custom_call.1} parent=43 // pred_check
          %p278 = pneg %p67
        $region50: #{tpu_custom_call.1} parent=43 // pred_check_branch
          %280 = sbr.rel (%p278) target = $region52
        $region51: #{tpu_custom_call.1} parent=43 // pred_region
          %281 = dma.done [#allocation9], 1024
        $region52: #{tpu_custom_call.1} parent=43 // pred_fallthru
          _
        // Predicated region
        $region53: #{tpu_custom_call.1} parent=43 // pred_check
          %p282 = pneg %p88
        $region54: #{tpu_custom_call.1} parent=43 // pred_check_branch
          %284 = sbr.rel (%p282) target = $region56
        $region55: #{tpu_custom_call.1} parent=43 // pred_region
          %285 = dma.done [#allocation9], 1024
        $region56: #{tpu_custom_call.1} parent=43 // pred_fallthru
          _
        // Predicated region
        $region57: #{tpu_custom_call.1} parent=43 // pred_check
          %p286 = pneg %p130
        $region58: #{tpu_custom_call.1} parent=43 // pred_check_branch
          %288 = sbr.rel (%p286) target = $region60
        $region59: #{tpu_custom_call.1} parent=43 // pred_region
          %289 = dma.done [#allocation12], 1024
        $region60: #{tpu_custom_call.1} parent=43 // pred_fallthru
          _
        %s290 = sand.u32 %s33, 1
        %s291 = scalar_lea.sflag [#allocation6], %s290
        %s292 = sand.u32 %s33, 1
        %s293 = smul.addr %s292, 32
        %s294 = scalar_lea.vmem [#allocation5], %s293
        %p295 = pneg %p46
        %p296 = pneg %p43
        %p297 = pneg %p67
        %p298 = pneg %p64
        %p299 = pneg %p88
        %p300 = pneg %p85
        %p301 = pneg %p109
        %p302 = pneg %p106
        %p303 = pneg %p130
        %p304 = pneg %p127
        %p305 = pneg %p151
        %p306 = pneg %p148
        %p307 = pneg %p177
        %p308 = pneg %p174
        %s309 = sand.u32 %s164, 1
        %s310 = scalar_lea.sflag [#allocation7], %s309
        %s311 = sand.u32 %s164, 1
        %s312 = smul.addr %s311, 32
        %s313 = scalar_lea.vmem [#allocation13], %s312
        %314 = vst [vmem:[#allocation2] sm:$0xff] 0.0
        %315 = vst [vmem:[#allocation2 + $0x20] sm:$0xff] 0.0
        %316 = vst [vmem:[#allocation2 + $0x18] sm:$0xff] 0.0
        %317 = vst [vmem:[#allocation2 + $0x38] sm:$0xff] 0.0
        %v318 = vld [vmem:[%s273] sm:$0xff]
        %v319 = vld [vmem:[%s273 + $0x8] sm:$0xff]
        %v320 = vld [vmem:[%s273 + $0x10] sm:$0xff]
        %v321 = vld [vmem:[%s273 + $0x18] sm:$0xff]
        %322 = vst [vmem:[#allocation2 + $0x8] sm:$0xff] %v318
        %323 = vst [vmem:[#allocation2 + $0x10] sm:$0xff] %v319
        %324 = vst [vmem:[#allocation2 + $0x28] sm:$0xff] %v320
        %325 = vst [vmem:[#allocation2 + $0x30] sm:$0xff] %v321
        %v326 = vld [vmem:[#allocation2] sm:$0xff]
        %v327 = vld [vmem:[#allocation2 + $0x8] sm:$0xff]
        %v328 = vld [vmem:[#allocation2 + $0x10] sm:$0xff]
        %v329 = vld [vmem:[#allocation2 + $0x20] sm:$0xff]
        %v330 = vld [vmem:[#allocation2 + $0x28] sm:$0xff]
        %v331 = vld [vmem:[#allocation2 + $0x30] sm:$0xff]
        %v332 = vld [vmem:[#allocation8] ss:$8 sm:$0x3]
        %v334 = vlaneseq
        %v335 = vshrl.u32 %v334, 7
        %v336 = vsub.s32 0, %v335
        %v337 = vrot.slane %v332, %v336
        %v338 = vlaneseq
        %v339 = vshrl.u32 %v338, 7
        %v340 = vsub.s32 1, %v339
        %v341 = vrot.slane %v332, %v340
        %342 = vrot.lane.b32.xlu0 %v337, 55
        %v343 = vpop.permute.xlu0 %342
        %344 = vrot.lane.b32.xlu0 %v341, 55
        %v345 = vpop.permute.xlu0 %344
        %vm346 = vcmask 449536
        %v347 = vsel %vm346, %v343, %v345
        %v351 = vmul.f32 %v326, %v343
        %v352 = vmul.f32 %v327, %v347
        %v353 = vmul.f32 %v328, %v345
        %v354 = vmul.f32 %v329, %v343
        %v355 = vmul.f32 %v330, %v347
        %v356 = vmul.f32 %v331, %v345
        %363 = vrot.lane.b32.xlu0 %v351, 73
        %v364 = vpop.permute.xlu0 %363
        %365 = vrot.lane.b32.xlu0 %v352, 73
        %v366 = vpop.permute.xlu0 %365
        %367 = vrot.lane.b32.xlu0 %v353, 73
        %v368 = vpop.permute.xlu0 %367
        %369 = vrot.lane.b32.xlu0 %v354, 73
        %v370 = vpop.permute.xlu0 %369
        %371 = vrot.lane.b32.xlu0 %v355, 73
        %v372 = vpop.permute.xlu0 %371
        %373 = vrot.lane.b32.xlu0 %v356, 73
        %v374 = vpop.permute.xlu0 %373
        %vm375 = vcmask 596992
        %v376 = vsel %vm375, %v364, %v366
        %v377 = vsel %vm375, %v366, %v368
        %v378 = vsel %vm375, %v370, %v372
        %v379 = vsel %vm375, %v372, %v374
        %384 = vst [vmem:[#allocation3] sm:$0xff] %v376
        %385 = vst [vmem:[#allocation3 + $0x8] sm:$0xff] %v377
        %386 = vst [vmem:[#allocation3 + $0x10] sm:$0xff] %v378
        %387 = vst [vmem:[#allocation3 + $0x18] sm:$0xff] %v379
        %v388 = vld [vmem:[#allocation2] sm:$0xff]
        %v389 = vld [vmem:[#allocation2 + $0x8] sm:$0xff]
        %v390 = vld [vmem:[#allocation2 + $0x10] sm:$0xff]
        %v391 = vld [vmem:[#allocation2 + $0x20] sm:$0xff]
        %v392 = vld [vmem:[#allocation2 + $0x28] sm:$0xff]
        %v393 = vld [vmem:[#allocation2 + $0x30] sm:$0xff]
        %s394 = scalar_lea.vmem [#allocation8], 1
        %v395 = vld [vmem:[%s394] ss:$8 sm:$0x3]
        %v397 = vlaneseq
        %v398 = vshrl.u32 %v397, 7
        %v399 = vsub.s32 0, %v398
        %v400 = vrot.slane %v395, %v399
        %v401 = vlaneseq
        %v402 = vshrl.u32 %v401, 7
        %v403 = vsub.s32 1, %v402
        %v404 = vrot.slane %v395, %v403
        %405 = vrot.lane.b32.xlu0 %v400, 56
        %v406 = vpop.permute.xlu0 %405
        %407 = vrot.lane.b32.xlu0 %v404, 56
        %v408 = vpop.permute.xlu0 %407
        %vm409 = vcmask 457728
        %v410 = vsel %vm409, %v406, %v408
        %v414 = vmul.f32 %v388, %v406
        %v415 = vmul.f32 %v389, %v410
        %v416 = vmul.f32 %v390, %v408
        %v417 = vmul.f32 %v391, %v406
        %v418 = vmul.f32 %v392, %v410
        %v419 = vmul.f32 %v393, %v408
        %426 = vrot.lane.b32.xlu0 %v414, 72
        %v427 = vpop.permute.xlu0 %426
        %428 = vrot.lane.b32.xlu0 %v415, 72
        %v429 = vpop.permute.xlu0 %428
        %430 = vrot.lane.b32.xlu0 %v416, 72
        %v431 = vpop.permute.xlu0 %430
        %432 = vrot.lane.b32.xlu0 %v417, 72
        %v433 = vpop.permute.xlu0 %432
        %434 = vrot.lane.b32.xlu0 %v418, 72
        %v435 = vpop.permute.xlu0 %434
        %436 = vrot.lane.b32.xlu0 %v419, 72
        %v437 = vpop.permute.xlu0 %436
        %vm438 = vcmask 588800
        %v439 = vsel %vm438, %v427, %v429
        %v440 = vsel %vm438, %v429, %v431
        %v441 = vsel %vm438, %v433, %v435
        %v442 = vsel %vm438, %v435, %v437
        %447 = vst [vmem:[#allocation3 + $0x20] sm:$0xff] %v439
        %448 = vst [vmem:[#allocation3 + $0x28] sm:$0xff] %v440
        %449 = vst [vmem:[#allocation3 + $0x30] sm:$0xff] %v441
        %450 = vst [vmem:[#allocation3 + $0x38] sm:$0xff] %v442
        %v451 = vld [vmem:[#allocation2] sm:$0xff]
        %v452 = vld [vmem:[#allocation2 + $0x8] sm:$0xff]
        %v453 = vld [vmem:[#allocation2 + $0x10] sm:$0xff]
        %v454 = vld [vmem:[#allocation2 + $0x20] sm:$0xff]
        %v455 = vld [vmem:[#allocation2 + $0x28] sm:$0xff]
        %v456 = vld [vmem:[#allocation2 + $0x30] sm:$0xff]
        %s457 = scalar_lea.vmem [#allocation8], 2
        %v458 = vld [vmem:[%s457] ss:$8 sm:$0x3]
        %v460 = vlaneseq
        %v461 = vshrl.u32 %v460, 7
        %v462 = vsub.s32 0, %v461
        %v463 = vrot.slane %v458, %v462
        %v464 = vlaneseq
        %v465 = vshrl.u32 %v464, 7
        %v466 = vsub.s32 1, %v465
        %v467 = vrot.slane %v458, %v466
        %468 = vrot.lane.b32.xlu0 %v463, 57
        %v469 = vpop.permute.xlu0 %468
        %470 = vrot.lane.b32.xlu0 %v467, 57
        %v471 = vpop.permute.xlu0 %470
        %vm472 = vcmask 465920
        %v473 = vsel %vm472, %v469, %v471
        %v477 = vmul.f32 %v451, %v469
        %v478 = vmul.f32 %v452, %v473
        %v479 = vmul.f32 %v453, %v471
        %v480 = vmul.f32 %v454, %v469
        %v481 = vmul.f32 %v455, %v473
        %v482 = vmul.f32 %v456, %v471
        %489 = vrot.lane.b32.xlu0 %v477, 71
        %v490 = vpop.permute.xlu0 %489
        %491 = vrot.lane.b32.xlu0 %v478, 71
        %v492 = vpop.permute.xlu0 %491
        %493 = vrot.lane.b32.xlu0 %v479, 71
        %v494 = vpop.permute.xlu0 %493
        %495 = vrot.lane.b32.xlu0 %v480, 71
        %v496 = vpop.permute.xlu0 %495
        %497 = vrot.lane.b32.xlu0 %v481, 71
        %v498 = vpop.permute.xlu0 %497
        %499 = vrot.lane.b32.xlu0 %v482, 71
        %v500 = vpop.permute.xlu0 %499
        %vm501 = vcmask 580608
        %v502 = vsel %vm501, %v490, %v492
        %v503 = vsel %vm501, %v492, %v494
        %v504 = vsel %vm501, %v496, %v498
        %v505 = vsel %vm501, %v498, %v500
        %510 = vst [vmem:[#allocation3 + $0x40] sm:$0xff] %v502
        %511 = vst [vmem:[#allocation3 + $0x48] sm:$0xff] %v503
        %512 = vst [vmem:[#allocation3 + $0x50] sm:$0xff] %v504
        %513 = vst [vmem:[#allocation3 + $0x58] sm:$0xff] %v505
        %v514 = vld [vmem:[#allocation2] sm:$0xff]
        %v515 = vld [vmem:[#allocation2 + $0x8] sm:$0xff]
        %v516 = vld [vmem:[#allocation2 + $0x10] sm:$0xff]
        %v517 = vld [vmem:[#allocation2 + $0x20] sm:$0xff]
        %v518 = vld [vmem:[#allocation2 + $0x28] sm:$0xff]
        %v519 = vld [vmem:[#allocation2 + $0x30] sm:$0xff]
        %s520 = scalar_lea.vmem [#allocation8], 3
        %v521 = vld [vmem:[%s520] ss:$8 sm:$0x3]
        %v523 = vlaneseq
        %v524 = vshrl.u32 %v523, 7
        %v525 = vsub.s32 0, %v524
        %v526 = vrot.slane %v521, %v525
        %v527 = vlaneseq
        %v528 = vshrl.u32 %v527, 7
        %v529 = vsub.s32 1, %v528
        %v530 = vrot.slane %v521, %v529
        %531 = vrot.lane.b32.xlu0 %v526, 63
        %v532 = vpop.permute.xlu0 %531
        %533 = vrot.lane.b32.xlu0 %v530, 63
        %v534 = vpop.permute.xlu0 %533
        %vm535 = vcmask 515072
        %v536 = vsel %vm535, %v532, %v534
        %v540 = vmul.f32 %v514, %v532
        %v541 = vmul.f32 %v515, %v536
        %v542 = vmul.f32 %v516, %v534
        %v543 = vmul.f32 %v517, %v532
        %v544 = vmul.f32 %v518, %v536
        %v545 = vmul.f32 %v519, %v534
        %552 = vrot.lane.b32.xlu0 %v540, 65
        %v553 = vpop.permute.xlu0 %552
        %554 = vrot.lane.b32.xlu0 %v541, 65
        %v555 = vpop.permute.xlu0 %554
        %556 = vrot.lane.b32.xlu0 %v542, 65
        %v557 = vpop.permute.xlu0 %556
        %558 = vrot.lane.b32.xlu0 %v543, 65
        %v559 = vpop.permute.xlu0 %558
        %560 = vrot.lane.b32.xlu0 %v544, 65
        %v561 = vpop.permute.xlu0 %560
        %562 = vrot.lane.b32.xlu0 %v545, 65
        %v563 = vpop.permute.xlu0 %562
        %vm564 = vcmask 531456
        %v565 = vsel %vm564, %v553, %v555
        %v566 = vsel %vm564, %v555, %v557
        %v567 = vsel %vm564, %v559, %v561
        %v568 = vsel %vm564, %v561, %v563
        %573 = vst [vmem:[#allocation3 + $0x60] sm:$0xff] %v565
        %574 = vst [vmem:[#allocation3 + $0x68] sm:$0xff] %v566
        %575 = vst [vmem:[#allocation3 + $0x70] sm:$0xff] %v567
        %576 = vst [vmem:[#allocation3 + $0x78] sm:$0xff] %v568
        %v577 = vld [vmem:[#allocation2] sm:$0xff]
        %v578 = vld [vmem:[#allocation2 + $0x8] sm:$0xff]
        %v579 = vld [vmem:[#allocation2 + $0x10] sm:$0xff]
        %v580 = vld [vmem:[#allocation2 + $0x20] sm:$0xff]
        %v581 = vld [vmem:[#allocation2 + $0x28] sm:$0xff]
        %v582 = vld [vmem:[#allocation2 + $0x30] sm:$0xff]
        %s583 = scalar_lea.vmem [#allocation8], 4
        %v584 = vld [vmem:[%s583] ss:$8 sm:$0x3]
        %v586 = vlaneseq
        %v587 = vshrl.u32 %v586, 7
        %v588 = vsub.s32 0, %v587
        %v589 = vrot.slane %v584, %v588
        %v590 = vlaneseq
        %v591 = vshrl.u32 %v590, 7
        %v592 = vsub.s32 1, %v591
        %v593 = vrot.slane %v584, %v592
        %594 = vrot.lane.b32.xlu0 %v589, 64
        %v595 = vpop.permute.xlu0 %594
        %596 = vrot.lane.b32.xlu0 %v593, 64
        %v597 = vpop.permute.xlu0 %596
        %vm598 = vcmask 523264
        %v599 = vsel %vm598, %v595, %v597
        %v603 = vmul.f32 %v577, %v595
        %v604 = vmul.f32 %v578, %v599
        %v605 = vmul.f32 %v579, %v597
        %v606 = vmul.f32 %v580, %v595
        %v607 = vmul.f32 %v581, %v599
        %v608 = vmul.f32 %v582, %v597
        %615 = vrot.lane.b32.xlu0 %v603, 64
        %v616 = vpop.permute.xlu0 %615
        %617 = vrot.lane.b32.xlu0 %v604, 64
        %v618 = vpop.permute.xlu0 %617
        %619 = vrot.lane.b32.xlu0 %v605, 64
        %v620 = vpop.permute.xlu0 %619
        %621 = vrot.lane.b32.xlu0 %v606, 64
        %v622 = vpop.permute.xlu0 %621
        %623 = vrot.lane.b32.xlu0 %v607, 64
        %v624 = vpop.permute.xlu0 %623
        %625 = vrot.lane.b32.xlu0 %v608, 64
        %v626 = vpop.permute.xlu0 %625
        %v627 = vsel %vm598, %v616, %v618
        %v628 = vsel %vm598, %v618, %v620
        %v629 = vsel %vm598, %v622, %v624
        %v630 = vsel %vm598, %v624, %v626
        %635 = vst [vmem:[#allocation3 + $0x80] sm:$0xff] %v627
        %636 = vst [vmem:[#allocation3 + $0x88] sm:$0xff] %v628
        %637 = vst [vmem:[#allocation3 + $0x90] sm:$0xff] %v629
        %638 = vst [vmem:[#allocation3 + $0x98] sm:$0xff] %v630
        %v639 = vld [vmem:[#allocation2] sm:$0xff]
        %v640 = vld [vmem:[#allocation2 + $0x8] sm:$0xff]
        %v641 = vld [vmem:[#allocation2 + $0x10] sm:$0xff]
        %v642 = vld [vmem:[#allocation2 + $0x20] sm:$0xff]
        %v643 = vld [vmem:[#allocation2 + $0x28] sm:$0xff]
        %v644 = vld [vmem:[#allocation2 + $0x30] sm:$0xff]
        %s645 = scalar_lea.vmem [#allocation8], 5
        %v646 = vld [vmem:[%s645] ss:$8 sm:$0x3]
        %v648 = vlaneseq
        %v649 = vshrl.u32 %v648, 7
        %v650 = vsub.s32 0, %v649
        %v651 = vrot.slane %v646, %v650
        %v652 = vlaneseq
        %v653 = vshrl.u32 %v652, 7
        %v654 = vsub.s32 1, %v653
        %v655 = vrot.slane %v646, %v654
        %656 = vrot.lane.b32.xlu0 %v651, 65
        %v657 = vpop.permute.xlu0 %656
        %658 = vrot.lane.b32.xlu0 %v655, 65
        %v659 = vpop.permute.xlu0 %658
        %v660 = vsel %vm564, %v657, %v659
        %v664 = vmul.f32 %v639, %v657
        %v665 = vmul.f32 %v640, %v660
        %v666 = vmul.f32 %v641, %v659
        %v667 = vmul.f32 %v642, %v657
        %v668 = vmul.f32 %v643, %v660
        %v669 = vmul.f32 %v644, %v659
        %676 = vrot.lane.b32.xlu0 %v664, 63
        %v677 = vpop.permute.xlu0 %676
        %678 = vrot.lane.b32.xlu0 %v665, 63
        %v679 = vpop.permute.xlu0 %678
        %680 = vrot.lane.b32.xlu0 %v666, 63
        %v681 = vpop.permute.xlu0 %680
        %682 = vrot.lane.b32.xlu0 %v667, 63
        %v683 = vpop.permute.xlu0 %682
        %684 = vrot.lane.b32.xlu0 %v668, 63
        %v685 = vpop.permute.xlu0 %684
        %686 = vrot.lane.b32.xlu0 %v669, 63
        %v687 = vpop.permute.xlu0 %686
        %v688 = vsel %vm535, %v677, %v679
        %v689 = vsel %vm535, %v679, %v681
        %v690 = vsel %vm535, %v683, %v685
        %v691 = vsel %vm535, %v685, %v687
        %696 = vst [vmem:[#allocation3 + $0xa0] sm:$0xff] %v688
        %697 = vst [vmem:[#allocation3 + $0xa8] sm:$0xff] %v689
        %698 = vst [vmem:[#allocation3 + $0xb0] sm:$0xff] %v690
        %699 = vst [vmem:[#allocation3 + $0xb8] sm:$0xff] %v691
        %v700 = vld [vmem:[#allocation2] sm:$0xff]
        %v701 = vld [vmem:[#allocation2 + $0x8] sm:$0xff]
        %v702 = vld [vmem:[#allocation2 + $0x10] sm:$0xff]
        %v703 = vld [vmem:[#allocation2 + $0x20] sm:$0xff]
        %v704 = vld [vmem:[#allocation2 + $0x28] sm:$0xff]
        %v705 = vld [vmem:[#allocation2 + $0x30] sm:$0xff]
        %s706 = scalar_lea.vmem [#allocation8], 6
        %v707 = vld [vmem:[%s706] ss:$8 sm:$0x3]
        %v709 = vlaneseq
        %v710 = vshrl.u32 %v709, 7
        %v711 = vsub.s32 0, %v710
        %v712 = vrot.slane %v707, %v711
        %v713 = vlaneseq
        %v714 = vshrl.u32 %v713, 7
        %v715 = vsub.s32 1, %v714
        %v716 = vrot.slane %v707, %v715
        %717 = vrot.lane.b32.xlu0 %v712, 71
        %v718 = vpop.permute.xlu0 %717
        %719 = vrot.lane.b32.xlu0 %v716, 71
        %v720 = vpop.permute.xlu0 %719
        %v721 = vsel %vm501, %v718, %v720
        %v725 = vmul.f32 %v700, %v718
        %v726 = vmul.f32 %v701, %v721
        %v727 = vmul.f32 %v702, %v720
        %v728 = vmul.f32 %v703, %v718
        %v729 = vmul.f32 %v704, %v721
        %v730 = vmul.f32 %v705, %v720
        %737 = vrot.lane.b32.xlu0 %v725, 57
        %v738 = vpop.permute.xlu0 %737
        %739 = vrot.lane.b32.xlu0 %v726, 57
        %v740 = vpop.permute.xlu0 %739
        %741 = vrot.lane.b32.xlu0 %v727, 57
        %v742 = vpop.permute.xlu0 %741
        %743 = vrot.lane.b32.xlu0 %v728, 57
        %v744 = vpop.permute.xlu0 %743
        %745 = vrot.lane.b32.xlu0 %v729, 57
        %v746 = vpop.permute.xlu0 %745
        %747 = vrot.lane.b32.xlu0 %v730, 57
        %v748 = vpop.permute.xlu0 %747
        %v749 = vsel %vm472, %v738, %v740
        %v750 = vsel %vm472, %v740, %v742
        %v751 = vsel %vm472, %v744, %v746
        %v752 = vsel %vm472, %v746, %v748
        %757 = vst [vmem:[#allocation3 + $0xc0] sm:$0xff] %v749
        %758 = vst [vmem:[#allocation3 + $0xc8] sm:$0xff] %v750
        %759 = vst [vmem:[#allocation3 + $0xd0] sm:$0xff] %v751
        %760 = vst [vmem:[#allocation3 + $0xd8] sm:$0xff] %v752
        %v761 = vld [vmem:[#allocation2] sm:$0xff]
        %v762 = vld [vmem:[#allocation2 + $0x8] sm:$0xff]
        %v763 = vld [vmem:[#allocation2 + $0x10] sm:$0xff]
        %v764 = vld [vmem:[#allocation2 + $0x20] sm:$0xff]
        %v765 = vld [vmem:[#allocation2 + $0x28] sm:$0xff]
        %v766 = vld [vmem:[#allocation2 + $0x30] sm:$0xff]
        %s767 = scalar_lea.vmem [#allocation8], 7
        %v768 = vld [vmem:[%s767] ss:$8 sm:$0x3]
        %v770 = vlaneseq
        %v771 = vshrl.u32 %v770, 7
        %v772 = vsub.s32 0, %v771
        %v773 = vrot.slane %v768, %v772
        %v774 = vlaneseq
        %v775 = vshrl.u32 %v774, 7
        %v776 = vsub.s32 1, %v775
        %v777 = vrot.slane %v768, %v776
        %778 = vrot.lane.b32.xlu0 %v773, 72
        %v779 = vpop.permute.xlu0 %778
        %780 = vrot.lane.b32.xlu0 %v777, 72
        %v781 = vpop.permute.xlu0 %780
        %v782 = vsel %vm438, %v779, %v781
        %v786 = vmul.f32 %v761, %v779
        %v787 = vmul.f32 %v762, %v782
        %v788 = vmul.f32 %v763, %v781
        %v789 = vmul.f32 %v764, %v779
        %v790 = vmul.f32 %v765, %v782
        %v791 = vmul.f32 %v766, %v781
        %798 = vrot.lane.b32.xlu0 %v786, 56
        %v799 = vpop.permute.xlu0 %798
        %800 = vrot.lane.b32.xlu0 %v787, 56
        %v801 = vpop.permute.xlu0 %800
        %802 = vrot.lane.b32.xlu0 %v788, 56
        %v803 = vpop.permute.xlu0 %802
        %804 = vrot.lane.b32.xlu0 %v789, 56
        %v805 = vpop.permute.xlu0 %804
        %806 = vrot.lane.b32.xlu0 %v790, 56
        %v807 = vpop.permute.xlu0 %806
        %808 = vrot.lane.b32.xlu0 %v791, 56
        %v809 = vpop.permute.xlu0 %808
        %v810 = vsel %vm409, %v799, %v801
        %v811 = vsel %vm409, %v801, %v803
        %v812 = vsel %vm409, %v805, %v807
        %v813 = vsel %vm409, %v807, %v809
        %818 = vst [vmem:[#allocation3 + $0xe0] sm:$0xff] %v810
        %819 = vst [vmem:[#allocation3 + $0xe8] sm:$0xff] %v811
        %820 = vst [vmem:[#allocation3 + $0xf0] sm:$0xff] %v812
        %821 = vst [vmem:[#allocation3 + $0xf8] sm:$0xff] %v813
        %v822 = vld [vmem:[#allocation2] sm:$0xff]
        %v823 = vld [vmem:[#allocation2 + $0x8] sm:$0xff]
        %v824 = vld [vmem:[#allocation2 + $0x10] sm:$0xff]
        %v825 = vld [vmem:[#allocation2 + $0x20] sm:$0xff]
        %v826 = vld [vmem:[#allocation2 + $0x28] sm:$0xff]
        %v827 = vld [vmem:[#allocation2 + $0x30] sm:$0xff]
        %s828 = scalar_lea.vmem [#allocation8], 16
        %v829 = vld [vmem:[%s828] ss:$8 sm:$0x3]
        %v831 = vlaneseq
        %v832 = vshrl.u32 %v831, 7
        %v833 = vsub.s32 0, %v832
        %v834 = vrot.slane %v829, %v833
        %v835 = vlaneseq
        %v836 = vshrl.u32 %v835, 7
        %v837 = vsub.s32 1, %v836
        %v838 = vrot.slane %v829, %v837
        %839 = vrot.lane.b32.xlu0 %v834, 73
        %v840 = vpop.permute.xlu0 %839
        %841 = vrot.lane.b32.xlu0 %v838, 73
        %v842 = vpop.permute.xlu0 %841
        %v843 = vsel %vm375, %v840, %v842
        %v847 = vmul.f32 %v822, %v840
        %v848 = vmul.f32 %v823, %v843
        %v849 = vmul.f32 %v824, %v842
        %v850 = vmul.f32 %v825, %v840
        %v851 = vmul.f32 %v826, %v843
        %v852 = vmul.f32 %v827, %v842
        %859 = vrot.lane.b32.xlu0 %v847, 55
        %v860 = vpop.permute.xlu0 %859
        %861 = vrot.lane.b32.xlu0 %v848, 55
        %v862 = vpop.permute.xlu0 %861
        %863 = vrot.lane.b32.xlu0 %v849, 55
        %v864 = vpop.permute.xlu0 %863
        %865 = vrot.lane.b32.xlu0 %v850, 55
        %v866 = vpop.permute.xlu0 %865
        %867 = vrot.lane.b32.xlu0 %v851, 55
        %v868 = vpop.permute.xlu0 %867
        %869 = vrot.lane.b32.xlu0 %v852, 55
        %v870 = vpop.permute.xlu0 %869
        %v871 = vsel %vm346, %v860, %v862
        %v872 = vsel %vm346, %v862, %v864
        %v873 = vsel %vm346, %v866, %v868
        %v874 = vsel %vm346, %v868, %v870
        %879 = vst [vmem:[#allocation3 + $0x100] sm:$0xff] %v871
        %880 = vst [vmem:[#allocation3 + $0x108] sm:$0xff] %v872
        %881 = vst [vmem:[#allocation3 + $0x110] sm:$0xff] %v873
        %882 = vst [vmem:[#allocation3 + $0x118] sm:$0xff] %v874
        %v883 = vld [vmem:[#allocation2] sm:$0xff]
        %v884 = vld [vmem:[#allocation2 + $0x8] sm:$0xff]
        %v885 = vld [vmem:[#allocation2 + $0x10] sm:$0xff]
        %v886 = vld [vmem:[#allocation2 + $0x20] sm:$0xff]
        %v887 = vld [vmem:[#allocation2 + $0x28] sm:$0xff]
        %v888 = vld [vmem:[#allocation2 + $0x30] sm:$0xff]
        %s889 = scalar_lea.vmem [#allocation8], 17
        %v890 = vld [vmem:[%s889] ss:$8 sm:$0x3]
        %v892 = vlaneseq
        %v893 = vshrl.u32 %v892, 7
        %v894 = vsub.s32 0, %v893
        %v895 = vrot.slane %v890, %v894
        %v896 = vlaneseq
        %v897 = vshrl.u32 %v896, 7
        %v898 = vsub.s32 1, %v897
        %v899 = vrot.slane %v890, %v898
        %900 = vrot.lane.b32.xlu0 %v895, 119
        %v901 = vpop.permute.xlu0 %900
        %902 = vrot.lane.b32.xlu0 %v899, 119
        %v903 = vpop.permute.xlu0 %902
        %vm904 = vcmask 973824
        %v905 = vsel %vm904, %v901, %v903
        %v909 = vmul.f32 %v883, %v901
        %v910 = vmul.f32 %v884, %v905
        %v911 = vmul.f32 %v885, %v903
        %v912 = vmul.f32 %v886, %v901
        %v913 = vmul.f32 %v887, %v905
        %v914 = vmul.f32 %v888, %v903
        %921 = vrot.lane.b32.xlu0 %v909, 9
        %v922 = vpop.permute.xlu0 %921
        %923 = vrot.lane.b32.xlu0 %v910, 9
        %v924 = vpop.permute.xlu0 %923
        %925 = vrot.lane.b32.xlu0 %v911, 9
        %v926 = vpop.permute.xlu0 %925
        %927 = vrot.lane.b32.xlu0 %v912, 9
        %v928 = vpop.permute.xlu0 %927
        %929 = vrot.lane.b32.xlu0 %v913, 9
        %v930 = vpop.permute.xlu0 %929
        %931 = vrot.lane.b32.xlu0 %v914, 9
        %v932 = vpop.permute.xlu0 %931
        %vm933 = vcmask 72704
        %v934 = vsel %vm933, %v922, %v924
        %v935 = vsel %vm933, %v924, %v926
        %v936 = vsel %vm933, %v928, %v930
        %v937 = vsel %vm933, %v930, %v932
        %942 = vst [vmem:[#allocation3 + $0x120] sm:$0xff] %v934
        %943 = vst [vmem:[#allocation3 + $0x128] sm:$0xff] %v935
        %944 = vst [vmem:[#allocation3 + $0x130] sm:$0xff] %v936
        %945 = vst [vmem:[#allocation3 + $0x138] sm:$0xff] %v937
        %v946 = vld [vmem:[#allocation2] sm:$0xff]
        %v947 = vld [vmem:[#allocation2 + $0x8] sm:$0xff]
        %v948 = vld [vmem:[#allocation2 + $0x10] sm:$0xff]
        %v949 = vld [vmem:[#allocation2 + $0x20] sm:$0xff]
        %v950 = vld [vmem:[#allocation2 + $0x28] sm:$0xff]
        %v951 = vld [vmem:[#allocation2 + $0x30] sm:$0xff]
        %s952 = scalar_lea.vmem [#allocation8], 18
        %v953 = vld [vmem:[%s952] ss:$8 sm:$0x3]
        %v955 = vlaneseq
        %v956 = vshrl.u32 %v955, 7
        %v957 = vsub.s32 0, %v956
        %v958 = vrot.slane %v953, %v957
        %v959 = vlaneseq
        %v960 = vshrl.u32 %v959, 7
        %v961 = vsub.s32 1, %v960
        %v962 = vrot.slane %v953, %v961
        %963 = vrot.lane.b32.xlu0 %v958, 120
        %v964 = vpop.permute.xlu0 %963
        %965 = vrot.lane.b32.xlu0 %v962, 120
        %v966 = vpop.permute.xlu0 %965
        %vm967 = vcmask 982016
        %v968 = vsel %vm967, %v964, %v966
        %v972 = vmul.f32 %v946, %v964
        %v973 = vmul.f32 %v947, %v968
        %v974 = vmul.f32 %v948, %v966
        %v975 = vmul.f32 %v949, %v964
        %v976 = vmul.f32 %v950, %v968
        %v977 = vmul.f32 %v951, %v966
        %984 = vrot.lane.b32.xlu0 %v972, 8
        %v985 = vpop.permute.xlu0 %984
        %986 = vrot.lane.b32.xlu0 %v973, 8
        %v987 = vpop.permute.xlu0 %986
        %988 = vrot.lane.b32.xlu0 %v974, 8
        %v989 = vpop.permute.xlu0 %988
        %990 = vrot.lane.b32.xlu0 %v975, 8
        %v991 = vpop.permute.xlu0 %990
        %992 = vrot.lane.b32.xlu0 %v976, 8
        %v993 = vpop.permute.xlu0 %992
        %994 = vrot.lane.b32.xlu0 %v977, 8
        %v995 = vpop.permute.xlu0 %994
        %vm996 = vcmask 64512
        %v997 = vsel %vm996, %v985, %v987
        %v998 = vsel %vm996, %v987, %v989
        %v999 = vsel %vm996, %v991, %v993
        %v1000 = vsel %vm996, %v993, %v995
        %1005 = vst [vmem:[#allocation3 + $0x140] sm:$0xff] %v997
        %1006 = vst [vmem:[#allocation3 + $0x148] sm:$0xff] %v998
        %1007 = vst [vmem:[#allocation3 + $0x150] sm:$0xff] %v999
        %1008 = vst [vmem:[#allocation3 + $0x158] sm:$0xff] %v1000
        %v1009 = vld [vmem:[#allocation2] sm:$0xff]
        %v1010 = vld [vmem:[#allocation2 + $0x8] sm:$0xff]
        %v1011 = vld [vmem:[#allocation2 + $0x10] sm:$0xff]
        %v1012 = vld [vmem:[#allocation2 + $0x20] sm:$0xff]
        %v1013 = vld [vmem:[#allocation2 + $0x28] sm:$0xff]
        %v1014 = vld [vmem:[#allocation2 + $0x30] sm:$0xff]
        %s1015 = scalar_lea.vmem [#allocation8], 19
        %v1016 = vld [vmem:[%s1015] ss:$8 sm:$0x3]
        %v1018 = vlaneseq
        %v1019 = vshrl.u32 %v1018, 7
        %v1020 = vsub.s32 0, %v1019
        %v1021 = vrot.slane %v1016, %v1020
        %v1022 = vlaneseq
        %v1023 = vshrl.u32 %v1022, 7
        %v1024 = vsub.s32 1, %v1023
        %v1025 = vrot.slane %v1016, %v1024
        %1026 = vrot.lane.b32.xlu0 %v1021, 121
        %v1027 = vpop.permute.xlu0 %1026
        %1028 = vrot.lane.b32.xlu0 %v1025, 121
        %v1029 = vpop.permute.xlu0 %1028
        %vm1030 = vcmask 990208
        %v1031 = vsel %vm1030, %v1027, %v1029
        %v1035 = vmul.f32 %v1009, %v1027
        %v1036 = vmul.f32 %v1010, %v1031
        %v1037 = vmul.f32 %v1011, %v1029
        %v1038 = vmul.f32 %v1012, %v1027
        %v1039 = vmul.f32 %v1013, %v1031
        %v1040 = vmul.f32 %v1014, %v1029
        %1047 = vrot.lane.b32.xlu0 %v1035, 7
        %v1048 = vpop.permute.xlu0 %1047
        %1049 = vrot.lane.b32.xlu0 %v1036, 7
        %v1050 = vpop.permute.xlu0 %1049
        %1051 = vrot.lane.b32.xlu0 %v1037, 7
        %v1052 = vpop.permute.xlu0 %1051
        %1053 = vrot.lane.b32.xlu0 %v1038, 7
        %v1054 = vpop.permute.xlu0 %1053
        %1055 = vrot.lane.b32.xlu0 %v1039, 7
        %v1056 = vpop.permute.xlu0 %1055
        %1057 = vrot.lane.b32.xlu0 %v1040, 7
        %v1058 = vpop.permute.xlu0 %1057
        %vm1059 = vcmask 56320
        %v1060 = vsel %vm1059, %v1048, %v1050
        %v1061 = vsel %vm1059, %v1050, %v1052
        %v1062 = vsel %vm1059, %v1054, %v1056
        %v1063 = vsel %vm1059, %v1056, %v1058
        %1068 = vst [vmem:[#allocation3 + $0x160] sm:$0xff] %v1060
        %1069 = vst [vmem:[#allocation3 + $0x168] sm:$0xff] %v1061
        %1070 = vst [vmem:[#allocation3 + $0x170] sm:$0xff] %v1062
        %1071 = vst [vmem:[#allocation3 + $0x178] sm:$0xff] %v1063
        %v1072 = vld [vmem:[#allocation2] sm:$0xff]
        %v1073 = vld [vmem:[#allocation2 + $0x8] sm:$0xff]
        %v1074 = vld [vmem:[#allocation2 + $0x10] sm:$0xff]
        %v1075 = vld [vmem:[#allocation2 + $0x20] sm:$0xff]
        %v1076 = vld [vmem:[#allocation2 + $0x28] sm:$0xff]
        %v1077 = vld [vmem:[#allocation2 + $0x30] sm:$0xff]
        %s1078 = scalar_lea.vmem [#allocation8], 20
        %v1079 = vld [vmem:[%s1078] ss:$8 sm:$0x3]
        %v1081 = vlaneseq
        %v1082 = vshrl.u32 %v1081, 7
        %v1083 = vsub.s32 0, %v1082
        %v1084 = vrot.slane %v1079, %v1083
        %v1085 = vlaneseq
        %v1086 = vshrl.u32 %v1085, 7
        %v1087 = vsub.s32 1, %v1086
        %v1088 = vrot.slane %v1079, %v1087
        %1089 = vrot.lane.b32.xlu0 %v1084, 127
        %v1090 = vpop.permute.xlu0 %1089
        %1091 = vrot.lane.b32.xlu0 %v1088, 127
        %v1092 = vpop.permute.xlu0 %1091
        %vm1093 = vcmask 1039360
        %v1094 = vsel %vm1093, %v1090, %v1092
        %v1098 = vmul.f32 %v1072, %v1090
        %v1099 = vmul.f32 %v1073, %v1094
        %v1100 = vmul.f32 %v1074, %v1092
        %v1101 = vmul.f32 %v1075, %v1090
        %v1102 = vmul.f32 %v1076, %v1094
        %v1103 = vmul.f32 %v1077, %v1092
        %1110 = vrot.lane.b32.xlu0 %v1098, 1
        %v1111 = vpop.permute.xlu0 %1110
        %1112 = vrot.lane.b32.xlu0 %v1099, 1
        %v1113 = vpop.permute.xlu0 %1112
        %1114 = vrot.lane.b32.xlu0 %v1100, 1
        %v1115 = vpop.permute.xlu0 %1114
        %1116 = vrot.lane.b32.xlu0 %v1101, 1
        %v1117 = vpop.permute.xlu0 %1116
        %1118 = vrot.lane.b32.xlu0 %v1102, 1
        %v1119 = vpop.permute.xlu0 %1118
        %1120 = vrot.lane.b32.xlu0 %v1103, 1
        %v1121 = vpop.permute.xlu0 %1120
        %vm1122 = vcmask 7168
        %v1123 = vsel %vm1122, %v1111, %v1113
        %v1124 = vsel %vm1122, %v1113, %v1115
        %v1125 = vsel %vm1122, %v1117, %v1119
        %v1126 = vsel %vm1122, %v1119, %v1121
        %1131 = vst [vmem:[#allocation3 + $0x180] sm:$0xff] %v1123
        %1132 = vst [vmem:[#allocation3 + $0x188] sm:$0xff] %v1124
        %1133 = vst [vmem:[#allocation3 + $0x190] sm:$0xff] %v1125
        %1134 = vst [vmem:[#allocation3 + $0x198] sm:$0xff] %v1126
        %v1135 = vld [vmem:[#allocation2 + $0x8] sm:$0xff]
        %v1136 = vld [vmem:[#allocation2 + $0x10] sm:$0xff]
        %v1137 = vld [vmem:[#allocation2 + $0x28] sm:$0xff]
        %v1138 = vld [vmem:[#allocation2 + $0x30] sm:$0xff]
        %1139 = vst [vmem:[#allocation3 + $0x1a0] sm:$0xff] %v1135
        %1140 = vst [vmem:[#allocation3 + $0x1a8] sm:$0xff] %v1136
        %1141 = vst [vmem:[#allocation3 + $0x1b0] sm:$0xff] %v1137
        %1142 = vst [vmem:[#allocation3 + $0x1b8] sm:$0xff] %v1138
        %v1143 = vld [vmem:[#allocation2 + $0x8] sm:$0xff]
        %v1144 = vld [vmem:[#allocation2 + $0x10] sm:$0xff]
        %v1145 = vld [vmem:[#allocation2 + $0x18] sm:$0xff]
        %v1146 = vld [vmem:[#allocation2 + $0x28] sm:$0xff]
        %v1147 = vld [vmem:[#allocation2 + $0x30] sm:$0xff]
        %v1148 = vld [vmem:[#allocation2 + $0x38] sm:$0xff]
        %s1149 = scalar_lea.vmem [#allocation8], 22
        %v1150 = vld [vmem:[%s1149] ss:$8 sm:$0x3]
        %v1152 = vlaneseq
        %v1153 = vshrl.u32 %v1152, 7
        %v1154 = vsub.s32 0, %v1153
        %v1155 = vrot.slane %v1150, %v1154
        %v1156 = vlaneseq
        %v1157 = vshrl.u32 %v1156, 7
        %v1158 = vsub.s32 1, %v1157
        %v1159 = vrot.slane %v1150, %v1158
        %1160 = vrot.lane.b32.xlu0 %v1155, 1
        %v1161 = vpop.permute.xlu0 %1160
        %1162 = vrot.lane.b32.xlu0 %v1159, 1
        %v1163 = vpop.permute.xlu0 %1162
        %v1164 = vsel %vm1122, %v1161, %v1163
        %v1168 = vmul.f32 %v1143, %v1161
        %v1169 = vmul.f32 %v1144, %v1164
        %v1170 = vmul.f32 %v1145, %v1163
        %v1171 = vmul.f32 %v1146, %v1161
        %v1172 = vmul.f32 %v1147, %v1164
        %v1173 = vmul.f32 %v1148, %v1163
        %1180 = vrot.lane.b32.xlu0 %v1168, 127
        %v1181 = vpop.permute.xlu0 %1180
        %1182 = vrot.lane.b32.xlu0 %v1169, 127
        %v1183 = vpop.permute.xlu0 %1182
        %1184 = vrot.lane.b32.xlu0 %v1170, 127
        %v1185 = vpop.permute.xlu0 %1184
        %1186 = vrot.lane.b32.xlu0 %v1171, 127
        %v1187 = vpop.permute.xlu0 %1186
        %1188 = vrot.lane.b32.xlu0 %v1172, 127
        %v1189 = vpop.permute.xlu0 %1188
        %1190 = vrot.lane.b32.xlu0 %v1173, 127
        %v1191 = vpop.permute.xlu0 %1190
        %v1192 = vsel %vm1093, %v1181, %v1183
        %v1193 = vsel %vm1093, %v1183, %v1185
        %v1194 = vsel %vm1093, %v1187, %v1189
        %v1195 = vsel %vm1093, %v1189, %v1191
        %1200 = vst [vmem:[#allocation3 + $0x1c0] sm:$0xff] %v1192
        %1201 = vst [vmem:[#allocation3 + $0x1c8] sm:$0xff] %v1193
        %1202 = vst [vmem:[#allocation3 + $0x1d0] sm:$0xff] %v1194
        %1203 = vst [vmem:[#allocation3 + $0x1d8] sm:$0xff] %v1195
        %v1204 = vld [vmem:[#allocation2 + $0x8] sm:$0xff]
        %v1205 = vld [vmem:[#allocation2 + $0x10] sm:$0xff]
        %v1206 = vld [vmem:[#allocation2 + $0x18] sm:$0xff]
        %v1207 = vld [vmem:[#allocation2 + $0x28] sm:$0xff]
        %v1208 = vld [vmem:[#allocation2 + $0x30] sm:$0xff]
        %v1209 = vld [vmem:[#allocation2 + $0x38] sm:$0xff]
        %s1210 = scalar_lea.vmem [#allocation8], 23
        %v1211 = vld [vmem:[%s1210] ss:$8 sm:$0x3]
        %v1213 = vlaneseq
        %v1214 = vshrl.u32 %v1213, 7
        %v1215 = vsub.s32 0, %v1214
        %v1216 = vrot.slane %v1211, %v1215
        %v1217 = vlaneseq
        %v1218 = vshrl.u32 %v1217, 7
        %v1219 = vsub.s32 1, %v1218
        %v1220 = vrot.slane %v1211, %v1219
        %1221 = vrot.lane.b32.xlu0 %v1216, 7
        %v1222 = vpop.permute.xlu0 %1221
        %1223 = vrot.lane.b32.xlu0 %v1220, 7
        %v1224 = vpop.permute.xlu0 %1223
        %v1225 = vsel %vm1059, %v1222, %v1224
        %v1229 = vmul.f32 %v1204, %v1222
        %v1230 = vmul.f32 %v1205, %v1225
        %v1231 = vmul.f32 %v1206, %v1224
        %v1232 = vmul.f32 %v1207, %v1222
        %v1233 = vmul.f32 %v1208, %v1225
        %v1234 = vmul.f32 %v1209, %v1224
        %1241 = vrot.lane.b32.xlu0 %v1229, 121
        %v1242 = vpop.permute.xlu0 %1241
        %1243 = vrot.lane.b32.xlu0 %v1230, 121
        %v1244 = vpop.permute.xlu0 %1243
        %1245 = vrot.lane.b32.xlu0 %v1231, 121
        %v1246 = vpop.permute.xlu0 %1245
        %1247 = vrot.lane.b32.xlu0 %v1232, 121
        %v1248 = vpop.permute.xlu0 %1247
        %1249 = vrot.lane.b32.xlu0 %v1233, 121
        %v1250 = vpop.permute.xlu0 %1249
        %1251 = vrot.lane.b32.xlu0 %v1234, 121
        %v1252 = vpop.permute.xlu0 %1251
        %v1253 = vsel %vm1030, %v1242, %v1244
        %v1254 = vsel %vm1030, %v1244, %v1246
        %v1255 = vsel %vm1030, %v1248, %v1250
        %v1256 = vsel %vm1030, %v1250, %v1252
        %1261 = vst [vmem:[#allocation3 + $0x1e0] sm:$0xff] %v1253
        %1262 = vst [vmem:[#allocation3 + $0x1e8] sm:$0xff] %v1254
        %1263 = vst [vmem:[#allocation3 + $0x1f0] sm:$0xff] %v1255
        %1264 = vst [vmem:[#allocation3 + $0x1f8] sm:$0xff] %v1256
        %v1265 = vld [vmem:[#allocation10] sm:$0xff]
        %v1266 = vld [vmem:[#allocation10 + $0x8] sm:$0xff]
        %v1267 = vld [vmem:[#allocation10 + $0x20] sm:$0xff]
        %v1268 = vld [vmem:[#allocation10 + $0x28] sm:$0xff]
        %v1269 = vld [vmem:[#allocation3] sm:$0xff]
        %v1270 = vld [vmem:[#allocation3 + $0x8] sm:$0xff]
        %v1271 = vld [vmem:[#allocation3 + $0x10] sm:$0xff]
        %v1272 = vld [vmem:[#allocation3 + $0x18] sm:$0xff]
        %v1273 = vld [vmem:[#allocation3 + $0x20] sm:$0xff]
        %v1274 = vld [vmem:[#allocation3 + $0x28] sm:$0xff]
        %v1275 = vld [vmem:[#allocation3 + $0x30] sm:$0xff]
        %v1276 = vld [vmem:[#allocation3 + $0x38] sm:$0xff]
        %v1277 = vld [vmem:[#allocation3 + $0x40] sm:$0xff]
        %v1278 = vld [vmem:[#allocation3 + $0x48] sm:$0xff]
        %v1279 = vld [vmem:[#allocation3 + $0x50] sm:$0xff]
        %v1280 = vld [vmem:[#allocation3 + $0x58] sm:$0xff]
        %v1281 = vld [vmem:[#allocation3 + $0x60] sm:$0xff]
        %v1282 = vld [vmem:[#allocation3 + $0x68] sm:$0xff]
        %v1283 = vld [vmem:[#allocation3 + $0x70] sm:$0xff]
        %v1284 = vld [vmem:[#allocation3 + $0x78] sm:$0xff]
        %v1285 = vld [vmem:[#allocation3 + $0x80] sm:$0xff]
        %v1286 = vld [vmem:[#allocation3 + $0x88] sm:$0xff]
        %v1287 = vld [vmem:[#allocation3 + $0x90] sm:$0xff]
        %v1288 = vld [vmem:[#allocation3 + $0x98] sm:$0xff]
        %v1289 = vld [vmem:[#allocation3 + $0xa0] sm:$0xff]
        %v1290 = vld [vmem:[#allocation3 + $0xa8] sm:$0xff]
        %v1291 = vld [vmem:[#allocation3 + $0xb0] sm:$0xff]
        %v1292 = vld [vmem:[#allocation3 + $0xb8] sm:$0xff]
        %v1293 = vld [vmem:[#allocation3 + $0xc0] sm:$0xff]
        %v1294 = vld [vmem:[#allocation3 + $0xc8] sm:$0xff]
        %v1295 = vld [vmem:[#allocation3 + $0xd0] sm:$0xff]
        %v1296 = vld [vmem:[#allocation3 + $0xd8] sm:$0xff]
        %v1297 = vld [vmem:[#allocation3 + $0xe0] sm:$0xff]
        %v1298 = vld [vmem:[#allocation3 + $0xe8] sm:$0xff]
        %v1299 = vld [vmem:[#allocation3 + $0xf0] sm:$0xff]
        %v1300 = vld [vmem:[#allocation3 + $0xf8] sm:$0xff]
        %v1301 = vld [vmem:[#allocation3 + $0x100] sm:$0xff]
        %v1302 = vld [vmem:[#allocation3 + $0x108] sm:$0xff]
        %v1303 = vld [vmem:[#allocation3 + $0x110] sm:$0xff]
        %v1304 = vld [vmem:[#allocation3 + $0x118] sm:$0xff]
        %v1305 = vld [vmem:[#allocation3 + $0x120] sm:$0xff]
        %v1306 = vld [vmem:[#allocation3 + $0x128] sm:$0xff]
        %v1307 = vld [vmem:[#allocation3 + $0x130] sm:$0xff]
        %v1308 = vld [vmem:[#allocation3 + $0x138] sm:$0xff]
        %v1309 = vld [vmem:[#allocation3 + $0x140] sm:$0xff]
        %v1310 = vld [vmem:[#allocation3 + $0x148] sm:$0xff]
        %v1311 = vld [vmem:[#allocation3 + $0x150] sm:$0xff]
        %v1312 = vld [vmem:[#allocation3 + $0x158] sm:$0xff]
        %v1313 = vld [vmem:[#allocation3 + $0x160] sm:$0xff]
        %v1314 = vld [vmem:[#allocation3 + $0x168] sm:$0xff]
        %v1315 = vld [vmem:[#allocation3 + $0x170] sm:$0xff]
        %v1316 = vld [vmem:[#allocation3 + $0x178] sm:$0xff]
        %v1317 = vld [vmem:[#allocation3 + $0x180] sm:$0xff]
        %v1318 = vld [vmem:[#allocation3 + $0x188] sm:$0xff]
        %v1319 = vld [vmem:[#allocation3 + $0x190] sm:$0xff]
        %v1320 = vld [vmem:[#allocation3 + $0x198] sm:$0xff]
        %v1321 = vld [vmem:[#allocation3 + $0x1a0] sm:$0xff]
        %v1322 = vld [vmem:[#allocation3 + $0x1a8] sm:$0xff]
        %v1323 = vld [vmem:[#allocation3 + $0x1b0] sm:$0xff]
        %v1324 = vld [vmem:[#allocation3 + $0x1b8] sm:$0xff]
        %v1325 = vld [vmem:[#allocation3 + $0x1c0] sm:$0xff]
        %v1326 = vld [vmem:[#allocation3 + $0x1c8] sm:$0xff]
        %v1327 = vld [vmem:[#allocation3 + $0x1d0] sm:$0xff]
        %v1328 = vld [vmem:[#allocation3 + $0x1d8] sm:$0xff]
        %v1329 = vld [vmem:[#allocation3 + $0x1e0] sm:$0xff]
        %v1330 = vld [vmem:[#allocation3 + $0x1e8] sm:$0xff]
        %v1331 = vld [vmem:[#allocation3 + $0x1f0] sm:$0xff]
        %v1332 = vld [vmem:[#allocation3 + $0x1f8] sm:$0xff]
        %1333 = vmatprep.subr.mxu0 %v1300
        %1334 = vmatpush1.msra.mxu0 %v1299
        %1335 = vmatprep.subr.mxu0 %v1298
        %1336 = vmatpush1.msra.mxu0 %v1297
        %1337 = vmatprep.subr.mxu0 %v1296
        %1338 = vmatpush1.msra.mxu0 %v1295
        %1339 = vmatprep.subr.mxu0 %v1294
        %1340 = vmatpush1.msra.mxu0 %v1293
        %1341 = vmatprep.subr.mxu0 %v1292
        %1342 = vmatpush1.msra.mxu0 %v1291
        %1343 = vmatprep.subr.mxu0 %v1290
        %1344 = vmatpush1.msra.mxu0 %v1289
        %1345 = vmatprep.subr.mxu0 %v1288
        %1346 = vmatpush1.msra.mxu0 %v1287
        %1347 = vmatprep.subr.mxu0 %v1286
        %1348 = vmatpush1.msra.mxu0 %v1285
        %1349 = vmatprep.subr.mxu0 %v1284
        %1350 = vmatpush1.msra.mxu0 %v1283
        %1351 = vmatprep.subr.mxu0 %v1282
        %1352 = vmatpush1.msra.mxu0 %v1281
        %1353 = vmatprep.subr.mxu0 %v1280
        %1354 = vmatpush1.msra.mxu0 %v1279
        %1355 = vmatprep.subr.mxu0 %v1278
        %1356 = vmatpush1.msra.mxu0 %v1277
        %1357 = vmatprep.subr.mxu0 %v1276
        %1358 = vmatpush1.msra.mxu0 %v1275
        %1359 = vmatprep.subr.mxu0 %v1274
        %1360 = vmatpush1.msra.mxu0 %v1273
        %1361 = vmatprep.subr.mxu0 %v1272
        %1362 = vmatpush1.msra.mxu0 %v1271
        %1363 = vmatprep.subr.mxu0 %v1270
        %1364 = vmatpush1.msra.mxu0 %v1269
        %1365 = vmatprep.subr.mxu0 %v1332
        %1366 = vmatpush2.msra.mxu0 %v1331
        %1367 = vmatprep.subr.mxu0 %v1330
        %1368 = vmatpush2.msra.mxu0 %v1329
        %1369 = vmatprep.subr.mxu0 %v1328
        %1370 = vmatpush2.msra.mxu0 %v1327
        %1371 = vmatprep.subr.mxu0 %v1326
        %1372 = vmatpush2.msra.mxu0 %v1325
        %1373 = vmatprep.subr.mxu0 %v1324
        %1374 = vmatpush2.msra.mxu0 %v1323
        %1375 = vmatprep.subr.mxu0 %v1322
        %1376 = vmatpush2.msra.mxu0 %v1321
        %1377 = vmatprep.subr.mxu0 %v1320
        %1378 = vmatpush2.msra.mxu0 %v1319
        %1379 = vmatprep.subr.mxu0 %v1318
        %1380 = vmatpush2.msra.mxu0 %v1317
        %1381 = vmatprep.subr.mxu0 %v1316
        %1382 = vmatpush2.msra.mxu0 %v1315
        %1383 = vmatprep.subr.mxu0 %v1314
        %1384 = vmatpush2.msra.mxu0 %v1313
        %1385 = vmatprep.subr.mxu0 %v1312
        %1386 = vmatpush2.msra.mxu0 %v1311
        %1387 = vmatprep.subr.mxu0 %v1310
        %1388 = vmatpush2.msra.mxu0 %v1309
        %1389 = vmatprep.subr.mxu0 %v1308
        %1390 = vmatpush2.msra.mxu0 %v1307
        %1391 = vmatprep.subr.mxu0 %v1306
        %1392 = vmatpush2.msra.mxu0 %v1305
        %1393 = vmatprep.subr.mxu0 %v1304
        %1394 = vmatpush2.msra.mxu0 %v1303
        %1395 = vmatprep.subr.mxu0 %v1302
        %1396 = vmatpush2.msra.mxu0 %v1301
        %1397 = vmatprep.mubr.f32.mxu0 %v1266
        %1398 = vmatmul.mubr.f32.gmra.mxu0 %v1265
        %v1399 = vpop.f32.mrf.mxu0
        %v1400 = vadd.f32 0.0, %v1399
        %v1401 = vpop.f32.mrf.mxu0
        %v1402 = vadd.f32 0.0, %v1401
        %1403 = vmatprep.mubr.f32.mxu0 %v1268
        %1404 = vmatmul.mubr.f32.gmra.mxu0 %v1267
        %v1405 = vpop.f32.mrf.mxu0
        %v1406 = vadd.f32 0.0, %v1405
        %v1407 = vpop.f32.mrf.mxu0
        %v1408 = vadd.f32 0.0, %v1407
        %1409 = vdwg.mxu0
        %1410 = vst [vmem:[#allocation4] sm:$0xff] %v1400
        %1411 = vst [vmem:[#allocation4 + $0x8] sm:$0xff] %v1402
        %1412 = vst [vmem:[#allocation4 + $0x10] sm:$0xff] %v1406
        %1413 = vst [vmem:[#allocation4 + $0x18] sm:$0xff] %v1408
        %v1414 = vld [vmem:[#allocation2 + $0x8] sm:$0xff]
        %v1415 = vld [vmem:[#allocation2 + $0x10] sm:$0xff]
        %v1416 = vld [vmem:[#allocation2 + $0x18] sm:$0xff]
        %v1417 = vld [vmem:[#allocation2 + $0x28] sm:$0xff]
        %v1418 = vld [vmem:[#allocation2 + $0x30] sm:$0xff]
        %v1419 = vld [vmem:[#allocation2 + $0x38] sm:$0xff]
        %s1420 = scalar_lea.vmem [#allocation8], 32
        %v1421 = vld [vmem:[%s1420] ss:$8 sm:$0x3]
        %v1423 = vlaneseq
        %v1424 = vshrl.u32 %v1423, 7
        %v1425 = vsub.s32 0, %v1424
        %v1426 = vrot.slane %v1421, %v1425
        %v1427 = vlaneseq
        %v1428 = vshrl.u32 %v1427, 7
        %v1429 = vsub.s32 1, %v1428
        %v1430 = vrot.slane %v1421, %v1429
        %1431 = vrot.lane.b32.xlu0 %v1426, 8
        %v1432 = vpop.permute.xlu0 %1431
        %1433 = vrot.lane.b32.xlu0 %v1430, 8
        %v1434 = vpop.permute.xlu0 %1433
        %v1435 = vsel %vm996, %v1432, %v1434
        %v1439 = vmul.f32 %v1414, %v1432
        %v1440 = vmul.f32 %v1415, %v1435
        %v1441 = vmul.f32 %v1416, %v1434
        %v1442 = vmul.f32 %v1417, %v1432
        %v1443 = vmul.f32 %v1418, %v1435
        %v1444 = vmul.f32 %v1419, %v1434
        %1451 = vrot.lane.b32.xlu0 %v1439, 120
        %v1452 = vpop.permute.xlu0 %1451
        %1453 = vrot.lane.b32.xlu0 %v1440, 120
        %v1454 = vpop.permute.xlu0 %1453
        %1455 = vrot.lane.b32.xlu0 %v1441, 120
        %v1456 = vpop.permute.xlu0 %1455
        %1457 = vrot.lane.b32.xlu0 %v1442, 120
        %v1458 = vpop.permute.xlu0 %1457
        %1459 = vrot.lane.b32.xlu0 %v1443, 120
        %v1460 = vpop.permute.xlu0 %1459
        %1461 = vrot.lane.b32.xlu0 %v1444, 120
        %v1462 = vpop.permute.xlu0 %1461
        %v1463 = vsel %vm967, %v1452, %v1454
        %v1464 = vsel %vm967, %v1454, %v1456
        %v1465 = vsel %vm967, %v1458, %v1460
        %v1466 = vsel %vm967, %v1460, %v1462
        %s1471 = scalar_lea.vmem [#allocation3], 512
        %1472 = vst [vmem:[%s1471] sm:$0xff] %v1463
        %1473 = vst [vmem:[%s1471 + $0x8] sm:$0xff] %v1464
        %1474 = vst [vmem:[%s1471 + $0x10] sm:$0xff] %v1465
        %1475 = vst [vmem:[%s1471 + $0x18] sm:$0xff] %v1466
        %v1476 = vld [vmem:[#allocation2 + $0x8] sm:$0xff]
        %v1477 = vld [vmem:[#allocation2 + $0x10] sm:$0xff]
        %v1478 = vld [vmem:[#allocation2 + $0x18] sm:$0xff]
        %v1479 = vld [vmem:[#allocation2 + $0x28] sm:$0xff]
        %v1480 = vld [vmem:[#allocation2 + $0x30] sm:$0xff]
        %v1481 = vld [vmem:[#allocation2 + $0x38] sm:$0xff]
        %s1482 = scalar_lea.vmem [#allocation8], 33
        %v1483 = vld [vmem:[%s1482] ss:$8 sm:$0x3]
        %v1485 = vlaneseq
        %v1486 = vshrl.u32 %v1485, 7
        %v1487 = vsub.s32 0, %v1486
        %v1488 = vrot.slane %v1483, %v1487
        %v1489 = vlaneseq
        %v1490 = vshrl.u32 %v1489, 7
        %v1491 = vsub.s32 1, %v1490
        %v1492 = vrot.slane %v1483, %v1491
        %1493 = vrot.lane.b32.xlu0 %v1488, 9
        %v1494 = vpop.permute.xlu0 %1493
        %1495 = vrot.lane.b32.xlu0 %v1492, 9
        %v1496 = vpop.permute.xlu0 %1495
        %v1497 = vsel %vm933, %v1494, %v1496
        %v1501 = vmul.f32 %v1476, %v1494
        %v1502 = vmul.f32 %v1477, %v1497
        %v1503 = vmul.f32 %v1478, %v1496
        %v1504 = vmul.f32 %v1479, %v1494
        %v1505 = vmul.f32 %v1480, %v1497
        %v1506 = vmul.f32 %v1481, %v1496
        %1513 = vrot.lane.b32.xlu0 %v1501, 119
        %v1514 = vpop.permute.xlu0 %1513
        %1515 = vrot.lane.b32.xlu0 %v1502, 119
        %v1516 = vpop.permute.xlu0 %1515
        %1517 = vrot.lane.b32.xlu0 %v1503, 119
        %v1518 = vpop.permute.xlu0 %1517
        %1519 = vrot.lane.b32.xlu0 %v1504, 119
        %v1520 = vpop.permute.xlu0 %1519
        %1521 = vrot.lane.b32.xlu0 %v1505, 119
        %v1522 = vpop.permute.xlu0 %1521
        %1523 = vrot.lane.b32.xlu0 %v1506, 119
        %v1524 = vpop.permute.xlu0 %1523
        %v1525 = vsel %vm904, %v1514, %v1516
        %v1526 = vsel %vm904, %v1516, %v1518
        %v1527 = vsel %vm904, %v1520, %v1522
        %v1528 = vsel %vm904, %v1522, %v1524
        %1533 = vst [vmem:[%s1471 + $0x20] sm:$0xff] %v1525
        %1534 = vst [vmem:[%s1471 + $0x28] sm:$0xff] %v1526
        %1535 = vst [vmem:[%s1471 + $0x30] sm:$0xff] %v1527
        %1536 = vst [vmem:[%s1471 + $0x38] sm:$0xff] %v1528
        %v1537 = vld [vmem:[#allocation2 + $0x8] sm:$0xff]
        %v1538 = vld [vmem:[#allocation2 + $0x10] sm:$0xff]
        %v1539 = vld [vmem:[#allocation2 + $0x18] sm:$0xff]
        %v1540 = vld [vmem:[#allocation2 + $0x28] sm:$0xff]
        %v1541 = vld [vmem:[#allocation2 + $0x30] sm:$0xff]
        %v1542 = vld [vmem:[#allocation2 + $0x38] sm:$0xff]
        %s1543 = scalar_lea.vmem [#allocation8], 34
        %v1544 = vld [vmem:[%s1543] ss:$8 sm:$0x3]
        %v1546 = vlaneseq
        %v1547 = vshrl.u32 %v1546, 7
        %v1548 = vsub.s32 0, %v1547
        %v1549 = vrot.slane %v1544, %v1548
        %v1550 = vlaneseq
        %v1551 = vshrl.u32 %v1550, 7
        %v1552 = vsub.s32 1, %v1551
        %v1553 = vrot.slane %v1544, %v1552
        %1554 = vrot.lane.b32.xlu0 %v1549, 55
        %v1555 = vpop.permute.xlu0 %1554
        %1556 = vrot.lane.b32.xlu0 %v1553, 55
        %v1557 = vpop.permute.xlu0 %1556
        %v1558 = vsel %vm346, %v1555, %v1557
        %v1562 = vmul.f32 %v1537, %v1555
        %v1563 = vmul.f32 %v1538, %v1558
        %v1564 = vmul.f32 %v1539, %v1557
        %v1565 = vmul.f32 %v1540, %v1555
        %v1566 = vmul.f32 %v1541, %v1558
        %v1567 = vmul.f32 %v1542, %v1557
        %1574 = vrot.lane.b32.xlu0 %v1562, 73
        %v1575 = vpop.permute.xlu0 %1574
        %1576 = vrot.lane.b32.xlu0 %v1563, 73
        %v1577 = vpop.permute.xlu0 %1576
        %1578 = vrot.lane.b32.xlu0 %v1564, 73
        %v1579 = vpop.permute.xlu0 %1578
        %1580 = vrot.lane.b32.xlu0 %v1565, 73
        %v1581 = vpop.permute.xlu0 %1580
        %1582 = vrot.lane.b32.xlu0 %v1566, 73
        %v1583 = vpop.permute.xlu0 %1582
        %1584 = vrot.lane.b32.xlu0 %v1567, 73
        %v1585 = vpop.permute.xlu0 %1584
        %v1586 = vsel %vm375, %v1575, %v1577
        %v1587 = vsel %vm375, %v1577, %v1579
        %v1588 = vsel %vm375, %v1581, %v1583
        %v1589 = vsel %vm375, %v1583, %v1585
        %1594 = vst [vmem:[%s1471 + $0x40] sm:$0xff] %v1586
        %1595 = vst [vmem:[%s1471 + $0x48] sm:$0xff] %v1587
        %1596 = vst [vmem:[%s1471 + $0x50] sm:$0xff] %v1588
        %1597 = vst [vmem:[%s1471 + $0x58] sm:$0xff] %v1589
        %v1598 = vld [vmem:[#allocation2 + $0x8] sm:$0xff]
        %v1599 = vld [vmem:[#allocation2 + $0x10] sm:$0xff]
        %v1600 = vld [vmem:[#allocation2 + $0x18] sm:$0xff]
        %v1601 = vld [vmem:[#allocation2 + $0x28] sm:$0xff]
        %v1602 = vld [vmem:[#allocation2 + $0x30] sm:$0xff]
        %v1603 = vld [vmem:[#allocation2 + $0x38] sm:$0xff]
        %s1604 = scalar_lea.vmem [#allocation8], 35
        %v1605 = vld [vmem:[%s1604] ss:$8 sm:$0x3]
        %v1607 = vlaneseq
        %v1608 = vshrl.u32 %v1607, 7
        %v1609 = vsub.s32 0, %v1608
        %v1610 = vrot.slane %v1605, %v1609
        %v1611 = vlaneseq
        %v1612 = vshrl.u32 %v1611, 7
        %v1613 = vsub.s32 1, %v1612
        %v1614 = vrot.slane %v1605, %v1613
        %1615 = vrot.lane.b32.xlu0 %v1610, 56
        %v1616 = vpop.permute.xlu0 %1615
        %1617 = vrot.lane.b32.xlu0 %v1614, 56
        %v1618 = vpop.permute.xlu0 %1617
        %v1619 = vsel %vm409, %v1616, %v1618
        %v1623 = vmul.f32 %v1598, %v1616
        %v1624 = vmul.f32 %v1599, %v1619
        %v1625 = vmul.f32 %v1600, %v1618
        %v1626 = vmul.f32 %v1601, %v1616
        %v1627 = vmul.f32 %v1602, %v1619
        %v1628 = vmul.f32 %v1603, %v1618
        %1635 = vrot.lane.b32.xlu0 %v1623, 72
        %v1636 = vpop.permute.xlu0 %1635
        %1637 = vrot.lane.b32.xlu0 %v1624, 72
        %v1638 = vpop.permute.xlu0 %1637
        %1639 = vrot.lane.b32.xlu0 %v1625, 72
        %v1640 = vpop.permute.xlu0 %1639
        %1641 = vrot.lane.b32.xlu0 %v1626, 72
        %v1642 = vpop.permute.xlu0 %1641
        %1643 = vrot.lane.b32.xlu0 %v1627, 72
        %v1644 = vpop.permute.xlu0 %1643
        %1645 = vrot.lane.b32.xlu0 %v1628, 72
        %v1646 = vpop.permute.xlu0 %1645
        %v1647 = vsel %vm438, %v1636, %v1638
        %v1648 = vsel %vm438, %v1638, %v1640
        %v1649 = vsel %vm438, %v1642, %v1644
        %v1650 = vsel %vm438, %v1644, %v1646
        %1655 = vst [vmem:[%s1471 + $0x60] sm:$0xff] %v1647
        %1656 = vst [vmem:[%s1471 + $0x68] sm:$0xff] %v1648
        %1657 = vst [vmem:[%s1471 + $0x70] sm:$0xff] %v1649
        %1658 = vst [vmem:[%s1471 + $0x78] sm:$0xff] %v1650
        %v1659 = vld [vmem:[#allocation2 + $0x8] sm:$0xff]
        %v1660 = vld [vmem:[#allocation2 + $0x10] sm:$0xff]
        %v1661 = vld [vmem:[#allocation2 + $0x18] sm:$0xff]
        %v1662 = vld [vmem:[#allocation2 + $0x28] sm:$0xff]
        %v1663 = vld [vmem:[#allocation2 + $0x30] sm:$0xff]
        %v1664 = vld [vmem:[#allocation2 + $0x38] sm:$0xff]
        %s1665 = scalar_lea.vmem [#allocation8], 36
        %v1666 = vld [vmem:[%s1665] ss:$8 sm:$0x3]
        %v1668 = vlaneseq
        %v1669 = vshrl.u32 %v1668, 7
        %v1670 = vsub.s32 0, %v1669
        %v1671 = vrot.slane %v1666, %v1670
        %v1672 = vlaneseq
        %v1673 = vshrl.u32 %v1672, 7
        %v1674 = vsub.s32 1, %v1673
        %v1675 = vrot.slane %v1666, %v1674
        %1676 = vrot.lane.b32.xlu0 %v1671, 57
        %v1677 = vpop.permute.xlu0 %1676
        %1678 = vrot.lane.b32.xlu0 %v1675, 57
        %v1679 = vpop.permute.xlu0 %1678
        %v1680 = vsel %vm472, %v1677, %v1679
        %v1684 = vmul.f32 %v1659, %v1677
        %v1685 = vmul.f32 %v1660, %v1680
        %v1686 = vmul.f32 %v1661, %v1679
        %v1687 = vmul.f32 %v1662, %v1677
        %v1688 = vmul.f32 %v1663, %v1680
        %v1689 = vmul.f32 %v1664, %v1679
        %1696 = vrot.lane.b32.xlu0 %v1684, 71
        %v1697 = vpop.permute.xlu0 %1696
        %1698 = vrot.lane.b32.xlu0 %v1685, 71
        %v1699 = vpop.permute.xlu0 %1698
        %1700 = vrot.lane.b32.xlu0 %v1686, 71
        %v1701 = vpop.permute.xlu0 %1700
        %1702 = vrot.lane.b32.xlu0 %v1687, 71
        %v1703 = vpop.permute.xlu0 %1702
        %1704 = vrot.lane.b32.xlu0 %v1688, 71
        %v1705 = vpop.permute.xlu0 %1704
        %1706 = vrot.lane.b32.xlu0 %v1689, 71
        %v1707 = vpop.permute.xlu0 %1706
        %v1708 = vsel %vm501, %v1697, %v1699
        %v1709 = vsel %vm501, %v1699, %v1701
        %v1710 = vsel %vm501, %v1703, %v1705
        %v1711 = vsel %vm501, %v1705, %v1707
        %1716 = vst [vmem:[%s1471 + $0x80] sm:$0xff] %v1708
        %1717 = vst [vmem:[%s1471 + $0x88] sm:$0xff] %v1709
        %1718 = vst [vmem:[%s1471 + $0x90] sm:$0xff] %v1710
        %1719 = vst [vmem:[%s1471 + $0x98] sm:$0xff] %v1711
        %v1720 = vld [vmem:[#allocation2 + $0x8] sm:$0xff]
        %v1721 = vld [vmem:[#allocation2 + $0x10] sm:$0xff]
        %v1722 = vld [vmem:[#allocation2 + $0x18] sm:$0xff]
        %v1723 = vld [vmem:[#allocation2 + $0x28] sm:$0xff]
        %v1724 = vld [vmem:[#allocation2 + $0x30] sm:$0xff]
        %v1725 = vld [vmem:[#allocation2 + $0x38] sm:$0xff]
        %s1726 = scalar_lea.vmem [#allocation8], 37
        %v1727 = vld [vmem:[%s1726] ss:$8 sm:$0x3]
        %v1729 = vlaneseq
        %v1730 = vshrl.u32 %v1729, 7
        %v1731 = vsub.s32 0, %v1730
        %v1732 = vrot.slane %v1727, %v1731
        %v1733 = vlaneseq
        %v1734 = vshrl.u32 %v1733, 7
        %v1735 = vsub.s32 1, %v1734
        %v1736 = vrot.slane %v1727, %v1735
        %1737 = vrot.lane.b32.xlu0 %v1732, 63
        %v1738 = vpop.permute.xlu0 %1737
        %1739 = vrot.lane.b32.xlu0 %v1736, 63
        %v1740 = vpop.permute.xlu0 %1739
        %v1741 = vsel %vm535, %v1738, %v1740
        %v1745 = vmul.f32 %v1720, %v1738
        %v1746 = vmul.f32 %v1721, %v1741
        %v1747 = vmul.f32 %v1722, %v1740
        %v1748 = vmul.f32 %v1723, %v1738
        %v1749 = vmul.f32 %v1724, %v1741
        %v1750 = vmul.f32 %v1725, %v1740
        %1757 = vrot.lane.b32.xlu0 %v1745, 65
        %v1758 = vpop.permute.xlu0 %1757
        %1759 = vrot.lane.b32.xlu0 %v1746, 65
        %v1760 = vpop.permute.xlu0 %1759
        %1761 = vrot.lane.b32.xlu0 %v1747, 65
        %v1762 = vpop.permute.xlu0 %1761
        %1763 = vrot.lane.b32.xlu0 %v1748, 65
        %v1764 = vpop.permute.xlu0 %1763
        %1765 = vrot.lane.b32.xlu0 %v1749, 65
        %v1766 = vpop.permute.xlu0 %1765
        %1767 = vrot.lane.b32.xlu0 %v1750, 65
        %v1768 = vpop.permute.xlu0 %1767
        %v1769 = vsel %vm564, %v1758, %v1760
        %v1770 = vsel %vm564, %v1760, %v1762
        %v1771 = vsel %vm564, %v1764, %v1766
        %v1772 = vsel %vm564, %v1766, %v1768
        %1777 = vst [vmem:[%s1471 + $0xa0] sm:$0xff] %v1769
        %1778 = vst [vmem:[%s1471 + $0xa8] sm:$0xff] %v1770
        %1779 = vst [vmem:[%s1471 + $0xb0] sm:$0xff] %v1771
        %1780 = vst [vmem:[%s1471 + $0xb8] sm:$0xff] %v1772
        %v1781 = vld [vmem:[#allocation2 + $0x8] sm:$0xff]
        %v1782 = vld [vmem:[#allocation2 + $0x10] sm:$0xff]
        %v1783 = vld [vmem:[#allocation2 + $0x18] sm:$0xff]
        %v1784 = vld [vmem:[#allocation2 + $0x28] sm:$0xff]
        %v1785 = vld [vmem:[#allocation2 + $0x30] sm:$0xff]
        %v1786 = vld [vmem:[#allocation2 + $0x38] sm:$0xff]
        %s1787 = scalar_lea.vmem [#allocation8], 38
        %v1788 = vld [vmem:[%s1787] ss:$8 sm:$0x3]
        %v1790 = vlaneseq
        %v1791 = vshrl.u32 %v1790, 7
        %v1792 = vsub.s32 0, %v1791
        %v1793 = vrot.slane %v1788, %v1792
        %v1794 = vlaneseq
        %v1795 = vshrl.u32 %v1794, 7
        %v1796 = vsub.s32 1, %v1795
        %v1797 = vrot.slane %v1788, %v1796
        %1798 = vrot.lane.b32.xlu0 %v1793, 64
        %v1799 = vpop.permute.xlu0 %1798
        %1800 = vrot.lane.b32.xlu0 %v1797, 64
        %v1801 = vpop.permute.xlu0 %1800
        %v1802 = vsel %vm598, %v1799, %v1801
        %v1806 = vmul.f32 %v1781, %v1799
        %v1807 = vmul.f32 %v1782, %v1802
        %v1808 = vmul.f32 %v1783, %v1801
        %v1809 = vmul.f32 %v1784, %v1799
        %v1810 = vmul.f32 %v1785, %v1802
        %v1811 = vmul.f32 %v1786, %v1801
        %1818 = vrot.lane.b32.xlu0 %v1806, 64
        %v1819 = vpop.permute.xlu0 %1818
        %1820 = vrot.lane.b32.xlu0 %v1807, 64
        %v1821 = vpop.permute.xlu0 %1820
        %1822 = vrot.lane.b32.xlu0 %v1808, 64
        %v1823 = vpop.permute.xlu0 %1822
        %1824 = vrot.lane.b32.xlu0 %v1809, 64
        %v1825 = vpop.permute.xlu0 %1824
        %1826 = vrot.lane.b32.xlu0 %v1810, 64
        %v1827 = vpop.permute.xlu0 %1826
        %1828 = vrot.lane.b32.xlu0 %v1811, 64
        %v1829 = vpop.permute.xlu0 %1828
        %v1830 = vsel %vm598, %v1819, %v1821
        %v1831 = vsel %vm598, %v1821, %v1823
        %v1832 = vsel %vm598, %v1825, %v1827
        %v1833 = vsel %vm598, %v1827, %v1829
        %1838 = vst [vmem:[%s1471 + $0xc0] sm:$0xff] %v1830
        %1839 = vst [vmem:[%s1471 + $0xc8] sm:$0xff] %v1831
        %1840 = vst [vmem:[%s1471 + $0xd0] sm:$0xff] %v1832
        %1841 = vst [vmem:[%s1471 + $0xd8] sm:$0xff] %v1833
        %v1842 = vld [vmem:[#allocation2 + $0x8] sm:$0xff]
        %v1843 = vld [vmem:[#allocation2 + $0x10] sm:$0xff]
        %v1844 = vld [vmem:[#allocation2 + $0x18] sm:$0xff]
        %v1845 = vld [vmem:[#allocation2 + $0x28] sm:$0xff]
        %v1846 = vld [vmem:[#allocation2 + $0x30] sm:$0xff]
        %v1847 = vld [vmem:[#allocation2 + $0x38] sm:$0xff]
        %s1848 = scalar_lea.vmem [#allocation8], 39
        %v1849 = vld [vmem:[%s1848] ss:$8 sm:$0x3]
        %v1851 = vlaneseq
        %v1852 = vshrl.u32 %v1851, 7
        %v1853 = vsub.s32 0, %v1852
        %v1854 = vrot.slane %v1849, %v1853
        %v1855 = vlaneseq
        %v1856 = vshrl.u32 %v1855, 7
        %v1857 = vsub.s32 1, %v1856
        %v1858 = vrot.slane %v1849, %v1857
        %1859 = vrot.lane.b32.xlu0 %v1854, 65
        %v1860 = vpop.permute.xlu0 %1859
        %1861 = vrot.lane.b32.xlu0 %v1858, 65
        %v1862 = vpop.permute.xlu0 %1861
        %v1863 = vsel %vm564, %v1860, %v1862
        %v1867 = vmul.f32 %v1842, %v1860
        %v1868 = vmul.f32 %v1843, %v1863
        %v1869 = vmul.f32 %v1844, %v1862
        %v1870 = vmul.f32 %v1845, %v1860
        %v1871 = vmul.f32 %v1846, %v1863
        %v1872 = vmul.f32 %v1847, %v1862
        %1879 = vrot.lane.b32.xlu0 %v1867, 63
        %v1880 = vpop.permute.xlu0 %1879
        %1881 = vrot.lane.b32.xlu0 %v1868, 63
        %v1882 = vpop.permute.xlu0 %1881
        %1883 = vrot.lane.b32.xlu0 %v1869, 63
        %v1884 = vpop.permute.xlu0 %1883
        %1885 = vrot.lane.b32.xlu0 %v1870, 63
        %v1886 = vpop.permute.xlu0 %1885
        %1887 = vrot.lane.b32.xlu0 %v1871, 63
        %v1888 = vpop.permute.xlu0 %1887
        %1889 = vrot.lane.b32.xlu0 %v1872, 63
        %v1890 = vpop.permute.xlu0 %1889
        %v1891 = vsel %vm535, %v1880, %v1882
        %v1892 = vsel %vm535, %v1882, %v1884
        %v1893 = vsel %vm535, %v1886, %v1888
        %v1894 = vsel %vm535, %v1888, %v1890
        %1899 = vst [vmem:[%s1471 + $0xe0] sm:$0xff] %v1891
        %1900 = vst [vmem:[%s1471 + $0xe8] sm:$0xff] %v1892
        %1901 = vst [vmem:[%s1471 + $0xf0] sm:$0xff] %v1893
        %1902 = vst [vmem:[%s1471 + $0xf8] sm:$0xff] %v1894
        %v1903 = vld [vmem:[#allocation2 + $0x8] sm:$0xff]
        %v1904 = vld [vmem:[#allocation2 + $0x10] sm:$0xff]
        %v1905 = vld [vmem:[#allocation2 + $0x18] sm:$0xff]
        %v1906 = vld [vmem:[#allocation2 + $0x28] sm:$0xff]
        %v1907 = vld [vmem:[#allocation2 + $0x30] sm:$0xff]
        %v1908 = vld [vmem:[#allocation2 + $0x38] sm:$0xff]
        %s1909 = scalar_lea.vmem [#allocation8], 48
        %v1910 = vld [vmem:[%s1909] ss:$8 sm:$0x3]
        %v1912 = vlaneseq
        %v1913 = vshrl.u32 %v1912, 7
        %v1914 = vsub.s32 0, %v1913
        %v1915 = vrot.slane %v1910, %v1914
        %v1916 = vlaneseq
        %v1917 = vshrl.u32 %v1916, 7
        %v1918 = vsub.s32 1, %v1917
        %v1919 = vrot.slane %v1910, %v1918
        %1920 = vrot.lane.b32.xlu0 %v1915, 71
        %v1921 = vpop.permute.xlu0 %1920
        %1922 = vrot.lane.b32.xlu0 %v1919, 71
        %v1923 = vpop.permute.xlu0 %1922
        %v1924 = vsel %vm501, %v1921, %v1923
        %v1928 = vmul.f32 %v1903, %v1921
        %v1929 = vmul.f32 %v1904, %v1924
        %v1930 = vmul.f32 %v1905, %v1923
        %v1931 = vmul.f32 %v1906, %v1921
        %v1932 = vmul.f32 %v1907, %v1924
        %v1933 = vmul.f32 %v1908, %v1923
        %1940 = vrot.lane.b32.xlu0 %v1928, 57
        %v1941 = vpop.permute.xlu0 %1940
        %1942 = vrot.lane.b32.xlu0 %v1929, 57
        %v1943 = vpop.permute.xlu0 %1942
        %1944 = vrot.lane.b32.xlu0 %v1930, 57
        %v1945 = vpop.permute.xlu0 %1944
        %1946 = vrot.lane.b32.xlu0 %v1931, 57
        %v1947 = vpop.permute.xlu0 %1946
        %1948 = vrot.lane.b32.xlu0 %v1932, 57
        %v1949 = vpop.permute.xlu0 %1948
        %1950 = vrot.lane.b32.xlu0 %v1933, 57
        %v1951 = vpop.permute.xlu0 %1950
        %v1952 = vsel %vm472, %v1941, %v1943
        %v1953 = vsel %vm472, %v1943, %v1945
        %v1954 = vsel %vm472, %v1947, %v1949
        %v1955 = vsel %vm472, %v1949, %v1951
        %1960 = vst [vmem:[%s1471 + $0x100] sm:$0xff] %v1952
        %1961 = vst [vmem:[%s1471 + $0x108] sm:$0xff] %v1953
        %1962 = vst [vmem:[%s1471 + $0x110] sm:$0xff] %v1954
        %1963 = vst [vmem:[%s1471 + $0x118] sm:$0xff] %v1955
        %v1964 = vld [vmem:[#allocation2 + $0x8] sm:$0xff]
        %v1965 = vld [vmem:[#allocation2 + $0x10] sm:$0xff]
        %v1966 = vld [vmem:[#allocation2 + $0x18] sm:$0xff]
        %v1967 = vld [vmem:[#allocation2 + $0x28] sm:$0xff]
        %v1968 = vld [vmem:[#allocation2 + $0x30] sm:$0xff]
        %v1969 = vld [vmem:[#allocation2 + $0x38] sm:$0xff]
        %s1970 = scalar_lea.vmem [#allocation8], 49
        %v1971 = vld [vmem:[%s1970] ss:$8 sm:$0x3]
        %v1973 = vlaneseq
        %v1974 = vshrl.u32 %v1973, 7
        %v1975 = vsub.s32 0, %v1974
        %v1976 = vrot.slane %v1971, %v1975
        %v1977 = vlaneseq
        %v1978 = vshrl.u32 %v1977, 7
        %v1979 = vsub.s32 1, %v1978
        %v1980 = vrot.slane %v1971, %v1979
        %1981 = vrot.lane.b32.xlu0 %v1976, 72
        %v1982 = vpop.permute.xlu0 %1981
        %1983 = vrot.lane.b32.xlu0 %v1980, 72
        %v1984 = vpop.permute.xlu0 %1983
        %v1985 = vsel %vm438, %v1982, %v1984
        %v1989 = vmul.f32 %v1964, %v1982
        %v1990 = vmul.f32 %v1965, %v1985
        %v1991 = vmul.f32 %v1966, %v1984
        %v1992 = vmul.f32 %v1967, %v1982
        %v1993 = vmul.f32 %v1968, %v1985
        %v1994 = vmul.f32 %v1969, %v1984
        %2001 = vrot.lane.b32.xlu0 %v1989, 56
        %v2002 = vpop.permute.xlu0 %2001
        %2003 = vrot.lane.b32.xlu0 %v1990, 56
        %v2004 = vpop.permute.xlu0 %2003
        %2005 = vrot.lane.b32.xlu0 %v1991, 56
        %v2006 = vpop.permute.xlu0 %2005
        %2007 = vrot.lane.b32.xlu0 %v1992, 56
        %v2008 = vpop.permute.xlu0 %2007
        %2009 = vrot.lane.b32.xlu0 %v1993, 56
        %v2010 = vpop.permute.xlu0 %2009
        %2011 = vrot.lane.b32.xlu0 %v1994, 56
        %v2012 = vpop.permute.xlu0 %2011
        %v2013 = vsel %vm409, %v2002, %v2004
        %v2014 = vsel %vm409, %v2004, %v2006
        %v2015 = vsel %vm409, %v2008, %v2010
        %v2016 = vsel %vm409, %v2010, %v2012
        %2021 = vst [vmem:[%s1471 + $0x120] sm:$0xff] %v2013
        %2022 = vst [vmem:[%s1471 + $0x128] sm:$0xff] %v2014
        %2023 = vst [vmem:[%s1471 + $0x130] sm:$0xff] %v2015
        %2024 = vst [vmem:[%s1471 + $0x138] sm:$0xff] %v2016
        %v2025 = vld [vmem:[#allocation2 + $0x8] sm:$0xff]
        %v2026 = vld [vmem:[#allocation2 + $0x10] sm:$0xff]
        %v2027 = vld [vmem:[#allocation2 + $0x18] sm:$0xff]
        %v2028 = vld [vmem:[#allocation2 + $0x28] sm:$0xff]
        %v2029 = vld [vmem:[#allocation2 + $0x30] sm:$0xff]
        %v2030 = vld [vmem:[#allocation2 + $0x38] sm:$0xff]
        %s2031 = scalar_lea.vmem [#allocation8], 50
        %v2032 = vld [vmem:[%s2031] ss:$8 sm:$0x3]
        %v2034 = vlaneseq
        %v2035 = vshrl.u32 %v2034, 7
        %v2036 = vsub.s32 0, %v2035
        %v2037 = vrot.slane %v2032, %v2036
        %v2038 = vlaneseq
        %v2039 = vshrl.u32 %v2038, 7
        %v2040 = vsub.s32 1, %v2039
        %v2041 = vrot.slane %v2032, %v2040
        %2042 = vrot.lane.b32.xlu0 %v2037, 73
        %v2043 = vpop.permute.xlu0 %2042
        %2044 = vrot.lane.b32.xlu0 %v2041, 73
        %v2045 = vpop.permute.xlu0 %2044
        %v2046 = vsel %vm375, %v2043, %v2045
        %v2050 = vmul.f32 %v2025, %v2043
        %v2051 = vmul.f32 %v2026, %v2046
        %v2052 = vmul.f32 %v2027, %v2045
        %v2053 = vmul.f32 %v2028, %v2043
        %v2054 = vmul.f32 %v2029, %v2046
        %v2055 = vmul.f32 %v2030, %v2045
        %2062 = vrot.lane.b32.xlu0 %v2050, 55
        %v2063 = vpop.permute.xlu0 %2062
        %2064 = vrot.lane.b32.xlu0 %v2051, 55
        %v2065 = vpop.permute.xlu0 %2064
        %2066 = vrot.lane.b32.xlu0 %v2052, 55
        %v2067 = vpop.permute.xlu0 %2066
        %2068 = vrot.lane.b32.xlu0 %v2053, 55
        %v2069 = vpop.permute.xlu0 %2068
        %2070 = vrot.lane.b32.xlu0 %v2054, 55
        %v2071 = vpop.permute.xlu0 %2070
        %2072 = vrot.lane.b32.xlu0 %v2055, 55
        %v2073 = vpop.permute.xlu0 %2072
        %v2074 = vsel %vm346, %v2063, %v2065
        %v2075 = vsel %vm346, %v2065, %v2067
        %v2076 = vsel %vm346, %v2069, %v2071
        %v2077 = vsel %vm346, %v2071, %v2073
        %2082 = vst [vmem:[%s1471 + $0x140] sm:$0xff] %v2074
        %2083 = vst [vmem:[%s1471 + $0x148] sm:$0xff] %v2075
        %2084 = vst [vmem:[%s1471 + $0x150] sm:$0xff] %v2076
        %2085 = vst [vmem:[%s1471 + $0x158] sm:$0xff] %v2077
        %v2086 = vld [vmem:[#allocation10 + $0x10] sm:$0xff]
        %v2087 = vld [vmem:[#allocation10 + $0x18] sm:$0xff]
        %v2088 = vld [vmem:[#allocation10 + $0x30] sm:$0xff]
        %v2089 = vld [vmem:[#allocation10 + $0x38] sm:$0xff]
        %v2090 = vld [vmem:[%s1471] sm:$0xff]
        %v2091 = vld [vmem:[%s1471 + $0x8] sm:$0xff]
        %v2092 = vld [vmem:[%s1471 + $0x10] sm:$0xff]
        %v2093 = vld [vmem:[%s1471 + $0x18] sm:$0xff]
        %v2094 = vld [vmem:[%s1471 + $0x20] sm:$0xff]
        %v2095 = vld [vmem:[%s1471 + $0x28] sm:$0xff]
        %v2096 = vld [vmem:[%s1471 + $0x30] sm:$0xff]
        %v2097 = vld [vmem:[%s1471 + $0x38] sm:$0xff]
        %v2098 = vld [vmem:[%s1471 + $0x40] sm:$0xff]
        %v2099 = vld [vmem:[%s1471 + $0x48] sm:$0xff]
        %v2100 = vld [vmem:[%s1471 + $0x50] sm:$0xff]
        %v2101 = vld [vmem:[%s1471 + $0x58] sm:$0xff]
        %v2102 = vld [vmem:[%s1471 + $0x60] sm:$0xff]
        %v2103 = vld [vmem:[%s1471 + $0x68] sm:$0xff]
        %v2104 = vld [vmem:[%s1471 + $0x70] sm:$0xff]
        %v2105 = vld [vmem:[%s1471 + $0x78] sm:$0xff]
        %v2106 = vld [vmem:[%s1471 + $0x80] sm:$0xff]
        %v2107 = vld [vmem:[%s1471 + $0x88] sm:$0xff]
        %v2108 = vld [vmem:[%s1471 + $0x90] sm:$0xff]
        %v2109 = vld [vmem:[%s1471 + $0x98] sm:$0xff]
        %v2110 = vld [vmem:[%s1471 + $0xa0] sm:$0xff]
        %v2111 = vld [vmem:[%s1471 + $0xa8] sm:$0xff]
        %v2112 = vld [vmem:[%s1471 + $0xb0] sm:$0xff]
        %v2113 = vld [vmem:[%s1471 + $0xb8] sm:$0xff]
        %v2114 = vld [vmem:[%s1471 + $0xc0] sm:$0xff]
        %v2115 = vld [vmem:[%s1471 + $0xc8] sm:$0xff]
        %v2116 = vld [vmem:[%s1471 + $0xd0] sm:$0xff]
        %v2117 = vld [vmem:[%s1471 + $0xd8] sm:$0xff]
        %v2118 = vld [vmem:[%s1471 + $0xe0] sm:$0xff]
        %v2119 = vld [vmem:[%s1471 + $0xe8] sm:$0xff]
        %v2120 = vld [vmem:[%s1471 + $0xf0] sm:$0xff]
        %v2121 = vld [vmem:[%s1471 + $0xf8] sm:$0xff]
        %v2122 = vld [vmem:[%s1471 + $0x100] sm:$0xff]
        %v2123 = vld [vmem:[%s1471 + $0x108] sm:$0xff]
        %v2124 = vld [vmem:[%s1471 + $0x110] sm:$0xff]
        %v2125 = vld [vmem:[%s1471 + $0x118] sm:$0xff]
        %v2126 = vld [vmem:[%s1471 + $0x120] sm:$0xff]
        %v2127 = vld [vmem:[%s1471 + $0x128] sm:$0xff]
        %v2128 = vld [vmem:[%s1471 + $0x130] sm:$0xff]
        %v2129 = vld [vmem:[%s1471 + $0x138] sm:$0xff]
        %v2130 = vld [vmem:[%s1471 + $0x140] sm:$0xff]
        %v2131 = vld [vmem:[%s1471 + $0x148] sm:$0xff]
        %v2132 = vld [vmem:[%s1471 + $0x150] sm:$0xff]
        %v2133 = vld [vmem:[%s1471 + $0x158] sm:$0xff]
        %vm2134 = vcmask 392192
        %v2136 = vsel %vm2134, %v2087, 0
        %v2139 = vsel %vm2134, %v2089, 0
        %2141 = vmatprep.subr.mxu0 %v2121
        %2142 = vmatpush1.msra.mxu0 %v2120
        %2143 = vmatprep.subr.mxu0 %v2119
        %2144 = vmatpush1.msra.mxu0 %v2118
        %2145 = vmatprep.subr.mxu0 %v2117
        %2146 = vmatpush1.msra.mxu0 %v2116
        %2147 = vmatprep.subr.mxu0 %v2115
        %2148 = vmatpush1.msra.mxu0 %v2114
        %2149 = vmatprep.subr.mxu0 %v2113
        %2150 = vmatpush1.msra.mxu0 %v2112
        %2151 = vmatprep.subr.mxu0 %v2111
        %2152 = vmatpush1.msra.mxu0 %v2110
        %2153 = vmatprep.subr.mxu0 %v2109
        %2154 = vmatpush1.msra.mxu0 %v2108
        %2155 = vmatprep.subr.mxu0 %v2107
        %2156 = vmatpush1.msra.mxu0 %v2106
        %2157 = vmatprep.subr.mxu0 %v2105
        %2158 = vmatpush1.msra.mxu0 %v2104
        %2159 = vmatprep.subr.mxu0 %v2103
        %2160 = vmatpush1.msra.mxu0 %v2102
        %2161 = vmatprep.subr.mxu0 %v2101
        %2162 = vmatpush1.msra.mxu0 %v2100
        %2163 = vmatprep.subr.mxu0 %v2099
        %2164 = vmatpush1.msra.mxu0 %v2098
        %2165 = vmatprep.subr.mxu0 %v2097
        %2166 = vmatpush1.msra.mxu0 %v2096
        %2167 = vmatprep.subr.mxu0 %v2095
        %2168 = vmatpush1.msra.mxu0 %v2094
        %2169 = vmatprep.subr.mxu0 %v2093
        %2170 = vmatpush1.msra.mxu0 %v2092
        %2171 = vmatprep.subr.mxu0 %v2091
        %2172 = vmatpush1.msra.mxu0 %v2090
        %2173 = vmatprep.subr.mxu0 0.0
        %2174 = vmatpush2.msra.mxu0 0.0
        %2175 = vmatprep.subr.mxu0 0.0
        %2176 = vmatpush2.msra.mxu0 0.0
        %2177 = vmatprep.subr.mxu0 0.0
        %2178 = vmatpush2.msra.mxu0 0.0
        %2179 = vmatprep.subr.mxu0 0.0
        %2180 = vmatpush2.msra.mxu0 0.0
        %2181 = vmatprep.subr.mxu0 0.0
        %2182 = vmatpush2.msra.mxu0 0.0
        %2183 = vmatprep.subr.mxu0 0.0
        %2184 = vmatpush2.msra.mxu0 0.0
        %2185 = vmatprep.subr.mxu0 0.0
        %2186 = vmatpush2.msra.mxu0 0.0
        %2187 = vmatprep.subr.mxu0 0.0
        %2188 = vmatpush2.msra.mxu0 0.0
        %2189 = vmatprep.subr.mxu0 0.0
        %2190 = vmatpush2.msra.mxu0 0.0
        %2191 = vmatprep.subr.mxu0 0.0
        %2192 = vmatpush2.msra.mxu0 0.0
        %2193 = vmatprep.subr.mxu0 %v2133
        %2194 = vmatpush2.msra.mxu0 %v2132
        %2195 = vmatprep.subr.mxu0 %v2131
        %2196 = vmatpush2.msra.mxu0 %v2130
        %2197 = vmatprep.subr.mxu0 %v2129
        %2198 = vmatpush2.msra.mxu0 %v2128
        %2199 = vmatprep.subr.mxu0 %v2127
        %2200 = vmatpush2.msra.mxu0 %v2126
        %2201 = vmatprep.subr.mxu0 %v2125
        %2202 = vmatpush2.msra.mxu0 %v2124
        %2203 = vmatprep.subr.mxu0 %v2123
        %2204 = vmatpush2.msra.mxu0 %v2122
        %2205 = vmatprep.mubr.f32.mxu0 %v2136
        %2206 = vmatmul.mubr.f32.gmra.mxu0 %v2086
        %v2207 = vpop.f32.mrf.mxu0
        %v2208 = vadd.f32 0.0, %v2207
        %v2209 = vpop.f32.mrf.mxu0
        %v2210 = vadd.f32 0.0, %v2209
        %2211 = vmatprep.mubr.f32.mxu0 %v2139
        %2212 = vmatmul.mubr.f32.gmra.mxu0 %v2088
        %v2213 = vpop.f32.mrf.mxu0
        %v2214 = vadd.f32 0.0, %v2213
        %v2215 = vpop.f32.mrf.mxu0
        %v2216 = vadd.f32 0.0, %v2215
        %2217 = vdwg.mxu0
        %v2218 = vld [vmem:[#allocation4] sm:$0xff]
        %v2219 = vld [vmem:[#allocation4 + $0x8] sm:$0xff]
        %v2220 = vld [vmem:[#allocation4 + $0x10] sm:$0xff]
        %v2221 = vld [vmem:[#allocation4 + $0x18] sm:$0xff]
        %v2222 = vadd.f32 %v2218, %v2208
        %v2223 = vadd.f32 %v2219, %v2210
        %v2224 = vadd.f32 %v2220, %v2214
        %v2225 = vadd.f32 %v2221, %v2216
        %2226 = vst [vmem:[#allocation4] sm:$0xff] %v2222
        %2227 = vst [vmem:[#allocation4 + $0x8] sm:$0xff] %v2223
        %2228 = vst [vmem:[#allocation4 + $0x10] sm:$0xff] %v2224
        %2229 = vst [vmem:[#allocation4 + $0x18] sm:$0xff] %v2225
        %v2230 = vld [vmem:[#allocation4] sm:$0xff]
        %v2231 = vld [vmem:[#allocation4 + $0x8] sm:$0xff]
        %v2232 = vld [vmem:[#allocation4 + $0x10] sm:$0xff]
        %v2233 = vld [vmem:[#allocation4 + $0x18] sm:$0xff]
        %v2234 = vld [vmem:[%s3] sm:$0xff]
        %v2235 = vld [vmem:[%s3 + $0x8] sm:$0xff]
        %2237 = vset.pattern.permute.xlu0 0
        %2238 = vperm.xlu0 %2237, %v2234
        %v2239 = vpop.permute.xlu0 %2238
        %2242 = vset.pattern.permute.xlu0 0
        %2243 = vperm.xlu0 %2242, %v2235
        %v2244 = vpop.permute.xlu0 %2243
        %v2246 = vadd.f32 %v2230, %v2239
        %v2247 = vadd.f32 %v2231, %v2239
        %v2248 = vadd.f32 %v2232, %v2244
        %v2249 = vadd.f32 %v2233, %v2244
        %v2250 = vmax.f32 %v2246, 0.0
        %v2251 = vmax.f32 %v2247, 0.0
        %v2252 = vmax.f32 %v2248, 0.0
        %v2253 = vmax.f32 %v2249, 0.0
        %2254 = vst [vmem:[#allocation2 + $0x8] sm:$0xff] %v2250
        %2255 = vst [vmem:[#allocation2 + $0x10] sm:$0xff] %v2251
        %2256 = vst [vmem:[#allocation2 + $0x28] sm:$0xff] %v2252
        %2257 = vst [vmem:[#allocation2 + $0x30] sm:$0xff] %v2253
        %v2258 = vld [vmem:[#allocation2] sm:$0xff]
        %v2259 = vld [vmem:[#allocation2 + $0x8] sm:$0xff]
        %v2260 = vld [vmem:[#allocation2 + $0x10] sm:$0xff]
        %v2261 = vld [vmem:[#allocation2 + $0x20] sm:$0xff]
        %v2262 = vld [vmem:[#allocation2 + $0x28] sm:$0xff]
        %v2263 = vld [vmem:[#allocation2 + $0x30] sm:$0xff]
        %v2264 = vld [vmem:[#allocation8] ss:$8 sm:$0x3]
        %v2266 = vlaneseq
        %v2267 = vshrl.u32 %v2266, 7
        %v2268 = vsub.s32 0, %v2267
        %v2269 = vrot.slane %v2264, %v2268
        %v2270 = vlaneseq
        %v2271 = vshrl.u32 %v2270, 7
        %v2272 = vsub.s32 1, %v2271
        %v2273 = vrot.slane %v2264, %v2272
        %2274 = vrot.lane.b32.xlu0 %v2269, 55
        %v2275 = vpop.permute.xlu0 %2274
        %2276 = vrot.lane.b32.xlu0 %v2273, 55
        %v2277 = vpop.permute.xlu0 %2276
        %v2278 = vsel %vm346, %v2275, %v2277
        %v2282 = vmul.f32 %v2258, %v2275
        %v2283 = vmul.f32 %v2259, %v2278
        %v2284 = vmul.f32 %v2260, %v2277
        %v2285 = vmul.f32 %v2261, %v2275
        %v2286 = vmul.f32 %v2262, %v2278
        %v2287 = vmul.f32 %v2263, %v2277
        %2294 = vrot.lane.b32.xlu0 %v2282, 73
        %v2295 = vpop.permute.xlu0 %2294
        %2296 = vrot.lane.b32.xlu0 %v2283, 73
        %v2297 = vpop.permute.xlu0 %2296
        %2298 = vrot.lane.b32.xlu0 %v2284, 73
        %v2299 = vpop.permute.xlu0 %2298
        %2300 = vrot.lane.b32.xlu0 %v2285, 73
        %v2301 = vpop.permute.xlu0 %2300
        %2302 = vrot.lane.b32.xlu0 %v2286, 73
        %v2303 = vpop.permute.xlu0 %2302
        %2304 = vrot.lane.b32.xlu0 %v2287, 73
        %v2305 = vpop.permute.xlu0 %2304
        %v2306 = vsel %vm375, %v2295, %v2297
        %v2307 = vsel %vm375, %v2297, %v2299
        %v2308 = vsel %vm375, %v2301, %v2303
        %v2309 = vsel %vm375, %v2303, %v2305
        %2314 = vst [vmem:[#allocation3] sm:$0xff] %v2306
        %2315 = vst [vmem:[#allocation3 + $0x8] sm:$0xff] %v2307
        %2316 = vst [vmem:[#allocation3 + $0x10] sm:$0xff] %v2308
        %2317 = vst [vmem:[#allocation3 + $0x18] sm:$0xff] %v2309
        %v2318 = vld [vmem:[#allocation2] sm:$0xff]
        %v2319 = vld [vmem:[#allocation2 + $0x8] sm:$0xff]
        %v2320 = vld [vmem:[#allocation2 + $0x10] sm:$0xff]
        %v2321 = vld [vmem:[#allocation2 + $0x20] sm:$0xff]
        %v2322 = vld [vmem:[#allocation2 + $0x28] sm:$0xff]
        %v2323 = vld [vmem:[#allocation2 + $0x30] sm:$0xff]
        %v2324 = vld [vmem:[%s394] ss:$8 sm:$0x3]
        %v2326 = vlaneseq
        %v2327 = vshrl.u32 %v2326, 7
        %v2328 = vsub.s32 0, %v2327
        %v2329 = vrot.slane %v2324, %v2328
        %v2330 = vlaneseq
        %v2331 = vshrl.u32 %v2330, 7
        %v2332 = vsub.s32 1, %v2331
        %v2333 = vrot.slane %v2324, %v2332
        %2334 = vrot.lane.b32.xlu0 %v2329, 56
        %v2335 = vpop.permute.xlu0 %2334
        %2336 = vrot.lane.b32.xlu0 %v2333, 56
        %v2337 = vpop.permute.xlu0 %2336
        %v2338 = vsel %vm409, %v2335, %v2337
        %v2342 = vmul.f32 %v2318, %v2335
        %v2343 = vmul.f32 %v2319, %v2338
        %v2344 = vmul.f32 %v2320, %v2337
        %v2345 = vmul.f32 %v2321, %v2335
        %v2346 = vmul.f32 %v2322, %v2338
        %v2347 = vmul.f32 %v2323, %v2337
        %2354 = vrot.lane.b32.xlu0 %v2342, 72
        %v2355 = vpop.permute.xlu0 %2354
        %2356 = vrot.lane.b32.xlu0 %v2343, 72
        %v2357 = vpop.permute.xlu0 %2356
        %2358 = vrot.lane.b32.xlu0 %v2344, 72
        %v2359 = vpop.permute.xlu0 %2358
        %2360 = vrot.lane.b32.xlu0 %v2345, 72
        %v2361 = vpop.permute.xlu0 %2360
        %2362 = vrot.lane.b32.xlu0 %v2346, 72
        %v2363 = vpop.permute.xlu0 %2362
        %2364 = vrot.lane.b32.xlu0 %v2347, 72
        %v2365 = vpop.permute.xlu0 %2364
        %v2366 = vsel %vm438, %v2355, %v2357
        %v2367 = vsel %vm438, %v2357, %v2359
        %v2368 = vsel %vm438, %v2361, %v2363
        %v2369 = vsel %vm438, %v2363, %v2365
        %2374 = vst [vmem:[#allocation3 + $0x20] sm:$0xff] %v2366
        %2375 = vst [vmem:[#allocation3 + $0x28] sm:$0xff] %v2367
        %2376 = vst [vmem:[#allocation3 + $0x30] sm:$0xff] %v2368
        %2377 = vst [vmem:[#allocation3 + $0x38] sm:$0xff] %v2369
        %v2378 = vld [vmem:[#allocation2] sm:$0xff]
        %v2379 = vld [vmem:[#allocation2 + $0x8] sm:$0xff]
        %v2380 = vld [vmem:[#allocation2 + $0x10] sm:$0xff]
        %v2381 = vld [vmem:[#allocation2 + $0x20] sm:$0xff]
        %v2382 = vld [vmem:[#allocation2 + $0x28] sm:$0xff]
        %v2383 = vld [vmem:[#allocation2 + $0x30] sm:$0xff]
        %v2384 = vld [vmem:[%s457] ss:$8 sm:$0x3]
        %v2386 = vlaneseq
        %v2387 = vshrl.u32 %v2386, 7
        %v2388 = vsub.s32 0, %v2387
        %v2389 = vrot.slane %v2384, %v2388
        %v2390 = vlaneseq
        %v2391 = vshrl.u32 %v2390, 7
        %v2392 = vsub.s32 1, %v2391
        %v2393 = vrot.slane %v2384, %v2392
        %2394 = vrot.lane.b32.xlu0 %v2389, 57
        %v2395 = vpop.permute.xlu0 %2394
        %2396 = vrot.lane.b32.xlu0 %v2393, 57
        %v2397 = vpop.permute.xlu0 %2396
        %v2398 = vsel %vm472, %v2395, %v2397
        %v2402 = vmul.f32 %v2378, %v2395
        %v2403 = vmul.f32 %v2379, %v2398
        %v2404 = vmul.f32 %v2380, %v2397
        %v2405 = vmul.f32 %v2381, %v2395
        %v2406 = vmul.f32 %v2382, %v2398
        %v2407 = vmul.f32 %v2383, %v2397
        %2414 = vrot.lane.b32.xlu0 %v2402, 71
        %v2415 = vpop.permute.xlu0 %2414
        %2416 = vrot.lane.b32.xlu0 %v2403, 71
        %v2417 = vpop.permute.xlu0 %2416
        %2418 = vrot.lane.b32.xlu0 %v2404, 71
        %v2419 = vpop.permute.xlu0 %2418
        %2420 = vrot.lane.b32.xlu0 %v2405, 71
        %v2421 = vpop.permute.xlu0 %2420
        %2422 = vrot.lane.b32.xlu0 %v2406, 71
        %v2423 = vpop.permute.xlu0 %2422
        %2424 = vrot.lane.b32.xlu0 %v2407, 71
        %v2425 = vpop.permute.xlu0 %2424
        %v2426 = vsel %vm501, %v2415, %v2417
        %v2427 = vsel %vm501, %v2417, %v2419
        %v2428 = vsel %vm501, %v2421, %v2423
        %v2429 = vsel %vm501, %v2423, %v2425
        %2434 = vst [vmem:[#allocation3 + $0x40] sm:$0xff] %v2426
        %2435 = vst [vmem:[#allocation3 + $0x48] sm:$0xff] %v2427
        %2436 = vst [vmem:[#allocation3 + $0x50] sm:$0xff] %v2428
        %2437 = vst [vmem:[#allocation3 + $0x58] sm:$0xff] %v2429
        %v2438 = vld [vmem:[#allocation2] sm:$0xff]
        %v2439 = vld [vmem:[#allocation2 + $0x8] sm:$0xff]
        %v2440 = vld [vmem:[#allocation2 + $0x10] sm:$0xff]
        %v2441 = vld [vmem:[#allocation2 + $0x20] sm:$0xff]
        %v2442 = vld [vmem:[#allocation2 + $0x28] sm:$0xff]
        %v2443 = vld [vmem:[#allocation2 + $0x30] sm:$0xff]
        %v2444 = vld [vmem:[%s520] ss:$8 sm:$0x3]
        %v2446 = vlaneseq
        %v2447 = vshrl.u32 %v2446, 7
        %v2448 = vsub.s32 0, %v2447
        %v2449 = vrot.slane %v2444, %v2448
        %v2450 = vlaneseq
        %v2451 = vshrl.u32 %v2450, 7
        %v2452 = vsub.s32 1, %v2451
        %v2453 = vrot.slane %v2444, %v2452
        %2454 = vrot.lane.b32.xlu0 %v2449, 63
        %v2455 = vpop.permute.xlu0 %2454
        %2456 = vrot.lane.b32.xlu0 %v2453, 63
        %v2457 = vpop.permute.xlu0 %2456
        %v2458 = vsel %vm535, %v2455, %v2457
        %v2462 = vmul.f32 %v2438, %v2455
        %v2463 = vmul.f32 %v2439, %v2458
        %v2464 = vmul.f32 %v2440, %v2457
        %v2465 = vmul.f32 %v2441, %v2455
        %v2466 = vmul.f32 %v2442, %v2458
        %v2467 = vmul.f32 %v2443, %v2457
        %2474 = vrot.lane.b32.xlu0 %v2462, 65
        %v2475 = vpop.permute.xlu0 %2474
        %2476 = vrot.lane.b32.xlu0 %v2463, 65
        %v2477 = vpop.permute.xlu0 %2476
        %2478 = vrot.lane.b32.xlu0 %v2464, 65
        %v2479 = vpop.permute.xlu0 %2478
        %2480 = vrot.lane.b32.xlu0 %v2465, 65
        %v2481 = vpop.permute.xlu0 %2480
        %2482 = vrot.lane.b32.xlu0 %v2466, 65
        %v2483 = vpop.permute.xlu0 %2482
        %2484 = vrot.lane.b32.xlu0 %v2467, 65
        %v2485 = vpop.permute.xlu0 %2484
        %v2486 = vsel %vm564, %v2475, %v2477
        %v2487 = vsel %vm564, %v2477, %v2479
        %v2488 = vsel %vm564, %v2481, %v2483
        %v2489 = vsel %vm564, %v2483, %v2485
        %2494 = vst [vmem:[#allocation3 + $0x60] sm:$0xff] %v2486
        %2495 = vst [vmem:[#allocation3 + $0x68] sm:$0xff] %v2487
        %2496 = vst [vmem:[#allocation3 + $0x70] sm:$0xff] %v2488
        %2497 = vst [vmem:[#allocation3 + $0x78] sm:$0xff] %v2489
        %v2498 = vld [vmem:[#allocation2] sm:$0xff]
        %v2499 = vld [vmem:[#allocation2 + $0x8] sm:$0xff]
        %v2500 = vld [vmem:[#allocation2 + $0x10] sm:$0xff]
        %v2501 = vld [vmem:[#allocation2 + $0x20] sm:$0xff]
        %v2502 = vld [vmem:[#allocation2 + $0x28] sm:$0xff]
        %v2503 = vld [vmem:[#allocation2 + $0x30] sm:$0xff]
        %v2504 = vld [vmem:[%s583] ss:$8 sm:$0x3]
        %v2506 = vlaneseq
        %v2507 = vshrl.u32 %v2506, 7
        %v2508 = vsub.s32 0, %v2507
        %v2509 = vrot.slane %v2504, %v2508
        %v2510 = vlaneseq
        %v2511 = vshrl.u32 %v2510, 7
        %v2512 = vsub.s32 1, %v2511
        %v2513 = vrot.slane %v2504, %v2512
        %2514 = vrot.lane.b32.xlu0 %v2509, 64
        %v2515 = vpop.permute.xlu0 %2514
        %2516 = vrot.lane.b32.xlu0 %v2513, 64
        %v2517 = vpop.permute.xlu0 %2516
        %v2518 = vsel %vm598, %v2515, %v2517
        %v2522 = vmul.f32 %v2498, %v2515
        %v2523 = vmul.f32 %v2499, %v2518
        %v2524 = vmul.f32 %v2500, %v2517
        %v2525 = vmul.f32 %v2501, %v2515
        %v2526 = vmul.f32 %v2502, %v2518
        %v2527 = vmul.f32 %v2503, %v2517
        %2534 = vrot.lane.b32.xlu0 %v2522, 64
        %v2535 = vpop.permute.xlu0 %2534
        %2536 = vrot.lane.b32.xlu0 %v2523, 64
        %v2537 = vpop.permute.xlu0 %2536
        %2538 = vrot.lane.b32.xlu0 %v2524, 64
        %v2539 = vpop.permute.xlu0 %2538
        %2540 = vrot.lane.b32.xlu0 %v2525, 64
        %v2541 = vpop.permute.xlu0 %2540
        %2542 = vrot.lane.b32.xlu0 %v2526, 64
        %v2543 = vpop.permute.xlu0 %2542
        %2544 = vrot.lane.b32.xlu0 %v2527, 64
        %v2545 = vpop.permute.xlu0 %2544
        %v2546 = vsel %vm598, %v2535, %v2537
        %v2547 = vsel %vm598, %v2537, %v2539
        %v2548 = vsel %vm598, %v2541, %v2543
        %v2549 = vsel %vm598, %v2543, %v2545
        %2554 = vst [vmem:[#allocation3 + $0x80] sm:$0xff] %v2546
        %2555 = vst [vmem:[#allocation3 + $0x88] sm:$0xff] %v2547
        %2556 = vst [vmem:[#allocation3 + $0x90] sm:$0xff] %v2548
        %2557 = vst [vmem:[#allocation3 + $0x98] sm:$0xff] %v2549
        %v2558 = vld [vmem:[#allocation2] sm:$0xff]
        %v2559 = vld [vmem:[#allocation2 + $0x8] sm:$0xff]
        %v2560 = vld [vmem:[#allocation2 + $0x10] sm:$0xff]
        %v2561 = vld [vmem:[#allocation2 + $0x20] sm:$0xff]
        %v2562 = vld [vmem:[#allocation2 + $0x28] sm:$0xff]
        %v2563 = vld [vmem:[#allocation2 + $0x30] sm:$0xff]
        %v2564 = vld [vmem:[%s645] ss:$8 sm:$0x3]
        %v2566 = vlaneseq
        %v2567 = vshrl.u32 %v2566, 7
        %v2568 = vsub.s32 0, %v2567
        %v2569 = vrot.slane %v2564, %v2568
        %v2570 = vlaneseq
        %v2571 = vshrl.u32 %v2570, 7
        %v2572 = vsub.s32 1, %v2571
        %v2573 = vrot.slane %v2564, %v2572
        %2574 = vrot.lane.b32.xlu0 %v2569, 65
        %v2575 = vpop.permute.xlu0 %2574
        %2576 = vrot.lane.b32.xlu0 %v2573, 65
        %v2577 = vpop.permute.xlu0 %2576
        %v2578 = vsel %vm564, %v2575, %v2577
        %v2582 = vmul.f32 %v2558, %v2575
        %v2583 = vmul.f32 %v2559, %v2578
        %v2584 = vmul.f32 %v2560, %v2577
        %v2585 = vmul.f32 %v2561, %v2575
        %v2586 = vmul.f32 %v2562, %v2578
        %v2587 = vmul.f32 %v2563, %v2577
        %2594 = vrot.lane.b32.xlu0 %v2582, 63
        %v2595 = vpop.permute.xlu0 %2594
        %2596 = vrot.lane.b32.xlu0 %v2583, 63
        %v2597 = vpop.permute.xlu0 %2596
        %2598 = vrot.lane.b32.xlu0 %v2584, 63
        %v2599 = vpop.permute.xlu0 %2598
        %2600 = vrot.lane.b32.xlu0 %v2585, 63
        %v2601 = vpop.permute.xlu0 %2600
        %2602 = vrot.lane.b32.xlu0 %v2586, 63
        %v2603 = vpop.permute.xlu0 %2602
        %2604 = vrot.lane.b32.xlu0 %v2587, 63
        %v2605 = vpop.permute.xlu0 %2604
        %v2606 = vsel %vm535, %v2595, %v2597
        %v2607 = vsel %vm535, %v2597, %v2599
        %v2608 = vsel %vm535, %v2601, %v2603
        %v2609 = vsel %vm535, %v2603, %v2605
        %2614 = vst [vmem:[#allocation3 + $0xa0] sm:$0xff] %v2606
        %2615 = vst [vmem:[#allocation3 + $0xa8] sm:$0xff] %v2607
        %2616 = vst [vmem:[#allocation3 + $0xb0] sm:$0xff] %v2608
        %2617 = vst [vmem:[#allocation3 + $0xb8] sm:$0xff] %v2609
        %v2618 = vld [vmem:[#allocation2] sm:$0xff]
        %v2619 = vld [vmem:[#allocation2 + $0x8] sm:$0xff]
        %v2620 = vld [vmem:[#allocation2 + $0x10] sm:$0xff]
        %v2621 = vld [vmem:[#allocation2 + $0x20] sm:$0xff]
        %v2622 = vld [vmem:[#allocation2 + $0x28] sm:$0xff]
        %v2623 = vld [vmem:[#allocation2 + $0x30] sm:$0xff]
        %v2624 = vld [vmem:[%s706] ss:$8 sm:$0x3]
        %v2626 = vlaneseq
        %v2627 = vshrl.u32 %v2626, 7
        %v2628 = vsub.s32 0, %v2627
        %v2629 = vrot.slane %v2624, %v2628
        %v2630 = vlaneseq
        %v2631 = vshrl.u32 %v2630, 7
        %v2632 = vsub.s32 1, %v2631
        %v2633 = vrot.slane %v2624, %v2632
        %2634 = vrot.lane.b32.xlu0 %v2629, 71
        %v2635 = vpop.permute.xlu0 %2634
        %2636 = vrot.lane.b32.xlu0 %v2633, 71
        %v2637 = vpop.permute.xlu0 %2636
        %v2638 = vsel %vm501, %v2635, %v2637
        %v2642 = vmul.f32 %v2618, %v2635
        %v2643 = vmul.f32 %v2619, %v2638
        %v2644 = vmul.f32 %v2620, %v2637
        %v2645 = vmul.f32 %v2621, %v2635
        %v2646 = vmul.f32 %v2622, %v2638
        %v2647 = vmul.f32 %v2623, %v2637
        %2654 = vrot.lane.b32.xlu0 %v2642, 57
        %v2655 = vpop.permute.xlu0 %2654
        %2656 = vrot.lane.b32.xlu0 %v2643, 57
        %v2657 = vpop.permute.xlu0 %2656
        %2658 = vrot.lane.b32.xlu0 %v2644, 57
        %v2659 = vpop.permute.xlu0 %2658
        %2660 = vrot.lane.b32.xlu0 %v2645, 57
        %v2661 = vpop.permute.xlu0 %2660
        %2662 = vrot.lane.b32.xlu0 %v2646, 57
        %v2663 = vpop.permute.xlu0 %2662
        %2664 = vrot.lane.b32.xlu0 %v2647, 57
        %v2665 = vpop.permute.xlu0 %2664
        %v2666 = vsel %vm472, %v2655, %v2657
        %v2667 = vsel %vm472, %v2657, %v2659
        %v2668 = vsel %vm472, %v2661, %v2663
        %v2669 = vsel %vm472, %v2663, %v2665
        %2674 = vst [vmem:[#allocation3 + $0xc0] sm:$0xff] %v2666
        %2675 = vst [vmem:[#allocation3 + $0xc8] sm:$0xff] %v2667
        %2676 = vst [vmem:[#allocation3 + $0xd0] sm:$0xff] %v2668
        %2677 = vst [vmem:[#allocation3 + $0xd8] sm:$0xff] %v2669
        %v2678 = vld [vmem:[#allocation2] sm:$0xff]
        %v2679 = vld [vmem:[#allocation2 + $0x8] sm:$0xff]
        %v2680 = vld [vmem:[#allocation2 + $0x10] sm:$0xff]
        %v2681 = vld [vmem:[#allocation2 + $0x20] sm:$0xff]
        %v2682 = vld [vmem:[#allocation2 + $0x28] sm:$0xff]
        %v2683 = vld [vmem:[#allocation2 + $0x30] sm:$0xff]
        %v2684 = vld [vmem:[%s767] ss:$8 sm:$0x3]
        %v2686 = vlaneseq
        %v2687 = vshrl.u32 %v2686, 7
        %v2688 = vsub.s32 0, %v2687
        %v2689 = vrot.slane %v2684, %v2688
        %v2690 = vlaneseq
        %v2691 = vshrl.u32 %v2690, 7
        %v2692 = vsub.s32 1, %v2691
        %v2693 = vrot.slane %v2684, %v2692
        %2694 = vrot.lane.b32.xlu0 %v2689, 72
        %v2695 = vpop.permute.xlu0 %2694
        %2696 = vrot.lane.b32.xlu0 %v2693, 72
        %v2697 = vpop.permute.xlu0 %2696
        %v2698 = vsel %vm438, %v2695, %v2697
        %v2702 = vmul.f32 %v2678, %v2695
        %v2703 = vmul.f32 %v2679, %v2698
        %v2704 = vmul.f32 %v2680, %v2697
        %v2705 = vmul.f32 %v2681, %v2695
        %v2706 = vmul.f32 %v2682, %v2698
        %v2707 = vmul.f32 %v2683, %v2697
        %2714 = vrot.lane.b32.xlu0 %v2702, 56
        %v2715 = vpop.permute.xlu0 %2714
        %2716 = vrot.lane.b32.xlu0 %v2703, 56
        %v2717 = vpop.permute.xlu0 %2716
        %2718 = vrot.lane.b32.xlu0 %v2704, 56
        %v2719 = vpop.permute.xlu0 %2718
        %2720 = vrot.lane.b32.xlu0 %v2705, 56
        %v2721 = vpop.permute.xlu0 %2720
        %2722 = vrot.lane.b32.xlu0 %v2706, 56
        %v2723 = vpop.permute.xlu0 %2722
        %2724 = vrot.lane.b32.xlu0 %v2707, 56
        %v2725 = vpop.permute.xlu0 %2724
        %v2726 = vsel %vm409, %v2715, %v2717
        %v2727 = vsel %vm409, %v2717, %v2719
        %v2728 = vsel %vm409, %v2721, %v2723
        %v2729 = vsel %vm409, %v2723, %v2725
        %2734 = vst [vmem:[#allocation3 + $0xe0] sm:$0xff] %v2726
        %2735 = vst [vmem:[#allocation3 + $0xe8] sm:$0xff] %v2727
        %2736 = vst [vmem:[#allocation3 + $0xf0] sm:$0xff] %v2728
        %2737 = vst [vmem:[#allocation3 + $0xf8] sm:$0xff] %v2729
        %v2738 = vld [vmem:[#allocation2] sm:$0xff]
        %v2739 = vld [vmem:[#allocation2 + $0x8] sm:$0xff]
        %v2740 = vld [vmem:[#allocation2 + $0x10] sm:$0xff]
        %v2741 = vld [vmem:[#allocation2 + $0x20] sm:$0xff]
        %v2742 = vld [vmem:[#allocation2 + $0x28] sm:$0xff]
        %v2743 = vld [vmem:[#allocation2 + $0x30] sm:$0xff]
        %v2744 = vld [vmem:[%s828] ss:$8 sm:$0x3]
        %v2746 = vlaneseq
        %v2747 = vshrl.u32 %v2746, 7
        %v2748 = vsub.s32 0, %v2747
        %v2749 = vrot.slane %v2744, %v2748
        %v2750 = vlaneseq
        %v2751 = vshrl.u32 %v2750, 7
        %v2752 = vsub.s32 1, %v2751
        %v2753 = vrot.slane %v2744, %v2752
        %2754 = vrot.lane.b32.xlu0 %v2749, 73
        %v2755 = vpop.permute.xlu0 %2754
        %2756 = vrot.lane.b32.xlu0 %v2753, 73
        %v2757 = vpop.permute.xlu0 %2756
        %v2758 = vsel %vm375, %v2755, %v2757
        %v2762 = vmul.f32 %v2738, %v2755
        %v2763 = vmul.f32 %v2739, %v2758
        %v2764 = vmul.f32 %v2740, %v2757
        %v2765 = vmul.f32 %v2741, %v2755
        %v2766 = vmul.f32 %v2742, %v2758
        %v2767 = vmul.f32 %v2743, %v2757
        %2774 = vrot.lane.b32.xlu0 %v2762, 55
        %v2775 = vpop.permute.xlu0 %2774
        %2776 = vrot.lane.b32.xlu0 %v2763, 55
        %v2777 = vpop.permute.xlu0 %2776
        %2778 = vrot.lane.b32.xlu0 %v2764, 55
        %v2779 = vpop.permute.xlu0 %2778
        %2780 = vrot.lane.b32.xlu0 %v2765, 55
        %v2781 = vpop.permute.xlu0 %2780
        %2782 = vrot.lane.b32.xlu0 %v2766, 55
        %v2783 = vpop.permute.xlu0 %2782
        %2784 = vrot.lane.b32.xlu0 %v2767, 55
        %v2785 = vpop.permute.xlu0 %2784
        %v2786 = vsel %vm346, %v2775, %v2777
        %v2787 = vsel %vm346, %v2777, %v2779
        %v2788 = vsel %vm346, %v2781, %v2783
        %v2789 = vsel %vm346, %v2783, %v2785
        %2794 = vst [vmem:[#allocation3 + $0x100] sm:$0xff] %v2786
        %2795 = vst [vmem:[#allocation3 + $0x108] sm:$0xff] %v2787
        %2796 = vst [vmem:[#allocation3 + $0x110] sm:$0xff] %v2788
        %2797 = vst [vmem:[#allocation3 + $0x118] sm:$0xff] %v2789
        %v2798 = vld [vmem:[#allocation2] sm:$0xff]
        %v2799 = vld [vmem:[#allocation2 + $0x8] sm:$0xff]
        %v2800 = vld [vmem:[#allocation2 + $0x10] sm:$0xff]
        %v2801 = vld [vmem:[#allocation2 + $0x20] sm:$0xff]
        %v2802 = vld [vmem:[#allocation2 + $0x28] sm:$0xff]
        %v2803 = vld [vmem:[#allocation2 + $0x30] sm:$0xff]
        %v2804 = vld [vmem:[%s889] ss:$8 sm:$0x3]
        %v2806 = vlaneseq
        %v2807 = vshrl.u32 %v2806, 7
        %v2808 = vsub.s32 0, %v2807
        %v2809 = vrot.slane %v2804, %v2808
        %v2810 = vlaneseq
        %v2811 = vshrl.u32 %v2810, 7
        %v2812 = vsub.s32 1, %v2811
        %v2813 = vrot.slane %v2804, %v2812
        %2814 = vrot.lane.b32.xlu0 %v2809, 119
        %v2815 = vpop.permute.xlu0 %2814
        %2816 = vrot.lane.b32.xlu0 %v2813, 119
        %v2817 = vpop.permute.xlu0 %2816
        %v2818 = vsel %vm904, %v2815, %v2817
        %v2822 = vmul.f32 %v2798, %v2815
        %v2823 = vmul.f32 %v2799, %v2818
        %v2824 = vmul.f32 %v2800, %v2817
        %v2825 = vmul.f32 %v2801, %v2815
        %v2826 = vmul.f32 %v2802, %v2818
        %v2827 = vmul.f32 %v2803, %v2817
        %2834 = vrot.lane.b32.xlu0 %v2822, 9
        %v2835 = vpop.permute.xlu0 %2834
        %2836 = vrot.lane.b32.xlu0 %v2823, 9
        %v2837 = vpop.permute.xlu0 %2836
        %2838 = vrot.lane.b32.xlu0 %v2824, 9
        %v2839 = vpop.permute.xlu0 %2838
        %2840 = vrot.lane.b32.xlu0 %v2825, 9
        %v2841 = vpop.permute.xlu0 %2840
        %2842 = vrot.lane.b32.xlu0 %v2826, 9
        %v2843 = vpop.permute.xlu0 %2842
        %2844 = vrot.lane.b32.xlu0 %v2827, 9
        %v2845 = vpop.permute.xlu0 %2844
        %v2846 = vsel %vm933, %v2835, %v2837
        %v2847 = vsel %vm933, %v2837, %v2839
        %v2848 = vsel %vm933, %v2841, %v2843
        %v2849 = vsel %vm933, %v2843, %v2845
        %2854 = vst [vmem:[#allocation3 + $0x120] sm:$0xff] %v2846
        %2855 = vst [vmem:[#allocation3 + $0x128] sm:$0xff] %v2847
        %2856 = vst [vmem:[#allocation3 + $0x130] sm:$0xff] %v2848
        %2857 = vst [vmem:[#allocation3 + $0x138] sm:$0xff] %v2849
        %v2858 = vld [vmem:[#allocation2] sm:$0xff]
        %v2859 = vld [vmem:[#allocation2 + $0x8] sm:$0xff]
        %v2860 = vld [vmem:[#allocation2 + $0x10] sm:$0xff]
        %v2861 = vld [vmem:[#allocation2 + $0x20] sm:$0xff]
        %v2862 = vld [vmem:[#allocation2 + $0x28] sm:$0xff]
        %v2863 = vld [vmem:[#allocation2 + $0x30] sm:$0xff]
        %v2864 = vld [vmem:[%s952] ss:$8 sm:$0x3]
        %v2866 = vlaneseq
        %v2867 = vshrl.u32 %v2866, 7
        %v2868 = vsub.s32 0, %v2867
        %v2869 = vrot.slane %v2864, %v2868
        %v2870 = vlaneseq
        %v2871 = vshrl.u32 %v2870, 7
        %v2872 = vsub.s32 1, %v2871
        %v2873 = vrot.slane %v2864, %v2872
        %2874 = vrot.lane.b32.xlu0 %v2869, 120
        %v2875 = vpop.permute.xlu0 %2874
        %2876 = vrot.lane.b32.xlu0 %v2873, 120
        %v2877 = vpop.permute.xlu0 %2876
        %v2878 = vsel %vm967, %v2875, %v2877
        %v2882 = vmul.f32 %v2858, %v2875
        %v2883 = vmul.f32 %v2859, %v2878
        %v2884 = vmul.f32 %v2860, %v2877
        %v2885 = vmul.f32 %v2861, %v2875
        %v2886 = vmul.f32 %v2862, %v2878
        %v2887 = vmul.f32 %v2863, %v2877
        %2894 = vrot.lane.b32.xlu0 %v2882, 8
        %v2895 = vpop.permute.xlu0 %2894
        %2896 = vrot.lane.b32.xlu0 %v2883, 8
        %v2897 = vpop.permute.xlu0 %2896
        %2898 = vrot.lane.b32.xlu0 %v2884, 8
        %v2899 = vpop.permute.xlu0 %2898
        %2900 = vrot.lane.b32.xlu0 %v2885, 8
        %v2901 = vpop.permute.xlu0 %2900
        %2902 = vrot.lane.b32.xlu0 %v2886, 8
        %v2903 = vpop.permute.xlu0 %2902
        %2904 = vrot.lane.b32.xlu0 %v2887, 8
        %v2905 = vpop.permute.xlu0 %2904
        %v2906 = vsel %vm996, %v2895, %v2897
        %v2907 = vsel %vm996, %v2897, %v2899
        %v2908 = vsel %vm996, %v2901, %v2903
        %v2909 = vsel %vm996, %v2903, %v2905
        %2914 = vst [vmem:[#allocation3 + $0x140] sm:$0xff] %v2906
        %2915 = vst [vmem:[#allocation3 + $0x148] sm:$0xff] %v2907
        %2916 = vst [vmem:[#allocation3 + $0x150] sm:$0xff] %v2908
        %2917 = vst [vmem:[#allocation3 + $0x158] sm:$0xff] %v2909
        %v2918 = vld [vmem:[#allocation2] sm:$0xff]
        %v2919 = vld [vmem:[#allocation2 + $0x8] sm:$0xff]
        %v2920 = vld [vmem:[#allocation2 + $0x10] sm:$0xff]
        %v2921 = vld [vmem:[#allocation2 + $0x20] sm:$0xff]
        %v2922 = vld [vmem:[#allocation2 + $0x28] sm:$0xff]
        %v2923 = vld [vmem:[#allocation2 + $0x30] sm:$0xff]
        %v2924 = vld [vmem:[%s1015] ss:$8 sm:$0x3]
        %v2926 = vlaneseq
        %v2927 = vshrl.u32 %v2926, 7
        %v2928 = vsub.s32 0, %v2927
        %v2929 = vrot.slane %v2924, %v2928
        %v2930 = vlaneseq
        %v2931 = vshrl.u32 %v2930, 7
        %v2932 = vsub.s32 1, %v2931
        %v2933 = vrot.slane %v2924, %v2932
        %2934 = vrot.lane.b32.xlu0 %v2929, 121
        %v2935 = vpop.permute.xlu0 %2934
        %2936 = vrot.lane.b32.xlu0 %v2933, 121
        %v2937 = vpop.permute.xlu0 %2936
        %v2938 = vsel %vm1030, %v2935, %v2937
        %v2942 = vmul.f32 %v2918, %v2935
        %v2943 = vmul.f32 %v2919, %v2938
        %v2944 = vmul.f32 %v2920, %v2937
        %v2945 = vmul.f32 %v2921, %v2935
        %v2946 = vmul.f32 %v2922, %v2938
        %v2947 = vmul.f32 %v2923, %v2937
        %2954 = vrot.lane.b32.xlu0 %v2942, 7
        %v2955 = vpop.permute.xlu0 %2954
        %2956 = vrot.lane.b32.xlu0 %v2943, 7
        %v2957 = vpop.permute.xlu0 %2956
        %2958 = vrot.lane.b32.xlu0 %v2944, 7
        %v2959 = vpop.permute.xlu0 %2958
        %2960 = vrot.lane.b32.xlu0 %v2945, 7
        %v2961 = vpop.permute.xlu0 %2960
        %2962 = vrot.lane.b32.xlu0 %v2946, 7
        %v2963 = vpop.permute.xlu0 %2962
        %2964 = vrot.lane.b32.xlu0 %v2947, 7
        %v2965 = vpop.permute.xlu0 %2964
        %v2966 = vsel %vm1059, %v2955, %v2957
        %v2967 = vsel %vm1059, %v2957, %v2959
        %v2968 = vsel %vm1059, %v2961, %v2963
        %v2969 = vsel %vm1059, %v2963, %v2965
        %2974 = vst [vmem:[#allocation3 + $0x160] sm:$0xff] %v2966
        %2975 = vst [vmem:[#allocation3 + $0x168] sm:$0xff] %v2967
        %2976 = vst [vmem:[#allocation3 + $0x170] sm:$0xff] %v2968
        %2977 = vst [vmem:[#allocation3 + $0x178] sm:$0xff] %v2969
        %v2978 = vld [vmem:[#allocation2] sm:$0xff]
        %v2979 = vld [vmem:[#allocation2 + $0x8] sm:$0xff]
        %v2980 = vld [vmem:[#allocation2 + $0x10] sm:$0xff]
        %v2981 = vld [vmem:[#allocation2 + $0x20] sm:$0xff]
        %v2982 = vld [vmem:[#allocation2 + $0x28] sm:$0xff]
        %v2983 = vld [vmem:[#allocation2 + $0x30] sm:$0xff]
        %v2984 = vld [vmem:[%s1078] ss:$8 sm:$0x3]
        %v2986 = vlaneseq
        %v2987 = vshrl.u32 %v2986, 7
        %v2988 = vsub.s32 0, %v2987
        %v2989 = vrot.slane %v2984, %v2988
        %v2990 = vlaneseq
        %v2991 = vshrl.u32 %v2990, 7
        %v2992 = vsub.s32 1, %v2991
        %v2993 = vrot.slane %v2984, %v2992
        %2994 = vrot.lane.b32.xlu0 %v2989, 127
        %v2995 = vpop.permute.xlu0 %2994
        %2996 = vrot.lane.b32.xlu0 %v2993, 127
        %v2997 = vpop.permute.xlu0 %2996
        %v2998 = vsel %vm1093, %v2995, %v2997
        %v3002 = vmul.f32 %v2978, %v2995
        %v3003 = vmul.f32 %v2979, %v2998
        %v3004 = vmul.f32 %v2980, %v2997
        %v3005 = vmul.f32 %v2981, %v2995
        %v3006 = vmul.f32 %v2982, %v2998
        %v3007 = vmul.f32 %v2983, %v2997
        %3014 = vrot.lane.b32.xlu0 %v3002, 1
        %v3015 = vpop.permute.xlu0 %3014
        %3016 = vrot.lane.b32.xlu0 %v3003, 1
        %v3017 = vpop.permute.xlu0 %3016
        %3018 = vrot.lane.b32.xlu0 %v3004, 1
        %v3019 = vpop.permute.xlu0 %3018
        %3020 = vrot.lane.b32.xlu0 %v3005, 1
        %v3021 = vpop.permute.xlu0 %3020
        %3022 = vrot.lane.b32.xlu0 %v3006, 1
        %v3023 = vpop.permute.xlu0 %3022
        %3024 = vrot.lane.b32.xlu0 %v3007, 1
        %v3025 = vpop.permute.xlu0 %3024
        %v3026 = vsel %vm1122, %v3015, %v3017
        %v3027 = vsel %vm1122, %v3017, %v3019
        %v3028 = vsel %vm1122, %v3021, %v3023
        %v3029 = vsel %vm1122, %v3023, %v3025
        %3034 = vst [vmem:[#allocation3 + $0x180] sm:$0xff] %v3026
        %3035 = vst [vmem:[#allocation3 + $0x188] sm:$0xff] %v3027
        %3036 = vst [vmem:[#allocation3 + $0x190] sm:$0xff] %v3028
        %3037 = vst [vmem:[#allocation3 + $0x198] sm:$0xff] %v3029
        %v3038 = vld [vmem:[#allocation2 + $0x8] sm:$0xff]
        %v3039 = vld [vmem:[#allocation2 + $0x10] sm:$0xff]
        %v3040 = vld [vmem:[#allocation2 + $0x28] sm:$0xff]
        %v3041 = vld [vmem:[#allocation2 + $0x30] sm:$0xff]
        %3042 = vst [vmem:[#allocation3 + $0x1a0] sm:$0xff] %v3038
        %3043 = vst [vmem:[#allocation3 + $0x1a8] sm:$0xff] %v3039
        %3044 = vst [vmem:[#allocation3 + $0x1b0] sm:$0xff] %v3040
        %3045 = vst [vmem:[#allocation3 + $0x1b8] sm:$0xff] %v3041
        %v3046 = vld [vmem:[#allocation2 + $0x8] sm:$0xff]
        %v3047 = vld [vmem:[#allocation2 + $0x10] sm:$0xff]
        %v3048 = vld [vmem:[#allocation2 + $0x18] sm:$0xff]
        %v3049 = vld [vmem:[#allocation2 + $0x28] sm:$0xff]
        %v3050 = vld [vmem:[#allocation2 + $0x30] sm:$0xff]
        %v3051 = vld [vmem:[#allocation2 + $0x38] sm:$0xff]
        %v3052 = vld [vmem:[%s1149] ss:$8 sm:$0x3]
        %v3054 = vlaneseq
        %v3055 = vshrl.u32 %v3054, 7
        %v3056 = vsub.s32 0, %v3055
        %v3057 = vrot.slane %v3052, %v3056
        %v3058 = vlaneseq
        %v3059 = vshrl.u32 %v3058, 7
        %v3060 = vsub.s32 1, %v3059
        %v3061 = vrot.slane %v3052, %v3060
        %3062 = vrot.lane.b32.xlu0 %v3057, 1
        %v3063 = vpop.permute.xlu0 %3062
        %3064 = vrot.lane.b32.xlu0 %v3061, 1
        %v3065 = vpop.permute.xlu0 %3064
        %v3066 = vsel %vm1122, %v3063, %v3065
        %v3070 = vmul.f32 %v3046, %v3063
        %v3071 = vmul.f32 %v3047, %v3066
        %v3072 = vmul.f32 %v3048, %v3065
        %v3073 = vmul.f32 %v3049, %v3063
        %v3074 = vmul.f32 %v3050, %v3066
        %v3075 = vmul.f32 %v3051, %v3065
        %3082 = vrot.lane.b32.xlu0 %v3070, 127
        %v3083 = vpop.permute.xlu0 %3082
        %3084 = vrot.lane.b32.xlu0 %v3071, 127
        %v3085 = vpop.permute.xlu0 %3084
        %3086 = vrot.lane.b32.xlu0 %v3072, 127
        %v3087 = vpop.permute.xlu0 %3086
        %3088 = vrot.lane.b32.xlu0 %v3073, 127
        %v3089 = vpop.permute.xlu0 %3088
        %3090 = vrot.lane.b32.xlu0 %v3074, 127
        %v3091 = vpop.permute.xlu0 %3090
        %3092 = vrot.lane.b32.xlu0 %v3075, 127
        %v3093 = vpop.permute.xlu0 %3092
        %v3094 = vsel %vm1093, %v3083, %v3085
        %v3095 = vsel %vm1093, %v3085, %v3087
        %v3096 = vsel %vm1093, %v3089, %v3091
        %v3097 = vsel %vm1093, %v3091, %v3093
        %3102 = vst [vmem:[#allocation3 + $0x1c0] sm:$0xff] %v3094
        %3103 = vst [vmem:[#allocation3 + $0x1c8] sm:$0xff] %v3095
        %3104 = vst [vmem:[#allocation3 + $0x1d0] sm:$0xff] %v3096
        %3105 = vst [vmem:[#allocation3 + $0x1d8] sm:$0xff] %v3097
        %v3106 = vld [vmem:[#allocation2 + $0x8] sm:$0xff]
        %v3107 = vld [vmem:[#allocation2 + $0x10] sm:$0xff]
        %v3108 = vld [vmem:[#allocation2 + $0x18] sm:$0xff]
        %v3109 = vld [vmem:[#allocation2 + $0x28] sm:$0xff]
        %v3110 = vld [vmem:[#allocation2 + $0x30] sm:$0xff]
        %v3111 = vld [vmem:[#allocation2 + $0x38] sm:$0xff]
        %v3112 = vld [vmem:[%s1210] ss:$8 sm:$0x3]
        %v3114 = vlaneseq
        %v3115 = vshrl.u32 %v3114, 7
        %v3116 = vsub.s32 0, %v3115
        %v3117 = vrot.slane %v3112, %v3116
        %v3118 = vlaneseq
        %v3119 = vshrl.u32 %v3118, 7
        %v3120 = vsub.s32 1, %v3119
        %v3121 = vrot.slane %v3112, %v3120
        %3122 = vrot.lane.b32.xlu0 %v3117, 7
        %v3123 = vpop.permute.xlu0 %3122
        %3124 = vrot.lane.b32.xlu0 %v3121, 7
        %v3125 = vpop.permute.xlu0 %3124
        %v3126 = vsel %vm1059, %v3123, %v3125
        %v3130 = vmul.f32 %v3106, %v3123
        %v3131 = vmul.f32 %v3107, %v3126
        %v3132 = vmul.f32 %v3108, %v3125
        %v3133 = vmul.f32 %v3109, %v3123
        %v3134 = vmul.f32 %v3110, %v3126
        %v3135 = vmul.f32 %v3111, %v3125
        %3142 = vrot.lane.b32.xlu0 %v3130, 121
        %v3143 = vpop.permute.xlu0 %3142
        %3144 = vrot.lane.b32.xlu0 %v3131, 121
        %v3145 = vpop.permute.xlu0 %3144
        %3146 = vrot.lane.b32.xlu0 %v3132, 121
        %v3147 = vpop.permute.xlu0 %3146
        %3148 = vrot.lane.b32.xlu0 %v3133, 121
        %v3149 = vpop.permute.xlu0 %3148
        %3150 = vrot.lane.b32.xlu0 %v3134, 121
        %v3151 = vpop.permute.xlu0 %3150
        %3152 = vrot.lane.b32.xlu0 %v3135, 121
        %v3153 = vpop.permute.xlu0 %3152
        %v3154 = vsel %vm1030, %v3143, %v3145
        %v3155 = vsel %vm1030, %v3145, %v3147
        %v3156 = vsel %vm1030, %v3149, %v3151
        %v3157 = vsel %vm1030, %v3151, %v3153
        %3162 = vst [vmem:[#allocation3 + $0x1e0] sm:$0xff] %v3154
        %3163 = vst [vmem:[#allocation3 + $0x1e8] sm:$0xff] %v3155
        %3164 = vst [vmem:[#allocation3 + $0x1f0] sm:$0xff] %v3156
        %3165 = vst [vmem:[#allocation3 + $0x1f8] sm:$0xff] %v3157
        %v3166 = vld [vmem:[#allocation11] sm:$0xff]
        %v3167 = vld [vmem:[#allocation11 + $0x8] sm:$0xff]
        %v3168 = vld [vmem:[#allocation11 + $0x20] sm:$0xff]
        %v3169 = vld [vmem:[#allocation11 + $0x28] sm:$0xff]
        %v3170 = vld [vmem:[#allocation3] sm:$0xff]
        %v3171 = vld [vmem:[#allocation3 + $0x8] sm:$0xff]
        %v3172 = vld [vmem:[#allocation3 + $0x10] sm:$0xff]
        %v3173 = vld [vmem:[#allocation3 + $0x18] sm:$0xff]
        %v3174 = vld [vmem:[#allocation3 + $0x20] sm:$0xff]
        %v3175 = vld [vmem:[#allocation3 + $0x28] sm:$0xff]
        %v3176 = vld [vmem:[#allocation3 + $0x30] sm:$0xff]
        %v3177 = vld [vmem:[#allocation3 + $0x38] sm:$0xff]
        %v3178 = vld [vmem:[#allocation3 + $0x40] sm:$0xff]
        %v3179 = vld [vmem:[#allocation3 + $0x48] sm:$0xff]
        %v3180 = vld [vmem:[#allocation3 + $0x50] sm:$0xff]
        %v3181 = vld [vmem:[#allocation3 + $0x58] sm:$0xff]
        %v3182 = vld [vmem:[#allocation3 + $0x60] sm:$0xff]
        %v3183 = vld [vmem:[#allocation3 + $0x68] sm:$0xff]
        %v3184 = vld [vmem:[#allocation3 + $0x70] sm:$0xff]
        %v3185 = vld [vmem:[#allocation3 + $0x78] sm:$0xff]
        %v3186 = vld [vmem:[#allocation3 + $0x80] sm:$0xff]
        %v3187 = vld [vmem:[#allocation3 + $0x88] sm:$0xff]
        %v3188 = vld [vmem:[#allocation3 + $0x90] sm:$0xff]
        %v3189 = vld [vmem:[#allocation3 + $0x98] sm:$0xff]
        %v3190 = vld [vmem:[#allocation3 + $0xa0] sm:$0xff]
        %v3191 = vld [vmem:[#allocation3 + $0xa8] sm:$0xff]
        %v3192 = vld [vmem:[#allocation3 + $0xb0] sm:$0xff]
        %v3193 = vld [vmem:[#allocation3 + $0xb8] sm:$0xff]
        %v3194 = vld [vmem:[#allocation3 + $0xc0] sm:$0xff]
        %v3195 = vld [vmem:[#allocation3 + $0xc8] sm:$0xff]
        %v3196 = vld [vmem:[#allocation3 + $0xd0] sm:$0xff]
        %v3197 = vld [vmem:[#allocation3 + $0xd8] sm:$0xff]
        %v3198 = vld [vmem:[#allocation3 + $0xe0] sm:$0xff]
        %v3199 = vld [vmem:[#allocation3 + $0xe8] sm:$0xff]
        %v3200 = vld [vmem:[#allocation3 + $0xf0] sm:$0xff]
        %v3201 = vld [vmem:[#allocation3 + $0xf8] sm:$0xff]
        %v3202 = vld [vmem:[#allocation3 + $0x100] sm:$0xff]
        %v3203 = vld [vmem:[#allocation3 + $0x108] sm:$0xff]
        %v3204 = vld [vmem:[#allocation3 + $0x110] sm:$0xff]
        %v3205 = vld [vmem:[#allocation3 + $0x118] sm:$0xff]
        %v3206 = vld [vmem:[#allocation3 + $0x120] sm:$0xff]
        %v3207 = vld [vmem:[#allocation3 + $0x128] sm:$0xff]
        %v3208 = vld [vmem:[#allocation3 + $0x130] sm:$0xff]
        %v3209 = vld [vmem:[#allocation3 + $0x138] sm:$0xff]
        %v3210 = vld [vmem:[#allocation3 + $0x140] sm:$0xff]
        %v3211 = vld [vmem:[#allocation3 + $0x148] sm:$0xff]
        %v3212 = vld [vmem:[#allocation3 + $0x150] sm:$0xff]
        %v3213 = vld [vmem:[#allocation3 + $0x158] sm:$0xff]
        %v3214 = vld [vmem:[#allocation3 + $0x160] sm:$0xff]
        %v3215 = vld [vmem:[#allocation3 + $0x168] sm:$0xff]
        %v3216 = vld [vmem:[#allocation3 + $0x170] sm:$0xff]
        %v3217 = vld [vmem:[#allocation3 + $0x178] sm:$0xff]
        %v3218 = vld [vmem:[#allocation3 + $0x180] sm:$0xff]
        %v3219 = vld [vmem:[#allocation3 + $0x188] sm:$0xff]
        %v3220 = vld [vmem:[#allocation3 + $0x190] sm:$0xff]
        %v3221 = vld [vmem:[#allocation3 + $0x198] sm:$0xff]
        %v3222 = vld [vmem:[#allocation3 + $0x1a0] sm:$0xff]
        %v3223 = vld [vmem:[#allocation3 + $0x1a8] sm:$0xff]
        %v3224 = vld [vmem:[#allocation3 + $0x1b0] sm:$0xff]
        %v3225 = vld [vmem:[#allocation3 + $0x1b8] sm:$0xff]
        %v3226 = vld [vmem:[#allocation3 + $0x1c0] sm:$0xff]
        %v3227 = vld [vmem:[#allocation3 + $0x1c8] sm:$0xff]
        %v3228 = vld [vmem:[#allocation3 + $0x1d0] sm:$0xff]
        %v3229 = vld [vmem:[#allocation3 + $0x1d8] sm:$0xff]
        %v3230 = vld [vmem:[#allocation3 + $0x1e0] sm:$0xff]
        %v3231 = vld [vmem:[#allocation3 + $0x1e8] sm:$0xff]
        %v3232 = vld [vmem:[#allocation3 + $0x1f0] sm:$0xff]
        %v3233 = vld [vmem:[#allocation3 + $0x1f8] sm:$0xff]
        %3234 = vmatprep.subr.mxu0 %v3201
        %3235 = vmatpush1.msra.mxu0 %v3200
        %3236 = vmatprep.subr.mxu0 %v3199
        %3237 = vmatpush1.msra.mxu0 %v3198
        %3238 = vmatprep.subr.mxu0 %v3197
        %3239 = vmatpush1.msra.mxu0 %v3196
        %3240 = vmatprep.subr.mxu0 %v3195
        %3241 = vmatpush1.msra.mxu0 %v3194
        %3242 = vmatprep.subr.mxu0 %v3193
        %3243 = vmatpush1.msra.mxu0 %v3192
        %3244 = vmatprep.subr.mxu0 %v3191
        %3245 = vmatpush1.msra.mxu0 %v3190
        %3246 = vmatprep.subr.mxu0 %v3189
        %3247 = vmatpush1.msra.mxu0 %v3188
        %3248 = vmatprep.subr.mxu0 %v3187
        %3249 = vmatpush1.msra.mxu0 %v3186
        %3250 = vmatprep.subr.mxu0 %v3185
        %3251 = vmatpush1.msra.mxu0 %v3184
        %3252 = vmatprep.subr.mxu0 %v3183
        %3253 = vmatpush1.msra.mxu0 %v3182
        %3254 = vmatprep.subr.mxu0 %v3181
        %3255 = vmatpush1.msra.mxu0 %v3180
        %3256 = vmatprep.subr.mxu0 %v3179
        %3257 = vmatpush1.msra.mxu0 %v3178
        %3258 = vmatprep.subr.mxu0 %v3177
        %3259 = vmatpush1.msra.mxu0 %v3176
        %3260 = vmatprep.subr.mxu0 %v3175
        %3261 = vmatpush1.msra.mxu0 %v3174
        %3262 = vmatprep.subr.mxu0 %v3173
        %3263 = vmatpush1.msra.mxu0 %v3172
        %3264 = vmatprep.subr.mxu0 %v3171
        %3265 = vmatpush1.msra.mxu0 %v3170
        %3266 = vmatprep.subr.mxu0 %v3233
        %3267 = vmatpush2.msra.mxu0 %v3232
        %3268 = vmatprep.subr.mxu0 %v3231
        %3269 = vmatpush2.msra.mxu0 %v3230
        %3270 = vmatprep.subr.mxu0 %v3229
        %3271 = vmatpush2.msra.mxu0 %v3228
        %3272 = vmatprep.subr.mxu0 %v3227
        %3273 = vmatpush2.msra.mxu0 %v3226
        %3274 = vmatprep.subr.mxu0 %v3225
        %3275 = vmatpush2.msra.mxu0 %v3224
        %3276 = vmatprep.subr.mxu0 %v3223
        %3277 = vmatpush2.msra.mxu0 %v3222
        %3278 = vmatprep.subr.mxu0 %v3221
        %3279 = vmatpush2.msra.mxu0 %v3220
        %3280 = vmatprep.subr.mxu0 %v3219
        %3281 = vmatpush2.msra.mxu0 %v3218
        %3282 = vmatprep.subr.mxu0 %v3217
        %3283 = vmatpush2.msra.mxu0 %v3216
        %3284 = vmatprep.subr.mxu0 %v3215
        %3285 = vmatpush2.msra.mxu0 %v3214
        %3286 = vmatprep.subr.mxu0 %v3213
        %3287 = vmatpush2.msra.mxu0 %v3212
        %3288 = vmatprep.subr.mxu0 %v3211
        %3289 = vmatpush2.msra.mxu0 %v3210
        %3290 = vmatprep.subr.mxu0 %v3209
        %3291 = vmatpush2.msra.mxu0 %v3208
        %3292 = vmatprep.subr.mxu0 %v3207
        %3293 = vmatpush2.msra.mxu0 %v3206
        %3294 = vmatprep.subr.mxu0 %v3205
        %3295 = vmatpush2.msra.mxu0 %v3204
        %3296 = vmatprep.subr.mxu0 %v3203
        %3297 = vmatpush2.msra.mxu0 %v3202
        %3298 = vmatprep.mubr.f32.mxu0 %v3167
        %3299 = vmatmul.mubr.f32.gmra.mxu0 %v3166
        %v3300 = vpop.f32.mrf.mxu0
        %v3301 = vadd.f32 0.0, %v3300
        %v3302 = vpop.f32.mrf.mxu0
        %v3303 = vadd.f32 0.0, %v3302
        %3304 = vmatprep.mubr.f32.mxu0 %v3169
        %3305 = vmatmul.mubr.f32.gmra.mxu0 %v3168
        %v3306 = vpop.f32.mrf.mxu0
        %v3307 = vadd.f32 0.0, %v3306
        %v3308 = vpop.f32.mrf.mxu0
        %v3309 = vadd.f32 0.0, %v3308
        %3310 = vdwg.mxu0
        %3311 = vst [vmem:[#allocation4] sm:$0xff] %v3301
        %3312 = vst [vmem:[#allocation4 + $0x8] sm:$0xff] %v3303
        %3313 = vst [vmem:[#allocation4 + $0x10] sm:$0xff] %v3307
        %3314 = vst [vmem:[#allocation4 + $0x18] sm:$0xff] %v3309
        %v3315 = vld [vmem:[#allocation2 + $0x8] sm:$0xff]
        %v3316 = vld [vmem:[#allocation2 + $0x10] sm:$0xff]
        %v3317 = vld [vmem:[#allocation2 + $0x18] sm:$0xff]
        %v3318 = vld [vmem:[#allocation2 + $0x28] sm:$0xff]
        %v3319 = vld [vmem:[#allocation2 + $0x30] sm:$0xff]
        %v3320 = vld [vmem:[#allocation2 + $0x38] sm:$0xff]
        %v3321 = vld [vmem:[%s1420] ss:$8 sm:$0x3]
        %v3323 = vlaneseq
        %v3324 = vshrl.u32 %v3323, 7
        %v3325 = vsub.s32 0, %v3324
        %v3326 = vrot.slane %v3321, %v3325
        %v3327 = vlaneseq
        %v3328 = vshrl.u32 %v3327, 7
        %v3329 = vsub.s32 1, %v3328
        %v3330 = vrot.slane %v3321, %v3329
        %3331 = vrot.lane.b32.xlu0 %v3326, 8
        %v3332 = vpop.permute.xlu0 %3331
        %3333 = vrot.lane.b32.xlu0 %v3330, 8
        %v3334 = vpop.permute.xlu0 %3333
        %v3335 = vsel %vm996, %v3332, %v3334
        %v3339 = vmul.f32 %v3315, %v3332
        %v3340 = vmul.f32 %v3316, %v3335
        %v3341 = vmul.f32 %v3317, %v3334
        %v3342 = vmul.f32 %v3318, %v3332
        %v3343 = vmul.f32 %v3319, %v3335
        %v3344 = vmul.f32 %v3320, %v3334
        %3351 = vrot.lane.b32.xlu0 %v3339, 120
        %v3352 = vpop.permute.xlu0 %3351
        %3353 = vrot.lane.b32.xlu0 %v3340, 120
        %v3354 = vpop.permute.xlu0 %3353
        %3355 = vrot.lane.b32.xlu0 %v3341, 120
        %v3356 = vpop.permute.xlu0 %3355
        %3357 = vrot.lane.b32.xlu0 %v3342, 120
        %v3358 = vpop.permute.xlu0 %3357
        %3359 = vrot.lane.b32.xlu0 %v3343, 120
        %v3360 = vpop.permute.xlu0 %3359
        %3361 = vrot.lane.b32.xlu0 %v3344, 120
        %v3362 = vpop.permute.xlu0 %3361
        %v3363 = vsel %vm967, %v3352, %v3354
        %v3364 = vsel %vm967, %v3354, %v3356
        %v3365 = vsel %vm967, %v3358, %v3360
        %v3366 = vsel %vm967, %v3360, %v3362
        %3371 = vst [vmem:[%s1471] sm:$0xff] %v3363
        %3372 = vst [vmem:[%s1471 + $0x8] sm:$0xff] %v3364
        %3373 = vst [vmem:[%s1471 + $0x10] sm:$0xff] %v3365
        %3374 = vst [vmem:[%s1471 + $0x18] sm:$0xff] %v3366
        %v3375 = vld [vmem:[#allocation2 + $0x8] sm:$0xff]
        %v3376 = vld [vmem:[#allocation2 + $0x10] sm:$0xff]
        %v3377 = vld [vmem:[#allocation2 + $0x18] sm:$0xff]
        %v3378 = vld [vmem:[#allocation2 + $0x28] sm:$0xff]
        %v3379 = vld [vmem:[#allocation2 + $0x30] sm:$0xff]
        %v3380 = vld [vmem:[#allocation2 + $0x38] sm:$0xff]
        %v3381 = vld [vmem:[%s1482] ss:$8 sm:$0x3]
        %v3383 = vlaneseq
        %v3384 = vshrl.u32 %v3383, 7
        %v3385 = vsub.s32 0, %v3384
        %v3386 = vrot.slane %v3381, %v3385
        %v3387 = vlaneseq
        %v3388 = vshrl.u32 %v3387, 7
        %v3389 = vsub.s32 1, %v3388
        %v3390 = vrot.slane %v3381, %v3389
        %3391 = vrot.lane.b32.xlu0 %v3386, 9
        %v3392 = vpop.permute.xlu0 %3391
        %3393 = vrot.lane.b32.xlu0 %v3390, 9
        %v3394 = vpop.permute.xlu0 %3393
        %v3395 = vsel %vm933, %v3392, %v3394
        %v3399 = vmul.f32 %v3375, %v3392
        %v3400 = vmul.f32 %v3376, %v3395
        %v3401 = vmul.f32 %v3377, %v3394
        %v3402 = vmul.f32 %v3378, %v3392
        %v3403 = vmul.f32 %v3379, %v3395
        %v3404 = vmul.f32 %v3380, %v3394
        %3411 = vrot.lane.b32.xlu0 %v3399, 119
        %v3412 = vpop.permute.xlu0 %3411
        %3413 = vrot.lane.b32.xlu0 %v3400, 119
        %v3414 = vpop.permute.xlu0 %3413
        %3415 = vrot.lane.b32.xlu0 %v3401, 119
        %v3416 = vpop.permute.xlu0 %3415
        %3417 = vrot.lane.b32.xlu0 %v3402, 119
        %v3418 = vpop.permute.xlu0 %3417
        %3419 = vrot.lane.b32.xlu0 %v3403, 119
        %v3420 = vpop.permute.xlu0 %3419
        %3421 = vrot.lane.b32.xlu0 %v3404, 119
        %v3422 = vpop.permute.xlu0 %3421
        %v3423 = vsel %vm904, %v3412, %v3414
        %v3424 = vsel %vm904, %v3414, %v3416
        %v3425 = vsel %vm904, %v3418, %v3420
        %v3426 = vsel %vm904, %v3420, %v3422
        %3431 = vst [vmem:[%s1471 + $0x20] sm:$0xff] %v3423
        %3432 = vst [vmem:[%s1471 + $0x28] sm:$0xff] %v3424
        %3433 = vst [vmem:[%s1471 + $0x30] sm:$0xff] %v3425
        %3434 = vst [vmem:[%s1471 + $0x38] sm:$0xff] %v3426
        %v3435 = vld [vmem:[#allocation2 + $0x8] sm:$0xff]
        %v3436 = vld [vmem:[#allocation2 + $0x10] sm:$0xff]
        %v3437 = vld [vmem:[#allocation2 + $0x18] sm:$0xff]
        %v3438 = vld [vmem:[#allocation2 + $0x28] sm:$0xff]
        %v3439 = vld [vmem:[#allocation2 + $0x30] sm:$0xff]
        %v3440 = vld [vmem:[#allocation2 + $0x38] sm:$0xff]
        %v3441 = vld [vmem:[%s1543] ss:$8 sm:$0x3]
        %v3443 = vlaneseq
        %v3444 = vshrl.u32 %v3443, 7
        %v3445 = vsub.s32 0, %v3444
        %v3446 = vrot.slane %v3441, %v3445
        %v3447 = vlaneseq
        %v3448 = vshrl.u32 %v3447, 7
        %v3449 = vsub.s32 1, %v3448
        %v3450 = vrot.slane %v3441, %v3449
        %3451 = vrot.lane.b32.xlu0 %v3446, 55
        %v3452 = vpop.permute.xlu0 %3451
        %3453 = vrot.lane.b32.xlu0 %v3450, 55
        %v3454 = vpop.permute.xlu0 %3453
        %v3455 = vsel %vm346, %v3452, %v3454
        %v3459 = vmul.f32 %v3435, %v3452
        %v3460 = vmul.f32 %v3436, %v3455
        %v3461 = vmul.f32 %v3437, %v3454
        %v3462 = vmul.f32 %v3438, %v3452
        %v3463 = vmul.f32 %v3439, %v3455
        %v3464 = vmul.f32 %v3440, %v3454
        %3471 = vrot.lane.b32.xlu0 %v3459, 73
        %v3472 = vpop.permute.xlu0 %3471
        %3473 = vrot.lane.b32.xlu0 %v3460, 73
        %v3474 = vpop.permute.xlu0 %3473
        %3475 = vrot.lane.b32.xlu0 %v3461, 73
        %v3476 = vpop.permute.xlu0 %3475
        %3477 = vrot.lane.b32.xlu0 %v3462, 73
        %v3478 = vpop.permute.xlu0 %3477
        %3479 = vrot.lane.b32.xlu0 %v3463, 73
        %v3480 = vpop.permute.xlu0 %3479
        %3481 = vrot.lane.b32.xlu0 %v3464, 73
        %v3482 = vpop.permute.xlu0 %3481
        %v3483 = vsel %vm375, %v3472, %v3474
        %v3484 = vsel %vm375, %v3474, %v3476
        %v3485 = vsel %vm375, %v3478, %v3480
        %v3486 = vsel %vm375, %v3480, %v3482
        %3491 = vst [vmem:[%s1471 + $0x40] sm:$0xff] %v3483
        %3492 = vst [vmem:[%s1471 + $0x48] sm:$0xff] %v3484
        %3493 = vst [vmem:[%s1471 + $0x50] sm:$0xff] %v3485
        %3494 = vst [vmem:[%s1471 + $0x58] sm:$0xff] %v3486
        %v3495 = vld [vmem:[#allocation2 + $0x8] sm:$0xff]
        %v3496 = vld [vmem:[#allocation2 + $0x10] sm:$0xff]
        %v3497 = vld [vmem:[#allocation2 + $0x18] sm:$0xff]
        %v3498 = vld [vmem:[#allocation2 + $0x28] sm:$0xff]
        %v3499 = vld [vmem:[#allocation2 + $0x30] sm:$0xff]
        %v3500 = vld [vmem:[#allocation2 + $0x38] sm:$0xff]
        %v3501 = vld [vmem:[%s1604] ss:$8 sm:$0x3]
        %v3503 = vlaneseq
        %v3504 = vshrl.u32 %v3503, 7
        %v3505 = vsub.s32 0, %v3504
        %v3506 = vrot.slane %v3501, %v3505
        %v3507 = vlaneseq
        %v3508 = vshrl.u32 %v3507, 7
        %v3509 = vsub.s32 1, %v3508
        %v3510 = vrot.slane %v3501, %v3509
        %3511 = vrot.lane.b32.xlu0 %v3506, 56
        %v3512 = vpop.permute.xlu0 %3511
        %3513 = vrot.lane.b32.xlu0 %v3510, 56
        %v3514 = vpop.permute.xlu0 %3513
        %v3515 = vsel %vm409, %v3512, %v3514
        %v3519 = vmul.f32 %v3495, %v3512
        %v3520 = vmul.f32 %v3496, %v3515
        %v3521 = vmul.f32 %v3497, %v3514
        %v3522 = vmul.f32 %v3498, %v3512
        %v3523 = vmul.f32 %v3499, %v3515
        %v3524 = vmul.f32 %v3500, %v3514
        %3531 = vrot.lane.b32.xlu0 %v3519, 72
        %v3532 = vpop.permute.xlu0 %3531
        %3533 = vrot.lane.b32.xlu0 %v3520, 72
        %v3534 = vpop.permute.xlu0 %3533
        %3535 = vrot.lane.b32.xlu0 %v3521, 72
        %v3536 = vpop.permute.xlu0 %3535
        %3537 = vrot.lane.b32.xlu0 %v3522, 72
        %v3538 = vpop.permute.xlu0 %3537
        %3539 = vrot.lane.b32.xlu0 %v3523, 72
        %v3540 = vpop.permute.xlu0 %3539
        %3541 = vrot.lane.b32.xlu0 %v3524, 72
        %v3542 = vpop.permute.xlu0 %3541
        %v3543 = vsel %vm438, %v3532, %v3534
        %v3544 = vsel %vm438, %v3534, %v3536
        %v3545 = vsel %vm438, %v3538, %v3540
        %v3546 = vsel %vm438, %v3540, %v3542
        %3551 = vst [vmem:[%s1471 + $0x60] sm:$0xff] %v3543
        %3552 = vst [vmem:[%s1471 + $0x68] sm:$0xff] %v3544
        %3553 = vst [vmem:[%s1471 + $0x70] sm:$0xff] %v3545
        %3554 = vst [vmem:[%s1471 + $0x78] sm:$0xff] %v3546
        %v3555 = vld [vmem:[#allocation2 + $0x8] sm:$0xff]
        %v3556 = vld [vmem:[#allocation2 + $0x10] sm:$0xff]
        %v3557 = vld [vmem:[#allocation2 + $0x18] sm:$0xff]
        %v3558 = vld [vmem:[#allocation2 + $0x28] sm:$0xff]
        %v3559 = vld [vmem:[#allocation2 + $0x30] sm:$0xff]
        %v3560 = vld [vmem:[#allocation2 + $0x38] sm:$0xff]
        %v3561 = vld [vmem:[%s1665] ss:$8 sm:$0x3]
        %v3563 = vlaneseq
        %v3564 = vshrl.u32 %v3563, 7
        %v3565 = vsub.s32 0, %v3564
        %v3566 = vrot.slane %v3561, %v3565
        %v3567 = vlaneseq
        %v3568 = vshrl.u32 %v3567, 7
        %v3569 = vsub.s32 1, %v3568
        %v3570 = vrot.slane %v3561, %v3569
        %3571 = vrot.lane.b32.xlu0 %v3566, 57
        %v3572 = vpop.permute.xlu0 %3571
        %3573 = vrot.lane.b32.xlu0 %v3570, 57
        %v3574 = vpop.permute.xlu0 %3573
        %v3575 = vsel %vm472, %v3572, %v3574
        %v3579 = vmul.f32 %v3555, %v3572
        %v3580 = vmul.f32 %v3556, %v3575
        %v3581 = vmul.f32 %v3557, %v3574
        %v3582 = vmul.f32 %v3558, %v3572
        %v3583 = vmul.f32 %v3559, %v3575
        %v3584 = vmul.f32 %v3560, %v3574
        %3591 = vrot.lane.b32.xlu0 %v3579, 71
        %v3592 = vpop.permute.xlu0 %3591
        %3593 = vrot.lane.b32.xlu0 %v3580, 71
        %v3594 = vpop.permute.xlu0 %3593
        %3595 = vrot.lane.b32.xlu0 %v3581, 71
        %v3596 = vpop.permute.xlu0 %3595
        %3597 = vrot.lane.b32.xlu0 %v3582, 71
        %v3598 = vpop.permute.xlu0 %3597
        %3599 = vrot.lane.b32.xlu0 %v3583, 71
        %v3600 = vpop.permute.xlu0 %3599
        %3601 = vrot.lane.b32.xlu0 %v3584, 71
        %v3602 = vpop.permute.xlu0 %3601
        %v3603 = vsel %vm501, %v3592, %v3594
        %v3604 = vsel %vm501, %v3594, %v3596
        %v3605 = vsel %vm501, %v3598, %v3600
        %v3606 = vsel %vm501, %v3600, %v3602
        %3611 = vst [vmem:[%s1471 + $0x80] sm:$0xff] %v3603
        %3612 = vst [vmem:[%s1471 + $0x88] sm:$0xff] %v3604
        %3613 = vst [vmem:[%s1471 + $0x90] sm:$0xff] %v3605
        %3614 = vst [vmem:[%s1471 + $0x98] sm:$0xff] %v3606
        %v3615 = vld [vmem:[#allocation2 + $0x8] sm:$0xff]
        %v3616 = vld [vmem:[#allocation2 + $0x10] sm:$0xff]
        %v3617 = vld [vmem:[#allocation2 + $0x18] sm:$0xff]
        %v3618 = vld [vmem:[#allocation2 + $0x28] sm:$0xff]
        %v3619 = vld [vmem:[#allocation2 + $0x30] sm:$0xff]
        %v3620 = vld [vmem:[#allocation2 + $0x38] sm:$0xff]
        %v3621 = vld [vmem:[%s1726] ss:$8 sm:$0x3]
        %v3623 = vlaneseq
        %v3624 = vshrl.u32 %v3623, 7
        %v3625 = vsub.s32 0, %v3624
        %v3626 = vrot.slane %v3621, %v3625
        %v3627 = vlaneseq
        %v3628 = vshrl.u32 %v3627, 7
        %v3629 = vsub.s32 1, %v3628
        %v3630 = vrot.slane %v3621, %v3629
        %3631 = vrot.lane.b32.xlu0 %v3626, 63
        %v3632 = vpop.permute.xlu0 %3631
        %3633 = vrot.lane.b32.xlu0 %v3630, 63
        %v3634 = vpop.permute.xlu0 %3633
        %v3635 = vsel %vm535, %v3632, %v3634
        %v3639 = vmul.f32 %v3615, %v3632
        %v3640 = vmul.f32 %v3616, %v3635
        %v3641 = vmul.f32 %v3617, %v3634
        %v3642 = vmul.f32 %v3618, %v3632
        %v3643 = vmul.f32 %v3619, %v3635
        %v3644 = vmul.f32 %v3620, %v3634
        %3651 = vrot.lane.b32.xlu0 %v3639, 65
        %v3652 = vpop.permute.xlu0 %3651
        %3653 = vrot.lane.b32.xlu0 %v3640, 65
        %v3654 = vpop.permute.xlu0 %3653
        %3655 = vrot.lane.b32.xlu0 %v3641, 65
        %v3656 = vpop.permute.xlu0 %3655
        %3657 = vrot.lane.b32.xlu0 %v3642, 65
        %v3658 = vpop.permute.xlu0 %3657
        %3659 = vrot.lane.b32.xlu0 %v3643, 65
        %v3660 = vpop.permute.xlu0 %3659
        %3661 = vrot.lane.b32.xlu0 %v3644, 65
        %v3662 = vpop.permute.xlu0 %3661
        %v3663 = vsel %vm564, %v3652, %v3654
        %v3664 = vsel %vm564, %v3654, %v3656
        %v3665 = vsel %vm564, %v3658, %v3660
        %v3666 = vsel %vm564, %v3660, %v3662
        %3671 = vst [vmem:[%s1471 + $0xa0] sm:$0xff] %v3663
        %3672 = vst [vmem:[%s1471 + $0xa8] sm:$0xff] %v3664
        %3673 = vst [vmem:[%s1471 + $0xb0] sm:$0xff] %v3665
        %3674 = vst [vmem:[%s1471 + $0xb8] sm:$0xff] %v3666
        %v3675 = vld [vmem:[#allocation2 + $0x8] sm:$0xff]
        %v3676 = vld [vmem:[#allocation2 + $0x10] sm:$0xff]
        %v3677 = vld [vmem:[#allocation2 + $0x18] sm:$0xff]
        %v3678 = vld [vmem:[#allocation2 + $0x28] sm:$0xff]
        %v3679 = vld [vmem:[#allocation2 + $0x30] sm:$0xff]
        %v3680 = vld [vmem:[#allocation2 + $0x38] sm:$0xff]
        %v3681 = vld [vmem:[%s1787] ss:$8 sm:$0x3]
        %v3683 = vlaneseq
        %v3684 = vshrl.u32 %v3683, 7
        %v3685 = vsub.s32 0, %v3684
        %v3686 = vrot.slane %v3681, %v3685
        %v3687 = vlaneseq
        %v3688 = vshrl.u32 %v3687, 7
        %v3689 = vsub.s32 1, %v3688
        %v3690 = vrot.slane %v3681, %v3689
        %3691 = vrot.lane.b32.xlu0 %v3686, 64
        %v3692 = vpop.permute.xlu0 %3691
        %3693 = vrot.lane.b32.xlu0 %v3690, 64
        %v3694 = vpop.permute.xlu0 %3693
        %v3695 = vsel %vm598, %v3692, %v3694
        %v3699 = vmul.f32 %v3675, %v3692
        %v3700 = vmul.f32 %v3676, %v3695
        %v3701 = vmul.f32 %v3677, %v3694
        %v3702 = vmul.f32 %v3678, %v3692
        %v3703 = vmul.f32 %v3679, %v3695
        %v3704 = vmul.f32 %v3680, %v3694
        %3711 = vrot.lane.b32.xlu0 %v3699, 64
        %v3712 = vpop.permute.xlu0 %3711
        %3713 = vrot.lane.b32.xlu0 %v3700, 64
        %v3714 = vpop.permute.xlu0 %3713
        %3715 = vrot.lane.b32.xlu0 %v3701, 64
        %v3716 = vpop.permute.xlu0 %3715
        %3717 = vrot.lane.b32.xlu0 %v3702, 64
        %v3718 = vpop.permute.xlu0 %3717
        %3719 = vrot.lane.b32.xlu0 %v3703, 64
        %v3720 = vpop.permute.xlu0 %3719
        %3721 = vrot.lane.b32.xlu0 %v3704, 64
        %v3722 = vpop.permute.xlu0 %3721
        %v3723 = vsel %vm598, %v3712, %v3714
        %v3724 = vsel %vm598, %v3714, %v3716
        %v3725 = vsel %vm598, %v3718, %v3720
        %v3726 = vsel %vm598, %v3720, %v3722
        %3731 = vst [vmem:[%s1471 + $0xc0] sm:$0xff] %v3723
        %3732 = vst [vmem:[%s1471 + $0xc8] sm:$0xff] %v3724
        %3733 = vst [vmem:[%s1471 + $0xd0] sm:$0xff] %v3725
        %3734 = vst [vmem:[%s1471 + $0xd8] sm:$0xff] %v3726
        %v3735 = vld [vmem:[#allocation2 + $0x8] sm:$0xff]
        %v3736 = vld [vmem:[#allocation2 + $0x10] sm:$0xff]
        %v3737 = vld [vmem:[#allocation2 + $0x18] sm:$0xff]
        %v3738 = vld [vmem:[#allocation2 + $0x28] sm:$0xff]
        %v3739 = vld [vmem:[#allocation2 + $0x30] sm:$0xff]
        %v3740 = vld [vmem:[#allocation2 + $0x38] sm:$0xff]
        %v3741 = vld [vmem:[%s1848] ss:$8 sm:$0x3]
        %v3743 = vlaneseq
        %v3744 = vshrl.u32 %v3743, 7
        %v3745 = vsub.s32 0, %v3744
        %v3746 = vrot.slane %v3741, %v3745
        %v3747 = vlaneseq
        %v3748 = vshrl.u32 %v3747, 7
        %v3749 = vsub.s32 1, %v3748
        %v3750 = vrot.slane %v3741, %v3749
        %3751 = vrot.lane.b32.xlu0 %v3746, 65
        %v3752 = vpop.permute.xlu0 %3751
        %3753 = vrot.lane.b32.xlu0 %v3750, 65
        %v3754 = vpop.permute.xlu0 %3753
        %v3755 = vsel %vm564, %v3752, %v3754
        %v3759 = vmul.f32 %v3735, %v3752
        %v3760 = vmul.f32 %v3736, %v3755
        %v3761 = vmul.f32 %v3737, %v3754
        %v3762 = vmul.f32 %v3738, %v3752
        %v3763 = vmul.f32 %v3739, %v3755
        %v3764 = vmul.f32 %v3740, %v3754
        %3771 = vrot.lane.b32.xlu0 %v3759, 63
        %v3772 = vpop.permute.xlu0 %3771
        %3773 = vrot.lane.b32.xlu0 %v3760, 63
        %v3774 = vpop.permute.xlu0 %3773
        %3775 = vrot.lane.b32.xlu0 %v3761, 63
        %v3776 = vpop.permute.xlu0 %3775
        %3777 = vrot.lane.b32.xlu0 %v3762, 63
        %v3778 = vpop.permute.xlu0 %3777
        %3779 = vrot.lane.b32.xlu0 %v3763, 63
        %v3780 = vpop.permute.xlu0 %3779
        %3781 = vrot.lane.b32.xlu0 %v3764, 63
        %v3782 = vpop.permute.xlu0 %3781
        %v3783 = vsel %vm535, %v3772, %v3774
        %v3784 = vsel %vm535, %v3774, %v3776
        %v3785 = vsel %vm535, %v3778, %v3780
        %v3786 = vsel %vm535, %v3780, %v3782
        %3791 = vst [vmem:[%s1471 + $0xe0] sm:$0xff] %v3783
        %3792 = vst [vmem:[%s1471 + $0xe8] sm:$0xff] %v3784
        %3793 = vst [vmem:[%s1471 + $0xf0] sm:$0xff] %v3785
        %3794 = vst [vmem:[%s1471 + $0xf8] sm:$0xff] %v3786
        %v3795 = vld [vmem:[#allocation2 + $0x8] sm:$0xff]
        %v3796 = vld [vmem:[#allocation2 + $0x10] sm:$0xff]
        %v3797 = vld [vmem:[#allocation2 + $0x18] sm:$0xff]
        %v3798 = vld [vmem:[#allocation2 + $0x28] sm:$0xff]
        %v3799 = vld [vmem:[#allocation2 + $0x30] sm:$0xff]
        %v3800 = vld [vmem:[#allocation2 + $0x38] sm:$0xff]
        %v3801 = vld [vmem:[%s1909] ss:$8 sm:$0x3]
        %v3803 = vlaneseq
        %v3804 = vshrl.u32 %v3803, 7
        %v3805 = vsub.s32 0, %v3804
        %v3806 = vrot.slane %v3801, %v3805
        %v3807 = vlaneseq
        %v3808 = vshrl.u32 %v3807, 7
        %v3809 = vsub.s32 1, %v3808
        %v3810 = vrot.slane %v3801, %v3809
        %3811 = vrot.lane.b32.xlu0 %v3806, 71
        %v3812 = vpop.permute.xlu0 %3811
        %3813 = vrot.lane.b32.xlu0 %v3810, 71
        %v3814 = vpop.permute.xlu0 %3813
        %v3815 = vsel %vm501, %v3812, %v3814
        %v3819 = vmul.f32 %v3795, %v3812
        %v3820 = vmul.f32 %v3796, %v3815
        %v3821 = vmul.f32 %v3797, %v3814
        %v3822 = vmul.f32 %v3798, %v3812
        %v3823 = vmul.f32 %v3799, %v3815
        %v3824 = vmul.f32 %v3800, %v3814
        %3831 = vrot.lane.b32.xlu0 %v3819, 57
        %v3832 = vpop.permute.xlu0 %3831
        %3833 = vrot.lane.b32.xlu0 %v3820, 57
        %v3834 = vpop.permute.xlu0 %3833
        %3835 = vrot.lane.b32.xlu0 %v3821, 57
        %v3836 = vpop.permute.xlu0 %3835
        %3837 = vrot.lane.b32.xlu0 %v3822, 57
        %v3838 = vpop.permute.xlu0 %3837
        %3839 = vrot.lane.b32.xlu0 %v3823, 57
        %v3840 = vpop.permute.xlu0 %3839
        %3841 = vrot.lane.b32.xlu0 %v3824, 57
        %v3842 = vpop.permute.xlu0 %3841
        %v3843 = vsel %vm472, %v3832, %v3834
        %v3844 = vsel %vm472, %v3834, %v3836
        %v3845 = vsel %vm472, %v3838, %v3840
        %v3846 = vsel %vm472, %v3840, %v3842
        %3851 = vst [vmem:[%s1471 + $0x100] sm:$0xff] %v3843
        %3852 = vst [vmem:[%s1471 + $0x108] sm:$0xff] %v3844
        %3853 = vst [vmem:[%s1471 + $0x110] sm:$0xff] %v3845
        %3854 = vst [vmem:[%s1471 + $0x118] sm:$0xff] %v3846
        %v3855 = vld [vmem:[#allocation2 + $0x8] sm:$0xff]
        %v3856 = vld [vmem:[#allocation2 + $0x10] sm:$0xff]
        %v3857 = vld [vmem:[#allocation2 + $0x18] sm:$0xff]
        %v3858 = vld [vmem:[#allocation2 + $0x28] sm:$0xff]
        %v3859 = vld [vmem:[#allocation2 + $0x30] sm:$0xff]
        %v3860 = vld [vmem:[#allocation2 + $0x38] sm:$0xff]
        %v3861 = vld [vmem:[%s1970] ss:$8 sm:$0x3]
        %v3863 = vlaneseq
        %v3864 = vshrl.u32 %v3863, 7
        %v3865 = vsub.s32 0, %v3864
        %v3866 = vrot.slane %v3861, %v3865
        %v3867 = vlaneseq
        %v3868 = vshrl.u32 %v3867, 7
        %v3869 = vsub.s32 1, %v3868
        %v3870 = vrot.slane %v3861, %v3869
        %3871 = vrot.lane.b32.xlu0 %v3866, 72
        %v3872 = vpop.permute.xlu0 %3871
        %3873 = vrot.lane.b32.xlu0 %v3870, 72
        %v3874 = vpop.permute.xlu0 %3873
        %v3875 = vsel %vm438, %v3872, %v3874
        %v3879 = vmul.f32 %v3855, %v3872
        %v3880 = vmul.f32 %v3856, %v3875
        %v3881 = vmul.f32 %v3857, %v3874
        %v3882 = vmul.f32 %v3858, %v3872
        %v3883 = vmul.f32 %v3859, %v3875
        %v3884 = vmul.f32 %v3860, %v3874
        %3891 = vrot.lane.b32.xlu0 %v3879, 56
        %v3892 = vpop.permute.xlu0 %3891
        %3893 = vrot.lane.b32.xlu0 %v3880, 56
        %v3894 = vpop.permute.xlu0 %3893
        %3895 = vrot.lane.b32.xlu0 %v3881, 56
        %v3896 = vpop.permute.xlu0 %3895
        %3897 = vrot.lane.b32.xlu0 %v3882, 56
        %v3898 = vpop.permute.xlu0 %3897
        %3899 = vrot.lane.b32.xlu0 %v3883, 56
        %v3900 = vpop.permute.xlu0 %3899
        %3901 = vrot.lane.b32.xlu0 %v3884, 56
        %v3902 = vpop.permute.xlu0 %3901
        %v3903 = vsel %vm409, %v3892, %v3894
        %v3904 = vsel %vm409, %v3894, %v3896
        %v3905 = vsel %vm409, %v3898, %v3900
        %v3906 = vsel %vm409, %v3900, %v3902
        %3911 = vst [vmem:[%s1471 + $0x120] sm:$0xff] %v3903
        %3912 = vst [vmem:[%s1471 + $0x128] sm:$0xff] %v3904
        %3913 = vst [vmem:[%s1471 + $0x130] sm:$0xff] %v3905
        %3914 = vst [vmem:[%s1471 + $0x138] sm:$0xff] %v3906
        %v3915 = vld [vmem:[#allocation2 + $0x8] sm:$0xff]
        %v3916 = vld [vmem:[#allocation2 + $0x10] sm:$0xff]
        %v3917 = vld [vmem:[#allocation2 + $0x18] sm:$0xff]
        %v3918 = vld [vmem:[#allocation2 + $0x28] sm:$0xff]
        %v3919 = vld [vmem:[#allocation2 + $0x30] sm:$0xff]
        %v3920 = vld [vmem:[#allocation2 + $0x38] sm:$0xff]
        %v3921 = vld [vmem:[%s2031] ss:$8 sm:$0x3]
        %v3923 = vlaneseq
        %v3924 = vshrl.u32 %v3923, 7
        %v3925 = vsub.s32 0, %v3924
        %v3926 = vrot.slane %v3921, %v3925
        %v3927 = vlaneseq
        %v3928 = vshrl.u32 %v3927, 7
        %v3929 = vsub.s32 1, %v3928
        %v3930 = vrot.slane %v3921, %v3929
        %3931 = vrot.lane.b32.xlu0 %v3926, 73
        %v3932 = vpop.permute.xlu0 %3931
        %3933 = vrot.lane.b32.xlu0 %v3930, 73
        %v3934 = vpop.permute.xlu0 %3933
        %v3935 = vsel %vm375, %v3932, %v3934
        %v3939 = vmul.f32 %v3915, %v3932
        %v3940 = vmul.f32 %v3916, %v3935
        %v3941 = vmul.f32 %v3917, %v3934
        %v3942 = vmul.f32 %v3918, %v3932
        %v3943 = vmul.f32 %v3919, %v3935
        %v3944 = vmul.f32 %v3920, %v3934
        %3951 = vrot.lane.b32.xlu0 %v3939, 55
        %v3952 = vpop.permute.xlu0 %3951
        %3953 = vrot.lane.b32.xlu0 %v3940, 55
        %v3954 = vpop.permute.xlu0 %3953
        %3955 = vrot.lane.b32.xlu0 %v3941, 55
        %v3956 = vpop.permute.xlu0 %3955
        %3957 = vrot.lane.b32.xlu0 %v3942, 55
        %v3958 = vpop.permute.xlu0 %3957
        %3959 = vrot.lane.b32.xlu0 %v3943, 55
        %v3960 = vpop.permute.xlu0 %3959
        %3961 = vrot.lane.b32.xlu0 %v3944, 55
        %v3962 = vpop.permute.xlu0 %3961
        %v3963 = vsel %vm346, %v3952, %v3954
        %v3964 = vsel %vm346, %v3954, %v3956
        %v3965 = vsel %vm346, %v3958, %v3960
        %v3966 = vsel %vm346, %v3960, %v3962
        %3971 = vst [vmem:[%s1471 + $0x140] sm:$0xff] %v3963
        %3972 = vst [vmem:[%s1471 + $0x148] sm:$0xff] %v3964
        %3973 = vst [vmem:[%s1471 + $0x150] sm:$0xff] %v3965
        %3974 = vst [vmem:[%s1471 + $0x158] sm:$0xff] %v3966
        %v3975 = vld [vmem:[#allocation11 + $0x10] sm:$0xff]
        %v3976 = vld [vmem:[#allocation11 + $0x18] sm:$0xff]
        %v3977 = vld [vmem:[#allocation11 + $0x30] sm:$0xff]
        %v3978 = vld [vmem:[#allocation11 + $0x38] sm:$0xff]
        %v3979 = vld [vmem:[%s1471] sm:$0xff]
        %v3980 = vld [vmem:[%s1471 + $0x8] sm:$0xff]
        %v3981 = vld [vmem:[%s1471 + $0x10] sm:$0xff]
        %v3982 = vld [vmem:[%s1471 + $0x18] sm:$0xff]
        %v3983 = vld [vmem:[%s1471 + $0x20] sm:$0xff]
        %v3984 = vld [vmem:[%s1471 + $0x28] sm:$0xff]
        %v3985 = vld [vmem:[%s1471 + $0x30] sm:$0xff]
        %v3986 = vld [vmem:[%s1471 + $0x38] sm:$0xff]
        %v3987 = vld [vmem:[%s1471 + $0x40] sm:$0xff]
        %v3988 = vld [vmem:[%s1471 + $0x48] sm:$0xff]
        %v3989 = vld [vmem:[%s1471 + $0x50] sm:$0xff]
        %v3990 = vld [vmem:[%s1471 + $0x58] sm:$0xff]
        %v3991 = vld [vmem:[%s1471 + $0x60] sm:$0xff]
        %v3992 = vld [vmem:[%s1471 + $0x68] sm:$0xff]
        %v3993 = vld [vmem:[%s1471 + $0x70] sm:$0xff]
        %v3994 = vld [vmem:[%s1471 + $0x78] sm:$0xff]
        %v3995 = vld [vmem:[%s1471 + $0x80] sm:$0xff]
        %v3996 = vld [vmem:[%s1471 + $0x88] sm:$0xff]
        %v3997 = vld [vmem:[%s1471 + $0x90] sm:$0xff]
        %v3998 = vld [vmem:[%s1471 + $0x98] sm:$0xff]
        %v3999 = vld [vmem:[%s1471 + $0xa0] sm:$0xff]
        %v4000 = vld [vmem:[%s1471 + $0xa8] sm:$0xff]
        %v4001 = vld [vmem:[%s1471 + $0xb0] sm:$0xff]
        %v4002 = vld [vmem:[%s1471 + $0xb8] sm:$0xff]
        %v4003 = vld [vmem:[%s1471 + $0xc0] sm:$0xff]
        %v4004 = vld [vmem:[%s1471 + $0xc8] sm:$0xff]
        %v4005 = vld [vmem:[%s1471 + $0xd0] sm:$0xff]
        %v4006 = vld [vmem:[%s1471 + $0xd8] sm:$0xff]
        %v4007 = vld [vmem:[%s1471 + $0xe0] sm:$0xff]
        %v4008 = vld [vmem:[%s1471 + $0xe8] sm:$0xff]
        %v4009 = vld [vmem:[%s1471 + $0xf0] sm:$0xff]
        %v4010 = vld [vmem:[%s1471 + $0xf8] sm:$0xff]
        %v4011 = vld [vmem:[%s1471 + $0x100] sm:$0xff]
        %v4012 = vld [vmem:[%s1471 + $0x108] sm:$0xff]
        %v4013 = vld [vmem:[%s1471 + $0x110] sm:$0xff]
        %v4014 = vld [vmem:[%s1471 + $0x118] sm:$0xff]
        %v4015 = vld [vmem:[%s1471 + $0x120] sm:$0xff]
        %v4016 = vld [vmem:[%s1471 + $0x128] sm:$0xff]
        %v4017 = vld [vmem:[%s1471 + $0x130] sm:$0xff]
        %v4018 = vld [vmem:[%s1471 + $0x138] sm:$0xff]
        %v4019 = vld [vmem:[%s1471 + $0x140] sm:$0xff]
        %v4020 = vld [vmem:[%s1471 + $0x148] sm:$0xff]
        %v4021 = vld [vmem:[%s1471 + $0x150] sm:$0xff]
        %v4022 = vld [vmem:[%s1471 + $0x158] sm:$0xff]
        %v4024 = vsel %vm2134, %v3976, 0
        %v4027 = vsel %vm2134, %v3978, 0
        %4029 = vmatprep.subr.mxu0 %v4010
        %4030 = vmatpush1.msra.mxu0 %v4009
        %4031 = vmatprep.subr.mxu0 %v4008
        %4032 = vmatpush1.msra.mxu0 %v4007
        %4033 = vmatprep.subr.mxu0 %v4006
        %4034 = vmatpush1.msra.mxu0 %v4005
        %4035 = vmatprep.subr.mxu0 %v4004
        %4036 = vmatpush1.msra.mxu0 %v4003
        %4037 = vmatprep.subr.mxu0 %v4002
        %4038 = vmatpush1.msra.mxu0 %v4001
        %4039 = vmatprep.subr.mxu0 %v4000
        %4040 = vmatpush1.msra.mxu0 %v3999
        %4041 = vmatprep.subr.mxu0 %v3998
        %4042 = vmatpush1.msra.mxu0 %v3997
        %4043 = vmatprep.subr.mxu0 %v3996
        %4044 = vmatpush1.msra.mxu0 %v3995
        %4045 = vmatprep.subr.mxu0 %v3994
        %4046 = vmatpush1.msra.mxu0 %v3993
        %4047 = vmatprep.subr.mxu0 %v3992
        %4048 = vmatpush1.msra.mxu0 %v3991
        %4049 = vmatprep.subr.mxu0 %v3990
        %4050 = vmatpush1.msra.mxu0 %v3989
        %4051 = vmatprep.subr.mxu0 %v3988
        %4052 = vmatpush1.msra.mxu0 %v3987
        %4053 = vmatprep.subr.mxu0 %v3986
        %4054 = vmatpush1.msra.mxu0 %v3985
        %4055 = vmatprep.subr.mxu0 %v3984
        %4056 = vmatpush1.msra.mxu0 %v3983
        %4057 = vmatprep.subr.mxu0 %v3982
        %4058 = vmatpush1.msra.mxu0 %v3981
        %4059 = vmatprep.subr.mxu0 %v3980
        %4060 = vmatpush1.msra.mxu0 %v3979
        %4061 = vmatprep.subr.mxu0 0.0
        %4062 = vmatpush2.msra.mxu0 0.0
        %4063 = vmatprep.subr.mxu0 0.0
        %4064 = vmatpush2.msra.mxu0 0.0
        %4065 = vmatprep.subr.mxu0 0.0
        %4066 = vmatpush2.msra.mxu0 0.0
        %4067 = vmatprep.subr.mxu0 0.0
        %4068 = vmatpush2.msra.mxu0 0.0
        %4069 = vmatprep.subr.mxu0 0.0
        %4070 = vmatpush2.msra.mxu0 0.0
        %4071 = vmatprep.subr.mxu0 0.0
        %4072 = vmatpush2.msra.mxu0 0.0
        %4073 = vmatprep.subr.mxu0 0.0
        %4074 = vmatpush2.msra.mxu0 0.0
        %4075 = vmatprep.subr.mxu0 0.0
        %4076 = vmatpush2.msra.mxu0 0.0
        %4077 = vmatprep.subr.mxu0 0.0
        %4078 = vmatpush2.msra.mxu0 0.0
        %4079 = vmatprep.subr.mxu0 0.0
        %4080 = vmatpush2.msra.mxu0 0.0
        %4081 = vmatprep.subr.mxu0 %v4022
        %4082 = vmatpush2.msra.mxu0 %v4021
        %4083 = vmatprep.subr.mxu0 %v4020
        %4084 = vmatpush2.msra.mxu0 %v4019
        %4085 = vmatprep.subr.mxu0 %v4018
        %4086 = vmatpush2.msra.mxu0 %v4017
        %4087 = vmatprep.subr.mxu0 %v4016
        %4088 = vmatpush2.msra.mxu0 %v4015
        %4089 = vmatprep.subr.mxu0 %v4014
        %4090 = vmatpush2.msra.mxu0 %v4013
        %4091 = vmatprep.subr.mxu0 %v4012
        %4092 = vmatpush2.msra.mxu0 %v4011
        %4093 = vmatprep.mubr.f32.mxu0 %v4024
        %4094 = vmatmul.mubr.f32.gmra.mxu0 %v3975
        %v4095 = vpop.f32.mrf.mxu0
        %v4096 = vadd.f32 0.0, %v4095
        %v4097 = vpop.f32.mrf.mxu0
        %v4098 = vadd.f32 0.0, %v4097
        %4099 = vmatprep.mubr.f32.mxu0 %v4027
        %4100 = vmatmul.mubr.f32.gmra.mxu0 %v3977
        %v4101 = vpop.f32.mrf.mxu0
        %v4102 = vadd.f32 0.0, %v4101
        %v4103 = vpop.f32.mrf.mxu0
        %v4104 = vadd.f32 0.0, %v4103
        %4105 = vdwg.mxu0
        %v4106 = vld [vmem:[#allocation4] sm:$0xff]
        %v4107 = vld [vmem:[#allocation4 + $0x8] sm:$0xff]
        %v4108 = vld [vmem:[#allocation4 + $0x10] sm:$0xff]
        %v4109 = vld [vmem:[#allocation4 + $0x18] sm:$0xff]
        %v4110 = vadd.f32 %v4106, %v4096
        %v4111 = vadd.f32 %v4107, %v4098
        %v4112 = vadd.f32 %v4108, %v4102
        %v4113 = vadd.f32 %v4109, %v4104
        %4114 = vst [vmem:[#allocation4] sm:$0xff] %v4110
        %4115 = vst [vmem:[#allocation4 + $0x8] sm:$0xff] %v4111
        %4116 = vst [vmem:[#allocation4 + $0x10] sm:$0xff] %v4112
        %4117 = vst [vmem:[#allocation4 + $0x18] sm:$0xff] %v4113
        %v4118 = vld [vmem:[#allocation4] sm:$0xff]
        %v4119 = vld [vmem:[#allocation4 + $0x8] sm:$0xff]
        %v4120 = vld [vmem:[#allocation4 + $0x10] sm:$0xff]
        %v4121 = vld [vmem:[#allocation4 + $0x18] sm:$0xff]
        %v4122 = vld [vmem:[%s5] sm:$0xff]
        %v4123 = vld [vmem:[%s5 + $0x8] sm:$0xff]
        %4125 = vset.pattern.permute.xlu0 0
        %4126 = vperm.xlu0 %4125, %v4122
        %v4127 = vpop.permute.xlu0 %4126
        %4130 = vset.pattern.permute.xlu0 0
        %4131 = vperm.xlu0 %4130, %v4123
        %v4132 = vpop.permute.xlu0 %4131
        %v4134 = vadd.f32 %v4118, %v4127
        %v4135 = vadd.f32 %v4119, %v4127
        %v4136 = vadd.f32 %v4120, %v4132
        %v4137 = vadd.f32 %v4121, %v4132
        %v4138 = vadd.f32 %v4134, %v318
        %v4139 = vadd.f32 %v4135, %v319
        %v4140 = vadd.f32 %v4136, %v320
        %v4141 = vadd.f32 %v4137, %v321
        %v4142 = vmax.f32 %v4138, 0.0
        %v4143 = vmax.f32 %v4139, 0.0
        %v4144 = vmax.f32 %v4140, 0.0
        %v4145 = vmax.f32 %v4141, 0.0
        %4146 = vst [vmem:[%s313] sm:$0xff] %v4142
        %4147 = vst [vmem:[%s313 + $0x8] sm:$0xff] %v4143
        %4148 = vst [vmem:[%s313 + $0x10] sm:$0xff] %v4144
        %4149 = vst [vmem:[%s313 + $0x18] sm:$0xff] %v4145
        %s4150 = sand.u32 %s164, 1
        %s4151 = scalar_lea.sflag [#allocation7], %s4150
        %s4152 = sand.u32 %s164, 1
        %s4153 = smul.addr %s4152, 32
        %s4154 = scalar_lea.vmem [#allocation13], %s4153
        // Predicated region
        $region61: #{tpu_custom_call.1} parent=43 // pred_check
          %p4155 = pneg %p174
        $region62: #{tpu_custom_call.1} parent=43 // pred_check_branch
          %4157 = sbr.rel (%p4155) target = $region64
        $region63: #{tpu_custom_call.1} parent=43 // pred_region
          %s4159 = ssub.s32 512, 512
          %4160 = vsyncadd %s4151, %s4159
          %s4161 = smul.addr %s25, 4
          %s4162 = smul.addr %s4161, 128
          %s4163 = scalar_lea.hbm %s6, %s4162
          %s4164 = sshll.u32 %s4154, 4
          %s4165 = int_to_ptr.vmem [resolvable:$true] %s4164
          %4170 = dma.vmem_to_hbm [thread:$0]  %s4165, 512, %s4163, %s4151, 256, 256, 16
        $region64: #{tpu_custom_call.1} parent=43 // pred_fallthru
          _
      $region44: #{tpu_custom_call.1} parent=5 // pred_fallthru
        _
      %p4171 = scmp.le.s32.totalorder 2, %s20
      // Predicated region
      $region65: #{tpu_custom_call.1} parent=5 // pred_check
        %p4172 = pneg %p4171
      $region66: #{tpu_custom_call.1} parent=5 // pred_check_branch
        %4174 = sbr.rel (%p4172) target = $region68
      $region67: #{tpu_custom_call.1} parent=5 // pred_region
        %s4175 = ssub.s32 %s20, 2
        // Predicated region
        $region69: #{tpu_custom_call.1} parent=67 // pred_check
          %p4176 = pneg %p180
        $region70: #{tpu_custom_call.1} parent=67 // pred_check_branch
          %4178 = sbr.rel (%p4176) target = $region72
        $region71: #{tpu_custom_call.1} parent=67 // pred_region
          %s4179 = sand.u32 %s165, 1
          %s4180 = scalar_lea.sflag [#allocation7], %s4179
          %s4181 = sand.u32 %s165, 1
          %s4182 = smul.addr %s4181, 32
          %s4183 = scalar_lea.vmem [#allocation13], %s4182
          %4184 = dma.done %s4180, 512
        $region72: #{tpu_custom_call.1} parent=67 // pred_fallthru
          _
      $region68: #{tpu_custom_call.1} parent=5 // pred_fallthru
        _
    $region6: #{tpu_custom_call.1} parent=1 // loop_footer
      %s24 = sadd.s32 1, %s20
    $region7: #{tpu_custom_call.1} parent=1 // loop_footer_branch
      %19 = sbr.rel target = $region3
    $region8: #{tpu_custom_call.1} parent=1 // loop_exit
      _
    %4185 = vsyncpa [#allocation6], 1
    %s4186 = scalar_lea.sflag [#allocation6], 1
    %4187 = vsyncpa %s4186, 1
    %4188 = vsyncpa [#allocation9], 1
    %4189 = vsyncpa [#allocation12], 1
    %4190 = vsyncpa [#allocation7], 1
    %s4191 = scalar_lea.sflag [#allocation7], 1
    %4192 = vsyncpa %s4191, 1

</llo_original>
